<compile_context>
chip_gen: v7x
topology: tpu7x:2x2x1
jax: 0.10.0
libtpu: 0.0.40
codegen_flags: <defaults>
</compile_context>

<pallas_src>
import numpy as np
import jax
import jax.numpy as jnp
from jax.experimental import pallas as pl
from jax.experimental.pallas import tpu as pltpu

NEG_SLOPE = 0.2   # LeakyReLU slope for 'lrelu'
EPS = 1e-5        # nn.InstanceNorm2d default eps


def _default_num_blocks():
    """2 parallel grid steps on v7x (2 TensorCores/chip), 1 on v5e/v6e (1 TC:
    extra grid steps are pure ~0.35us/step overhead at this problem size)."""
    try:
        kind = jax.devices()[0].device_kind.lower()
    except Exception:
        return 1
    return 2 if "v7" in kind else 1


def _build_kernel(Bt, C, conv_dtype):
    F = 16 * C   # flat channel-major width: column index = c*16 + (4h+w)

    def epilogue(x, n, nw, ys, yb):
        """LayerEpilogue, channel-major: noise -> lrelu -> instance norm -> AdaIN.
        x: (*,C,16)  n: (Bt,1,16)  nw: (1,C,1)  ys/yb: (Bt,C,1)."""
        x = x + nw * n                                     # noise mixin
        x = jnp.where(x >= 0, x, NEG_SLOPE * x)            # lrelu(0.2)
        mu = jnp.mean(x, axis=-1, keepdims=True)           # instance norm (spatial)
        var = jnp.mean(jnp.square(x - mu), axis=-1, keepdims=True)
        x = (x - mu) * jax.lax.rsqrt(var + EPS)
        return x * (ys + 1.0) + yb                         # AdaIN (style precomputed)

    def kernel(noise_ref, styles_ref, cpb_ref, nw_ref, wt_ref, cb_ref, out_ref):
        noise = noise_ref[0]                               # (Bt, 32)  [noise0|noise1]
        styles = styles_ref[0]                             # (Bt, 4C)  [ys0|yb0|ys1|yb1]
        nw_all = nw_ref[...]                               # (2, C)

        n0 = noise[:, 0:16].reshape(Bt, 1, 16)
        n1 = noise[:, 16:32].reshape(Bt, 1, 16)
        nw0 = nw_all[0:1, :].reshape(1, C, 1)
        nw1 = nw_all[1:2, :].reshape(1, C, 1)
        ys0 = styles[:, 0 * C:1 * C].reshape(Bt, C, 1)
        yb0 = styles[:, 1 * C:2 * C].reshape(Bt, C, 1)
        ys1 = styles[:, 2 * C:3 * C].reshape(Bt, C, 1)
        yb1 = styles[:, 3 * C:4 * C].reshape(Bt, C, 1)

        # const input layer (const + per-channel bias folded in the wrapper)
        x = cpb_ref[...][None, :, :]                       # (1, C, 16)

        # epilogue 0 (dlatents[:, 0] via precomputed style)
        x = epilogue(x, n0, nw0, ys0, yb0)                 # (Bt, C, 16)

        # 3x3 same-padding conv as ONE block-Toeplitz matmul on the flat map:
        # out(Bt,16C) = x(Bt,16C) @ WT(16C,16C), MXU-native K=N=16C.
        # TODO(synk): at real StyleGAN widths (C>=128) replace this with 9
        # accumulated per-tap matmuls to avoid the (16C)^2 weight in VMEM.
        xf = x.reshape(Bt, F)
        y = jnp.dot(xf.astype(conv_dtype), wt_ref[...].astype(conv_dtype),
                    preferred_element_type=jnp.float32)    # (Bt, F) f32 acc
        x = (y + cb_ref[...]).reshape(Bt, C, 16)

        # epilogue 1 (dlatents[:, 1])
        x = epilogue(x, n1, nw1, ys1, yb1)

        # lane-dense store: last dim F = 16*C (>=128 and a multiple of 128 here)
        out_ref[...] = x.reshape(1, Bt, F).astype(out_ref.dtype)

    return kernel


def make_params(key, C=16, D=32):
    """Deterministic synthetic parameters (channel-major flat spatial layout).
    Equalized-lr (wscale) runtime scales are folded into the stored weights."""
    ks = jax.random.split(key, 5)
    wscale_style = 1.0 / np.sqrt(D)          # EqualizedLinear scale (gain=1)
    wscale_conv = np.sqrt(2.0 / (C * 9))     # EqualizedConv2d scale (gain=sqrt(2))
    return dict(
        const=jnp.ones((C, 16), jnp.float32),            # torch.ones(1, C, 4, 4)
        bias=jnp.ones((C,), jnp.float32),                 # torch.ones(C)
        nw0=0.1 * jax.random.normal(ks[0], (C,), jnp.float32),
        nw1=0.1 * jax.random.normal(ks[1], (C,), jnp.float32),
        sw0=wscale_style * jax.random.normal(ks[2], (D, 2 * C), jnp.float32),
        sb0=jnp.zeros((2 * C,), jnp.float32),
        sw1=wscale_style * jax.random.normal(ks[3], (D, 2 * C), jnp.float32),
        sb1=jnp.zeros((2 * C,), jnp.float32),
        # conv weight stored as (9*C_in, C_out), row index = (3*ky+kx)*C + ci
        cw=wscale_conv * jax.random.normal(ks[4], (9 * C, C), jnp.float32),
        cb=jnp.zeros((C,), jnp.float32),
    )
    # TODO(synk): const_input_layer=False branch (dense projection of dlatents_0)
    # not implemented; this script uses the const-input configuration.


def early_synthesis_block(dlatents, noise0, noise1, params, *,
                          num_blocks=None, conv_dtype=jnp.float32):
    """dlatents: (B, 2, D); noise0/noise1: (B, 1, 4, 4). Returns NCHW (B, C, 4, 4).

    num_blocks: grid steps over the batch (default: 2 on v7x, 1 otherwise).
    conv_dtype: matmul-operand dtype for the 3x3 conv (bf16 at real widths;
    f32 accumulation either way)."""
    B, _, D = dlatents.shape
    C = params['const'].shape[0]
    F = 16 * C

    # ---- hoisted out of the kernel ----------------------------------------
    # AdaIN style linears: one batched XLA matmul over all samples and both
    # layer epilogues (M=1 matmuls are the worst MXU shape in-kernel).
    sw = jnp.stack([params['sw0'], params['sw1']])                  # (2, D, 2C)
    sb = jnp.stack([params['sb0'], params['sb1']])                  # (2, 2C)
    styles = jnp.einsum('btd,tdc->btc', dlatents, sw) + sb[None]    # (B, 2, 2C)
    styles_flat = styles.reshape(B, 4 * C)                          # [ys0|yb0|ys1|yb1]

    # noise0/noise1 packed into one lane-friendly array per sample
    noise = jnp.concatenate([noise0.reshape(B, 16),
                             noise1.reshape(B, 16)], axis=1)        # (B, 32)
    nwpack = jnp.stack([params['nw0'], params['nw1']])              # (2, C)

    # const input layer: const + per-channel bias folded once (channel-major)
    cpb = params['const'] + params['bias'][:, None]                 # (C, 16)
    # conv bias in the flat channel-major layout
    cbflat = jnp.repeat(params['cb'], 16)[None, :]                  # (1, 16C)

    # Block-Toeplitz conv weight: WT[ci*16+pi, co*16+po] = w[ky,kx,ci,co] when
    # (pi) is the valid input position for output (po) under tap (ky,kx).
    w4 = params['cw'].reshape(3, 3, C, C)                           # [ky,kx,ci,co]
    sel = np.zeros((3, 3, 16, 16), np.float32)                      # [ky,kx,pi,po]
    for ky in range(3):
        for kx in range(3):
            for po in range(16):
                ho, wo = divmod(po, 4)
                hi, wi = ho + ky - 1, wo + kx - 1
                if 0 <= hi < 4 and 0 <= wi < 4:
                    sel[ky, kx, hi * 4 + wi, po] = 1.0
    wt = jnp.einsum('yxio,yxpq->ipoq', w4, jnp.asarray(sel)).reshape(F, F)
    # ------------------------------------------------------------------------

    # Grid: 1 step on v5e/v6e, 2 unpadded-if-possible steps on v7x.
    if num_blocks is None:
        num_blocks = _default_num_blocks()
    nb = max(1, min(int(num_blocks), B))
    Bt = -(-B // nb)
    Bp = nb * Bt
    if Bp != B:   # pad batch (pad samples are finite through the norm, discarded)
        pad = ((0, Bp - B), (0, 0))
        noise = jnp.pad(noise, pad)
        styles_flat = jnp.pad(styles_flat, pad)
    noise_b = noise.reshape(nb, Bt, 32)
    styles_b = styles_flat.reshape(nb, Bt, 4 * C)

    kernel = _build_kernel(Bt, C, conv_dtype)

    cost = pl.CostEstimate(
        flops=int(nb * (2 * Bt * F * F + 30 * Bt * F)),
        transcendentals=int(2 * nb * Bt * C),
        bytes_accessed=int(4 * (noise_b.size + styles_b.size + cpb.size
                                + nwpack.size + wt.size + cbflat.size
                                + nb * Bt * F)),
    )

    out = pl.pallas_call(
        kernel,
        out_shape=jax.ShapeDtypeStruct((nb, Bt, F), jnp.float32),
        grid=(nb,),
        in_specs=[
            pl.BlockSpec((1, Bt, 32), lambda b: (b, 0, 0)),       # packed noise
            pl.BlockSpec((1, Bt, 4 * C), lambda b: (b, 0, 0)),    # packed styles
            pl.BlockSpec((C, 16), lambda b: (0, 0)),              # const + bias
            pl.BlockSpec((2, C), lambda b: (0, 0)),               # noise weights
            pl.BlockSpec((F, F), lambda b: (0, 0)),               # Toeplitz conv W
            pl.BlockSpec((1, F), lambda b: (0, 0)),               # conv bias (flat)
        ],
        out_specs=pl.BlockSpec((1, Bt, F), lambda b: (b, 0, 0)),
        compiler_params=pltpu.CompilerParams(
            dimension_semantics=("parallel",)),
        cost_estimate=cost,
    )(noise_b, styles_b, cpb, nwpack, wt, cbflat)

    # Channel-major flat output -> NCHW is a pure reshape (no transpose).
    return out.reshape(Bp, C, 4, 4)[:B]


def reference(dlatents, noise0, noise1, params):
    """Pure-JAX NCHW reference of the same forward pass."""
    B = dlatents.shape[0]
    C = params['const'].shape[0]
    d0, d1 = dlatents[:, 0], dlatents[:, 1]
    x = params['const'].reshape(1, C, 4, 4) + params['bias'].reshape(1, C, 1, 1)
    x = jnp.broadcast_to(x, (B, C, 4, 4))

    def epi(x, noise, nw, sw, sb, d):
        x = x + nw.reshape(1, C, 1, 1) * noise
        x = jnp.where(x >= 0, x, NEG_SLOPE * x)
        mu = x.mean(axis=(2, 3), keepdims=True)
        var = ((x - mu) ** 2).mean(axis=(2, 3), keepdims=True)
        x = (x - mu) * jax.lax.rsqrt(var + EPS)
        s = d @ sw + sb[None]
        ys = s[:, :C].reshape(B, C, 1, 1)
        yb = s[:, C:].reshape(B, C, 1, 1)
        return x * (ys + 1.0) + yb

    x = epi(x, noise0, params['nw0'], params['sw0'], params['sb0'], d0)
    w = params['cw'].reshape(3, 3, C, C).transpose(3, 2, 0, 1)   # (Co, Ci, kh, kw)
    x = jax.lax.conv_general_dilated(
        x, w, window_strides=(1, 1), padding='SAME',
        dimension_numbers=('NCHW', 'OIHW', 'NCHW'))
    x = x + params['cb'].reshape(1, C, 1, 1)
    x = epi(x, noise1, params['nw1'], params['sw1'], params['sb1'], d1)
    return x


if __name__ == "__main__":
    # Full f32 matmul precision so the tolerance is a real correctness check.
    jax.config.update("jax_default_matmul_precision", "highest")

    key = jax.random.PRNGKey(0)
    kp, kd, kn0, kn1 = jax.random.split(key, 4)
    B, C, D = 12, 16, 32
    params = make_params(kp, C=C, D=D)
    dlatents = jax.random.normal(kd, (B, 2, D), jnp.float32)
    # Noise is generated at forward time in the PyTorch module (torch.randn);
    # here it is generated deterministically and passed in.
    noise0 = jax.random.normal(kn0, (B, 1, 4, 4), jnp.float32)
    noise1 = jax.random.normal(kn1, (B, 1, 4, 4), jnp.float32)

    out = early_synthesis_block(dlatents, noise0, noise1, params)
    out = jax.block_until_ready(out)

    ref = reference(dlatents, noise0, noise1, params)
    err = float(jnp.max(jnp.abs(out - ref)))
    assert out.shape == (B, C, 4, 4), out.shape
    assert err < 5e-3, f"max abs diff {err}"
    print("KERNEL_OK")
</pallas_src>

<mosaic_0001>
module attributes {stable_mosaic.version = 11 : i64} {
  func.func @kernel(%arg0: i32, %arg1: memref<1x12x32xf32, #tpu.memory_space<vmem>>, %arg2: memref<1x12x64xf32, #tpu.memory_space<vmem>>, %arg3: memref<16x16xf32, #tpu.memory_space<vmem>>, %arg4: memref<2x16xf32, #tpu.memory_space<vmem>>, %arg5: memref<256x256xf32, #tpu.memory_space<vmem>>, %arg6: memref<1x256xf32, #tpu.memory_space<vmem>>, %arg7: memref<1x12x256xf32, #tpu.memory_space<vmem>>) attributes {dimension_semantics = [#tpu.dimension_semantics<parallel>], iteration_bounds = array<i64: 1>, scalar_prefetch = 0 : i64, scratch_operands = 0 : i64, tpu.core_type = #tpu.core_type<tc>, window_params = [{transform_indices = @transform_0, window_bounds = array<i64: 1, 12, 32>}, {transform_indices = @transform_1, window_bounds = array<i64: 1, 12, 64>}, {pipeline_mode = #tpu.pipeline_mode<synchronous>, transform_indices = @transform_2, window_bounds = array<i64: 16, 16>}, {pipeline_mode = #tpu.pipeline_mode<synchronous>, transform_indices = @transform_3, window_bounds = array<i64: 2, 16>}, {pipeline_mode = #tpu.pipeline_mode<synchronous>, transform_indices = @transform_4, window_bounds = array<i64: 256, 256>}, {pipeline_mode = #tpu.pipeline_mode<synchronous>, transform_indices = @transform_5, window_bounds = array<i64: 1, 256>}, {transform_indices = @transform_6, window_bounds = array<i64: 1, 12, 256>}]} {
    %c0 = arith.constant 0 : index
    %c0_0 = arith.constant 0 : index
    %c0_1 = arith.constant 0 : index
    %0 = vector.load %arg1[%c0, %c0_0, %c0_1] : memref<1x12x32xf32, #tpu.memory_space<vmem>>, vector<1x12x32xf32>
    %1 = vector.shape_cast %0 : vector<1x12x32xf32> to vector<12x32xf32>
    %c0_2 = arith.constant 0 : index
    %c0_3 = arith.constant 0 : index
    %c0_4 = arith.constant 0 : index
    %2 = vector.load %arg2[%c0_2, %c0_3, %c0_4] : memref<1x12x64xf32, #tpu.memory_space<vmem>>, vector<1x12x64xf32>
    %3 = vector.shape_cast %2 : vector<1x12x64xf32> to vector<12x64xf32>
    %c0_5 = arith.constant 0 : index
    %c0_6 = arith.constant 0 : index
    %4 = vector.load %arg4[%c0_5, %c0_6] : memref<2x16xf32, #tpu.memory_space<vmem>>, vector<2x16xf32>
    %5 = vector.extract_strided_slice %1 {offsets = [0, 0], sizes = [12, 16], strides = [1, 1]} : vector<12x32xf32> to vector<12x16xf32>
    %6 = vector.shape_cast %5 : vector<12x16xf32> to vector<12x1x16xf32>
    %7 = vector.extract_strided_slice %1 {offsets = [0, 16], sizes = [12, 16], strides = [1, 1]} : vector<12x32xf32> to vector<12x16xf32>
    %8 = vector.shape_cast %7 : vector<12x16xf32> to vector<12x1x16xf32>
    %9 = vector.extract_strided_slice %4 {offsets = [0, 0], sizes = [1, 16], strides = [1, 1]} : vector<2x16xf32> to vector<1x16xf32>
    %10 = vector.shape_cast %9 : vector<1x16xf32> to vector<1x16x1xf32>
    %11 = vector.extract_strided_slice %4 {offsets = [1, 0], sizes = [1, 16], strides = [1, 1]} : vector<2x16xf32> to vector<1x16xf32>
    %12 = vector.shape_cast %11 : vector<1x16xf32> to vector<1x16x1xf32>
    %13 = vector.extract_strided_slice %3 {offsets = [0, 0], sizes = [12, 16], strides = [1, 1]} : vector<12x64xf32> to vector<12x16xf32>
    %14 = vector.shape_cast %13 : vector<12x16xf32> to vector<12x16x1xf32>
    %15 = vector.extract_strided_slice %3 {offsets = [0, 16], sizes = [12, 16], strides = [1, 1]} : vector<12x64xf32> to vector<12x16xf32>
    %16 = vector.shape_cast %15 : vector<12x16xf32> to vector<12x16x1xf32>
    %17 = vector.extract_strided_slice %3 {offsets = [0, 32], sizes = [12, 16], strides = [1, 1]} : vector<12x64xf32> to vector<12x16xf32>
    %18 = vector.shape_cast %17 : vector<12x16xf32> to vector<12x16x1xf32>
    %19 = vector.extract_strided_slice %3 {offsets = [0, 48], sizes = [12, 16], strides = [1, 1]} : vector<12x64xf32> to vector<12x16xf32>
    %20 = vector.shape_cast %19 : vector<12x16xf32> to vector<12x16x1xf32>
    %c0_7 = arith.constant 0 : index
    %c0_8 = arith.constant 0 : index
    %21 = vector.load %arg3[%c0_7, %c0_8] : memref<16x16xf32, #tpu.memory_space<vmem>>, vector<16x16xf32>
    %22 = vector.shape_cast %21 : vector<16x16xf32> to vector<1x16x16xf32>
    %23 = vector.broadcast %10 : vector<1x16x1xf32> to vector<12x16x16xf32>
    %24 = vector.broadcast %6 : vector<12x1x16xf32> to vector<12x16x16xf32>
    %25 = arith.mulf %23, %24 : vector<12x16x16xf32>
    %26 = vector.broadcast %22 : vector<1x16x16xf32> to vector<12x16x16xf32>
    %27 = arith.addf %26, %25 : vector<12x16x16xf32>
    %cst = arith.constant 0.000000e+00 : f32
    %28 = vector.broadcast %cst : f32 to vector<12x16x16xf32>
    %29 = arith.cmpf oge, %27, %28 : vector<12x16x16xf32>
    %cst_9 = arith.constant 2.000000e-01 : f32
    %30 = vector.broadcast %cst_9 : f32 to vector<12x16x16xf32>
    %31 = arith.mulf %30, %27 : vector<12x16x16xf32>
    %32 = arith.select %29, %27, %31 : vector<12x16x16xi1>, vector<12x16x16xf32>
    %cst_10 = arith.constant dense<0.000000e+00> : vector<12x16xf32>
    %33 = vector.multi_reduction <add>, %32, %cst_10 [2] : vector<12x16x16xf32> to vector<12x16xf32>
    %34 = vector.shape_cast %33 : vector<12x16xf32> to vector<12x16x1xf32>
    %cst_11 = arith.constant 1.600000e+01 : f32
    %35 = vector.broadcast %cst_11 : f32 to vector<12x16x1xf32>
    %36 = arith.divf %34, %35 : vector<12x16x1xf32>
    %37 = vector.broadcast %36 : vector<12x16x1xf32> to vector<12x16x16xf32>
    %38 = arith.subf %32, %37 : vector<12x16x16xf32>
    %39 = arith.mulf %38, %38 : vector<12x16x16xf32>
    %cst_12 = arith.constant dense<0.000000e+00> : vector<12x16xf32>
    %40 = vector.multi_reduction <add>, %39, %cst_12 [2] : vector<12x16x16xf32> to vector<12x16xf32>
    %41 = vector.shape_cast %40 : vector<12x16xf32> to vector<12x16x1xf32>
    %cst_13 = arith.constant 1.600000e+01 : f32
    %42 = vector.broadcast %cst_13 : f32 to vector<12x16x1xf32>
    %43 = arith.divf %41, %42 : vector<12x16x1xf32>
    %44 = vector.broadcast %36 : vector<12x16x1xf32> to vector<12x16x16xf32>
    %45 = arith.subf %32, %44 : vector<12x16x16xf32>
    %cst_14 = arith.constant 9.99999974E-6 : f32
    %46 = vector.broadcast %cst_14 : f32 to vector<12x16x1xf32>
    %47 = arith.addf %43, %46 : vector<12x16x1xf32>
    %48 = math.rsqrt %47 : vector<12x16x1xf32>
    %49 = vector.broadcast %48 : vector<12x16x1xf32> to vector<12x16x16xf32>
    %50 = arith.mulf %45, %49 : vector<12x16x16xf32>
    %cst_15 = arith.constant 1.000000e+00 : f32
    %51 = vector.broadcast %cst_15 : f32 to vector<12x16x1xf32>
    %52 = arith.addf %14, %51 : vector<12x16x1xf32>
    %53 = vector.broadcast %52 : vector<12x16x1xf32> to vector<12x16x16xf32>
    %54 = arith.mulf %50, %53 : vector<12x16x16xf32>
    %55 = vector.broadcast %16 : vector<12x16x1xf32> to vector<12x16x16xf32>
    %56 = arith.addf %54, %55 : vector<12x16x16xf32>
    %57 = vector.shape_cast %56 : vector<12x16x16xf32> to vector<12x256xf32>
    %c0_16 = arith.constant 0 : index
    %c0_17 = arith.constant 0 : index
    %58 = vector.load %arg5[%c0_16, %c0_17] : memref<256x256xf32, #tpu.memory_space<vmem>>, vector<256x256xf32>
    %cst_18 = arith.constant dense<0.000000e+00> : vector<12x256xf32>
    %59 = tpu.matmul %57, %58, %cst_18 {dimension_numbers = #tpu.dot_dimension_numbers<[1], [0], [0], [1], [0, 0, 1, 1], [], []>, precision = #tpu.contract_precision<fp32>} : vector<12x256xf32>, vector<256x256xf32>, vector<12x256xf32> -> vector<12x256xf32>
    %c0_19 = arith.constant 0 : index
    %c0_20 = arith.constant 0 : index
    %60 = vector.load %arg6[%c0_19, %c0_20] : memref<1x256xf32, #tpu.memory_space<vmem>>, vector<1x256xf32>
    %61 = vector.broadcast %60 : vector<1x256xf32> to vector<12x256xf32>
    %62 = arith.addf %59, %61 : vector<12x256xf32>
    %63 = vector.shape_cast %62 : vector<12x256xf32> to vector<12x16x16xf32>
    %64 = vector.broadcast %12 : vector<1x16x1xf32> to vector<12x16x16xf32>
    %65 = vector.broadcast %8 : vector<12x1x16xf32> to vector<12x16x16xf32>
    %66 = arith.mulf %64, %65 : vector<12x16x16xf32>
    %67 = arith.addf %63, %66 : vector<12x16x16xf32>
    %cst_21 = arith.constant 0.000000e+00 : f32
    %68 = vector.broadcast %cst_21 : f32 to vector<12x16x16xf32>
    %69 = arith.cmpf oge, %67, %68 : vector<12x16x16xf32>
    %cst_22 = arith.constant 2.000000e-01 : f32
    %70 = vector.broadcast %cst_22 : f32 to vector<12x16x16xf32>
    %71 = arith.mulf %70, %67 : vector<12x16x16xf32>
    %72 = arith.select %69, %67, %71 : vector<12x16x16xi1>, vector<12x16x16xf32>
    %cst_23 = arith.constant dense<0.000000e+00> : vector<12x16xf32>
    %73 = vector.multi_reduction <add>, %72, %cst_23 [2] : vector<12x16x16xf32> to vector<12x16xf32>
    %74 = vector.shape_cast %73 : vector<12x16xf32> to vector<12x16x1xf32>
    %cst_24 = arith.constant 1.600000e+01 : f32
    %75 = vector.broadcast %cst_24 : f32 to vector<12x16x1xf32>
    %76 = arith.divf %74, %75 : vector<12x16x1xf32>
    %77 = vector.broadcast %76 : vector<12x16x1xf32> to vector<12x16x16xf32>
    %78 = arith.subf %72, %77 : vector<12x16x16xf32>
    %79 = arith.mulf %78, %78 : vector<12x16x16xf32>
    %cst_25 = arith.constant dense<0.000000e+00> : vector<12x16xf32>
    %80 = vector.multi_reduction <add>, %79, %cst_25 [2] : vector<12x16x16xf32> to vector<12x16xf32>
    %81 = vector.shape_cast %80 : vector<12x16xf32> to vector<12x16x1xf32>
    %cst_26 = arith.constant 1.600000e+01 : f32
    %82 = vector.broadcast %cst_26 : f32 to vector<12x16x1xf32>
    %83 = arith.divf %81, %82 : vector<12x16x1xf32>
    %84 = vector.broadcast %76 : vector<12x16x1xf32> to vector<12x16x16xf32>
    %85 = arith.subf %72, %84 : vector<12x16x16xf32>
    %cst_27 = arith.constant 9.99999974E-6 : f32
    %86 = vector.broadcast %cst_27 : f32 to vector<12x16x1xf32>
    %87 = arith.addf %83, %86 : vector<12x16x1xf32>
    %88 = math.rsqrt %87 : vector<12x16x1xf32>
    %89 = vector.broadcast %88 : vector<12x16x1xf32> to vector<12x16x16xf32>
    %90 = arith.mulf %85, %89 : vector<12x16x16xf32>
    %cst_28 = arith.constant 1.000000e+00 : f32
    %91 = vector.broadcast %cst_28 : f32 to vector<12x16x1xf32>
    %92 = arith.addf %18, %91 : vector<12x16x1xf32>
    %93 = vector.broadcast %92 : vector<12x16x1xf32> to vector<12x16x16xf32>
    %94 = arith.mulf %90, %93 : vector<12x16x16xf32>
    %95 = vector.broadcast %20 : vector<12x16x1xf32> to vector<12x16x16xf32>
    %96 = arith.addf %94, %95 : vector<12x16x16xf32>
    %97 = vector.shape_cast %96 : vector<12x16x16xf32> to vector<1x12x256xf32>
    %c0_29 = arith.constant 0 : index
    %c0_30 = arith.constant 0 : index
    %c0_31 = arith.constant 0 : index
    %98 = vector.load %arg7[%c0_29, %c0_30, %c0_31] : memref<1x12x256xf32, #tpu.memory_space<vmem>>, vector<1x12x256xf32>
    tpu.vector_store %arg7[%c0_29, %c0_30, %c0_31], %97 {strides = array<i32>} : memref<1x12x256xf32, #tpu.memory_space<vmem>>, vector<1x12x256xf32>,
    return
  }
  func.func @transform_0(%arg0: i32) -> (i32, i32, i32) {
    %c0_i32 = arith.constant 0 : i32
    %c0_i32_0 = arith.constant 0 : i32
    %c0_i32_1 = arith.constant 0 : i32
    return %arg0, %c0_i32, %c0_i32_0 : i32, i32, i32
  }
  func.func @transform_1(%arg0: i32) -> (i32, i32, i32) {
    %c0_i32 = arith.constant 0 : i32
    %c0_i32_0 = arith.constant 0 : i32
    %c0_i32_1 = arith.constant 0 : i32
    return %arg0, %c0_i32, %c0_i32_0 : i32, i32, i32
  }
  func.func @transform_2(%arg0: i32) -> (i32, i32) {
    %c0_i32 = arith.constant 0 : i32
    %c0_i32_0 = arith.constant 0 : i32
    %c0_i32_1 = arith.constant 0 : i32
    return %c0_i32, %c0_i32_0 : i32, i32
  }
  func.func @transform_3(%arg0: i32) -> (i32, i32) {
    %c0_i32 = arith.constant 0 : i32
    %c0_i32_0 = arith.constant 0 : i32
    %c0_i32_1 = arith.constant 0 : i32
    return %c0_i32, %c0_i32_0 : i32, i32
  }
  func.func @transform_4(%arg0: i32) -> (i32, i32) {
    %c0_i32 = arith.constant 0 : i32
    %c0_i32_0 = arith.constant 0 : i32
    %c0_i32_1 = arith.constant 0 : i32
    return %c0_i32, %c0_i32_0 : i32, i32
  }
  func.func @transform_5(%arg0: i32) -> (i32, i32) {
    %c0_i32 = arith.constant 0 : i32
    %c0_i32_0 = arith.constant 0 : i32
    %c0_i32_1 = arith.constant 0 : i32
    return %c0_i32, %c0_i32_0 : i32, i32
  }
  func.func @transform_6(%arg0: i32) -> (i32, i32, i32) {
    %c0_i32 = arith.constant 0 : i32
    %c0_i32_0 = arith.constant 0 : i32
    %c0_i32_1 = arith.constant 0 : i32
    return %arg0, %c0_i32, %c0_i32_0 : i32, i32, i32
  }
}

</mosaic_0001>

<llo_original>
// kernel: tpu_custom_call.1
$region0: #{tpu_custom_call.1}
  #allocation0 [shape = 'u32[]', space=smem, size = 0x4, offset = 0x4, fixed_abs, tag = 'smem constant byte address 0x4 - core index']
  #allocation1 [shape = 'u32[144,128]{1,0:T(1,128)}', space=vmem, size = 0x12000, scoped, tag = 'internal scratch']
  %s0 = inlined_call_operand.vmem [shape: f32[1,12,32], index: 0, kind: input, shape index: {}]
  %s1 = inlined_call_operand.vmem [shape: f32[1,12,64], index: 1, kind: input, shape index: {}]
  %s2 = inlined_call_operand.vmem [shape: f32[16,16], index: 2, kind: input, shape index: {}]
  %s3 = inlined_call_operand.vmem [shape: f32[2,16], index: 3, kind: input, shape index: {}]
  %s4 = inlined_call_operand.hbm [shape: f32[256,256], index: 4, kind: input, shape index: {}]
  %s5 = inlined_call_operand.vmem [shape: f32[1,256], index: 5, kind: input, shape index: {}]
  %s6 = inlined_call_operand.vmem [shape: f32[1,12,256], index: 6, kind: output, shape index: {}]
  %s7 = sld [smem:[#allocation0]]
  $region38: #{tpu_custom_call.1} parent=0
    _
  %s9 = ssub.s32 1, %s7
  %s10 = scalar_select 0, %s9, %s7
  $region1: #{tpu_custom_call.1} parent=0
    #allocation2 [shape = 'u8[262144]{0}', space=vmem, size = 0x40000, scoped, tag = 'input window, operand 4, single buffered']
    #allocation3 [shape = 's32[1]{0}', space=sflag, size = 0x4, scoped, tag = 'scoped memory for tpu_custom_call.1']
    %11 = vsyncpa [#allocation3], 0
    // Predicated region
    $region2: #{tpu_custom_call.1} parent=1 // pred_check
      _
    $region3: #{tpu_custom_call.1} parent=1 // pred_check_branch
      %13 = sbr.rel (0) target = $region5
    $region4: #{tpu_custom_call.1} parent=1 // pred_region
      _
    $region5: #{tpu_custom_call.1} parent=1 // pred_fallthru
      _
    // Predicated region
    $region6: #{tpu_custom_call.1} parent=1 // pred_check
      _
    $region7: #{tpu_custom_call.1} parent=1 // pred_check_branch
      %15 = sbr.rel (0) target = $region9
    $region8: #{tpu_custom_call.1} parent=1 // pred_region
      _
    $region9: #{tpu_custom_call.1} parent=1 // pred_fallthru
      _
    // Predicated region
    $region10: #{tpu_custom_call.1} parent=1 // pred_check
      _
    $region11: #{tpu_custom_call.1} parent=1 // pred_check_branch
      %17 = sbr.rel (0) target = $region13
    $region12: #{tpu_custom_call.1} parent=1 // pred_region
      _
    $region13: #{tpu_custom_call.1} parent=1 // pred_fallthru
      _
    // Predicated region
    $region14: #{tpu_custom_call.1} parent=1 // pred_check
      _
    $region15: #{tpu_custom_call.1} parent=1 // pred_check_branch
      %19 = sbr.rel (0) target = $region17
    $region16: #{tpu_custom_call.1} parent=1 // pred_region
      _
    $region17: #{tpu_custom_call.1} parent=1 // pred_fallthru
      _
    // Predicated region
    $region18: #{tpu_custom_call.1} parent=1 // pred_check
      _
    $region19: #{tpu_custom_call.1} parent=1 // pred_check_branch
      %21 = sbr.rel (0) target = $region21
    $region20: #{tpu_custom_call.1} parent=1 // pred_region
      %s23 = ssub.s32 8192, 8192
      %24 = vsyncadd [#allocation3], %s23
      %s25 = sshll.u32 [#allocation2], 4
      %s26 = int_to_ptr.vmem [resolvable:$true] %s25
      %31 = dma.hbm_to_vmem [thread:$0]  %s4, 8192, %s26, [#allocation3], 256, 256, 16
    $region21: #{tpu_custom_call.1} parent=1 // pred_fallthru
      _
    // Predicated region
    $region22: #{tpu_custom_call.1} parent=1 // pred_check
      _
    $region23: #{tpu_custom_call.1} parent=1 // pred_check_branch
      %33 = sbr.rel (0) target = $region25
    $region24: #{tpu_custom_call.1} parent=1 // pred_region
      _
    $region25: #{tpu_custom_call.1} parent=1 // pred_fallthru
      _
    // Predicated region
    $region26: #{tpu_custom_call.1} parent=1 // pred_check
      _
    $region27: #{tpu_custom_call.1} parent=1 // pred_check_branch
      %35 = sbr.rel (0) target = $region29
    $region28: #{tpu_custom_call.1} parent=1 // pred_region
      %36 = dma.done [#allocation3], 8192
    $region29: #{tpu_custom_call.1} parent=1 // pred_fallthru
      _
    %v37 = vld [vmem:[%s0] sm:$0xff]
    %v38 = vld [vmem:[%s0 + $0x8] sm:$0xf]
    %v39 = vld [vmem:[%s1] sm:$0xff]
    %v40 = vld [vmem:[%s1 + $0x8] sm:$0xf]
    %v41 = vld [vmem:[%s3] sm:$0x3]
    %v44 = vcombine.high %v37, %v37
    %v46 = vunpack.c.l.s4 1966171168
    %v47 = vunpack.c.0.s8 %v46
    %v48 = vlaneseq
    %v49 = vshrl.u32 %v48, 7
    %v50 = vsub.s32 %v47, %v49
    %v51 = vrot.slane %v37, %v50
    %v53 = vunpack.c.l.s4 1966171168
    %v54 = vunpack.c.0.s8 %v53
    %v55 = vlaneseq
    %v56 = vshrl.u32 %v55, 7
    %v57 = vsub.s32 %v54, %v56
    %v58 = vrot.slane %v44, %v57
    %v59 = vcombine.high %v51, %v51
    %v60 = vcombine.high %v58, %v58
    %v62 = vunpack.c.l.s4 1966171168
    %v63 = vunpack.c.0.s8 %v62
    %v64 = vlaneseq
    %v65 = vshrl.u32 %v64, 7
    %v66 = vsub.s32 %v63, %v65
    %v67 = vrot.slane %v51, %v66
    %v69 = vunpack.c.l.s4 1966171168
    %v70 = vunpack.c.0.s8 %v69
    %v71 = vlaneseq
    %v72 = vshrl.u32 %v71, 7
    %v73 = vsub.s32 %v70, %v72
    %v74 = vrot.slane %v58, %v73
    %v76 = vunpack.c.l.s4 1966171168
    %v77 = vunpack.c.0.s8 %v76
    %v78 = vlaneseq
    %v79 = vshrl.u32 %v78, 7
    %v80 = vsub.s32 %v77, %v79
    %v81 = vrot.slane %v59, %v80
    %v83 = vunpack.c.l.s4 1966171168
    %v84 = vunpack.c.0.s8 %v83
    %v85 = vlaneseq
    %v86 = vshrl.u32 %v85, 7
    %v87 = vsub.s32 %v84, %v86
    %v88 = vrot.slane %v60, %v87
    %v89 = vcombine.high %v67, %v67
    %v90 = vcombine.high %v74, %v74
    %v91 = vcombine.high %v81, %v81
    %v92 = vcombine.high %v88, %v88
    %v94 = vunpack.c.l.s4 1966171168
    %v95 = vunpack.c.0.s8 %v94
    %v96 = vlaneseq
    %v97 = vshrl.u32 %v96, 7
    %v98 = vsub.s32 %v95, %v97
    %v99 = vrot.slane %v38, %v98
    %v100 = vcombine.high %v99, %v99
    %v102 = vunpack.c.l.s4 1966171168
    %v103 = vunpack.c.0.s8 %v102
    %v104 = vlaneseq
    %v105 = vshrl.u32 %v104, 7
    %v106 = vsub.s32 %v103, %v105
    %v107 = vrot.slane %v99, %v106
    %v109 = vunpack.c.l.s4 1966171168
    %v110 = vunpack.c.0.s8 %v109
    %v111 = vlaneseq
    %v112 = vshrl.u32 %v111, 7
    %v113 = vsub.s32 %v110, %v112
    %v114 = vrot.slane %v100, %v113
    %v115 = vcombine.high %v107, %v107
    %v116 = vcombine.high %v114, %v114
    %v117 = vlaneseq
    %v118 = vshrl.u32 %v117, 7
    %v119 = vsub.s32 0, %v118
    %v120 = vrot.slane %v41, %v119
    %122 = vbcast.lane.b32.xlu0 %v120, 256
    %v123 = vpop.permute.xlu0 %122
    %s125 = sor.u32 256, 8
    %126 = vbcast.lane.b32.xlu0 %v120, %s125
    %v127 = vpop.permute.xlu0 %126
    %v128 = vlaneseq
    %v129 = vshrl.u32 %v128, 7
    %v130 = vsub.s32 1, %v129
    %v131 = vrot.slane %v41, %v130
    %133 = vbcast.lane.b32.xlu0 %v131, 256
    %v134 = vpop.permute.xlu0 %133
    %s136 = sor.u32 256, 8
    %137 = vbcast.lane.b32.xlu0 %v131, %s136
    %v138 = vpop.permute.xlu0 %137
    %v139 = vlaneseq
    %v140 = vshrl.u32 %v139, 7
    %v141 = vsub.s32 0, %v140
    %v142 = vrot.slane %v39, %v141
    %144 = vbcast.lane.b32.xlu0 %v142, 256
    %v145 = vpop.permute.xlu0 %144
    %s147 = sor.u32 256, 8
    %148 = vbcast.lane.b32.xlu0 %v142, %s147
    %v149 = vpop.permute.xlu0 %148
    %v150 = vlaneseq
    %v151 = vshrl.u32 %v150, 7
    %v152 = vsub.s32 1, %v151
    %v153 = vrot.slane %v39, %v152
    %155 = vbcast.lane.b32.xlu0 %v153, 256
    %v156 = vpop.permute.xlu0 %155
    %s158 = sor.u32 256, 8
    %159 = vbcast.lane.b32.xlu0 %v153, %s158
    %v160 = vpop.permute.xlu0 %159
    %v161 = vlaneseq
    %v162 = vshrl.u32 %v161, 7
    %v163 = vsub.s32 2, %v162
    %v164 = vrot.slane %v39, %v163
    %166 = vbcast.lane.b32.xlu0 %v164, 256
    %v167 = vpop.permute.xlu0 %166
    %s169 = sor.u32 256, 8
    %170 = vbcast.lane.b32.xlu0 %v164, %s169
    %v171 = vpop.permute.xlu0 %170
    %v172 = vlaneseq
    %v173 = vshrl.u32 %v172, 7
    %v174 = vsub.s32 3, %v173
    %v175 = vrot.slane %v39, %v174
    %177 = vbcast.lane.b32.xlu0 %v175, 256
    %v178 = vpop.permute.xlu0 %177
    %s180 = sor.u32 256, 8
    %181 = vbcast.lane.b32.xlu0 %v175, %s180
    %v182 = vpop.permute.xlu0 %181
    %v183 = vlaneseq
    %v184 = vshrl.u32 %v183, 7
    %v185 = vsub.s32 4, %v184
    %v186 = vrot.slane %v39, %v185
    %188 = vbcast.lane.b32.xlu0 %v186, 256
    %v189 = vpop.permute.xlu0 %188
    %s191 = sor.u32 256, 8
    %192 = vbcast.lane.b32.xlu0 %v186, %s191
    %v193 = vpop.permute.xlu0 %192
    %v194 = vlaneseq
    %v195 = vshrl.u32 %v194, 7
    %v196 = vsub.s32 5, %v195
    %v197 = vrot.slane %v39, %v196
    %199 = vbcast.lane.b32.xlu0 %v197, 256
    %v200 = vpop.permute.xlu0 %199
    %s202 = sor.u32 256, 8
    %203 = vbcast.lane.b32.xlu0 %v197, %s202
    %v204 = vpop.permute.xlu0 %203
    %v205 = vlaneseq
    %v206 = vshrl.u32 %v205, 7
    %v207 = vsub.s32 6, %v206
    %v208 = vrot.slane %v39, %v207
    %210 = vbcast.lane.b32.xlu0 %v208, 256
    %v211 = vpop.permute.xlu0 %210
    %s213 = sor.u32 256, 8
    %214 = vbcast.lane.b32.xlu0 %v208, %s213
    %v215 = vpop.permute.xlu0 %214
    %v216 = vlaneseq
    %v217 = vshrl.u32 %v216, 7
    %v218 = vsub.s32 7, %v217
    %v219 = vrot.slane %v39, %v218
    %221 = vbcast.lane.b32.xlu0 %v219, 256
    %v222 = vpop.permute.xlu0 %221
    %s224 = sor.u32 256, 8
    %225 = vbcast.lane.b32.xlu0 %v219, %s224
    %v226 = vpop.permute.xlu0 %225
    %v227 = vlaneseq
    %v228 = vshrl.u32 %v227, 7
    %v229 = vsub.s32 0, %v228
    %v230 = vrot.slane %v40, %v229
    %232 = vbcast.lane.b32.xlu0 %v230, 256
    %v233 = vpop.permute.xlu0 %232
    %s235 = sor.u32 256, 8
    %236 = vbcast.lane.b32.xlu0 %v230, %s235
    %v237 = vpop.permute.xlu0 %236
    %v238 = vlaneseq
    %v239 = vshrl.u32 %v238, 7
    %v240 = vsub.s32 1, %v239
    %v241 = vrot.slane %v40, %v240
    %243 = vbcast.lane.b32.xlu0 %v241, 256
    %v244 = vpop.permute.xlu0 %243
    %s246 = sor.u32 256, 8
    %247 = vbcast.lane.b32.xlu0 %v241, %s246
    %v248 = vpop.permute.xlu0 %247
    %v249 = vlaneseq
    %v250 = vshrl.u32 %v249, 7
    %v251 = vsub.s32 2, %v250
    %v252 = vrot.slane %v40, %v251
    %254 = vbcast.lane.b32.xlu0 %v252, 256
    %v255 = vpop.permute.xlu0 %254
    %s257 = sor.u32 256, 8
    %258 = vbcast.lane.b32.xlu0 %v252, %s257
    %v259 = vpop.permute.xlu0 %258
    %v260 = vlaneseq
    %v261 = vshrl.u32 %v260, 7
    %v262 = vsub.s32 3, %v261
    %v263 = vrot.slane %v40, %v262
    %265 = vbcast.lane.b32.xlu0 %v263, 256
    %v266 = vpop.permute.xlu0 %265
    %s268 = sor.u32 256, 8
    %269 = vbcast.lane.b32.xlu0 %v263, %s268
    %v270 = vpop.permute.xlu0 %269
    %s272 = sor.u32 256, 16
    %273 = vbcast.lane.b32.xlu0 %v142, %s272
    %v274 = vpop.permute.xlu0 %273
    %s276 = sor.u32 256, 24
    %277 = vbcast.lane.b32.xlu0 %v142, %s276
    %v278 = vpop.permute.xlu0 %277
    %s280 = sor.u32 256, 16
    %281 = vbcast.lane.b32.xlu0 %v153, %s280
    %v282 = vpop.permute.xlu0 %281
    %s284 = sor.u32 256, 24
    %285 = vbcast.lane.b32.xlu0 %v153, %s284
    %v286 = vpop.permute.xlu0 %285
    %s288 = sor.u32 256, 16
    %289 = vbcast.lane.b32.xlu0 %v164, %s288
    %v290 = vpop.permute.xlu0 %289
    %s292 = sor.u32 256, 24
    %293 = vbcast.lane.b32.xlu0 %v164, %s292
    %v294 = vpop.permute.xlu0 %293
    %s296 = sor.u32 256, 16
    %297 = vbcast.lane.b32.xlu0 %v175, %s296
    %v298 = vpop.permute.xlu0 %297
    %s300 = sor.u32 256, 24
    %301 = vbcast.lane.b32.xlu0 %v175, %s300
    %v302 = vpop.permute.xlu0 %301
    %s304 = sor.u32 256, 16
    %305 = vbcast.lane.b32.xlu0 %v186, %s304
    %v306 = vpop.permute.xlu0 %305
    %s308 = sor.u32 256, 24
    %309 = vbcast.lane.b32.xlu0 %v186, %s308
    %v310 = vpop.permute.xlu0 %309
    %s312 = sor.u32 256, 16
    %313 = vbcast.lane.b32.xlu0 %v197, %s312
    %v314 = vpop.permute.xlu0 %313
    %s316 = sor.u32 256, 24
    %317 = vbcast.lane.b32.xlu0 %v197, %s316
    %v318 = vpop.permute.xlu0 %317
    %s320 = sor.u32 256, 16
    %321 = vbcast.lane.b32.xlu0 %v208, %s320
    %v322 = vpop.permute.xlu0 %321
    %s324 = sor.u32 256, 24
    %325 = vbcast.lane.b32.xlu0 %v208, %s324
    %v326 = vpop.permute.xlu0 %325
    %s328 = sor.u32 256, 16
    %329 = vbcast.lane.b32.xlu0 %v219, %s328
    %v330 = vpop.permute.xlu0 %329
    %s332 = sor.u32 256, 24
    %333 = vbcast.lane.b32.xlu0 %v219, %s332
    %v334 = vpop.permute.xlu0 %333
    %s336 = sor.u32 256, 16
    %337 = vbcast.lane.b32.xlu0 %v230, %s336
    %v338 = vpop.permute.xlu0 %337
    %s340 = sor.u32 256, 24
    %341 = vbcast.lane.b32.xlu0 %v230, %s340
    %v342 = vpop.permute.xlu0 %341
    %s344 = sor.u32 256, 16
    %345 = vbcast.lane.b32.xlu0 %v241, %s344
    %v346 = vpop.permute.xlu0 %345
    %s348 = sor.u32 256, 24
    %349 = vbcast.lane.b32.xlu0 %v241, %s348
    %v350 = vpop.permute.xlu0 %349
    %s352 = sor.u32 256, 16
    %353 = vbcast.lane.b32.xlu0 %v252, %s352
    %v354 = vpop.permute.xlu0 %353
    %s356 = sor.u32 256, 24
    %357 = vbcast.lane.b32.xlu0 %v252, %s356
    %v358 = vpop.permute.xlu0 %357
    %s360 = sor.u32 256, 16
    %361 = vbcast.lane.b32.xlu0 %v263, %s360
    %v362 = vpop.permute.xlu0 %361
    %s364 = sor.u32 256, 24
    %365 = vbcast.lane.b32.xlu0 %v263, %s364
    %v366 = vpop.permute.xlu0 %365
    %s368 = sor.u32 256, 32
    %369 = vbcast.lane.b32.xlu0 %v142, %s368
    %v370 = vpop.permute.xlu0 %369
    %s372 = sor.u32 256, 40
    %373 = vbcast.lane.b32.xlu0 %v142, %s372
    %v374 = vpop.permute.xlu0 %373
    %s376 = sor.u32 256, 32
    %377 = vbcast.lane.b32.xlu0 %v153, %s376
    %v378 = vpop.permute.xlu0 %377
    %s380 = sor.u32 256, 40
    %381 = vbcast.lane.b32.xlu0 %v153, %s380
    %v382 = vpop.permute.xlu0 %381
    %s384 = sor.u32 256, 32
    %385 = vbcast.lane.b32.xlu0 %v164, %s384
    %v386 = vpop.permute.xlu0 %385
    %s388 = sor.u32 256, 40
    %389 = vbcast.lane.b32.xlu0 %v164, %s388
    %v390 = vpop.permute.xlu0 %389
    %s392 = sor.u32 256, 32
    %393 = vbcast.lane.b32.xlu0 %v175, %s392
    %v394 = vpop.permute.xlu0 %393
    %s396 = sor.u32 256, 40
    %397 = vbcast.lane.b32.xlu0 %v175, %s396
    %v398 = vpop.permute.xlu0 %397
    %s400 = sor.u32 256, 32
    %401 = vbcast.lane.b32.xlu0 %v186, %s400
    %v402 = vpop.permute.xlu0 %401
    %s404 = sor.u32 256, 40
    %405 = vbcast.lane.b32.xlu0 %v186, %s404
    %v406 = vpop.permute.xlu0 %405
    %s408 = sor.u32 256, 32
    %409 = vbcast.lane.b32.xlu0 %v197, %s408
    %v410 = vpop.permute.xlu0 %409
    %s412 = sor.u32 256, 40
    %413 = vbcast.lane.b32.xlu0 %v197, %s412
    %v414 = vpop.permute.xlu0 %413
    %s416 = sor.u32 256, 32
    %417 = vbcast.lane.b32.xlu0 %v208, %s416
    %v418 = vpop.permute.xlu0 %417
    %s420 = sor.u32 256, 40
    %421 = vbcast.lane.b32.xlu0 %v208, %s420
    %v422 = vpop.permute.xlu0 %421
    %s424 = sor.u32 256, 32
    %425 = vbcast.lane.b32.xlu0 %v219, %s424
    %v426 = vpop.permute.xlu0 %425
    %s428 = sor.u32 256, 40
    %429 = vbcast.lane.b32.xlu0 %v219, %s428
    %v430 = vpop.permute.xlu0 %429
    %s432 = sor.u32 256, 32
    %433 = vbcast.lane.b32.xlu0 %v230, %s432
    %v434 = vpop.permute.xlu0 %433
    %s436 = sor.u32 256, 40
    %437 = vbcast.lane.b32.xlu0 %v230, %s436
    %v438 = vpop.permute.xlu0 %437
    %s440 = sor.u32 256, 32
    %441 = vbcast.lane.b32.xlu0 %v241, %s440
    %v442 = vpop.permute.xlu0 %441
    %s444 = sor.u32 256, 40
    %445 = vbcast.lane.b32.xlu0 %v241, %s444
    %v446 = vpop.permute.xlu0 %445
    %s448 = sor.u32 256, 32
    %449 = vbcast.lane.b32.xlu0 %v252, %s448
    %v450 = vpop.permute.xlu0 %449
    %s452 = sor.u32 256, 40
    %453 = vbcast.lane.b32.xlu0 %v252, %s452
    %v454 = vpop.permute.xlu0 %453
    %s456 = sor.u32 256, 32
    %457 = vbcast.lane.b32.xlu0 %v263, %s456
    %v458 = vpop.permute.xlu0 %457
    %s460 = sor.u32 256, 40
    %461 = vbcast.lane.b32.xlu0 %v263, %s460
    %v462 = vpop.permute.xlu0 %461
    %s464 = sor.u32 256, 48
    %465 = vbcast.lane.b32.xlu0 %v142, %s464
    %v466 = vpop.permute.xlu0 %465
    %s468 = sor.u32 256, 56
    %469 = vbcast.lane.b32.xlu0 %v142, %s468
    %v470 = vpop.permute.xlu0 %469
    %s472 = sor.u32 256, 48
    %473 = vbcast.lane.b32.xlu0 %v153, %s472
    %v474 = vpop.permute.xlu0 %473
    %s476 = sor.u32 256, 56
    %477 = vbcast.lane.b32.xlu0 %v153, %s476
    %v478 = vpop.permute.xlu0 %477
    %s480 = sor.u32 256, 48
    %481 = vbcast.lane.b32.xlu0 %v164, %s480
    %v482 = vpop.permute.xlu0 %481
    %s484 = sor.u32 256, 56
    %485 = vbcast.lane.b32.xlu0 %v164, %s484
    %v486 = vpop.permute.xlu0 %485
    %s488 = sor.u32 256, 48
    %489 = vbcast.lane.b32.xlu0 %v175, %s488
    %v490 = vpop.permute.xlu0 %489
    %s492 = sor.u32 256, 56
    %493 = vbcast.lane.b32.xlu0 %v175, %s492
    %v494 = vpop.permute.xlu0 %493
    %s496 = sor.u32 256, 48
    %497 = vbcast.lane.b32.xlu0 %v186, %s496
    %v498 = vpop.permute.xlu0 %497
    %s500 = sor.u32 256, 56
    %501 = vbcast.lane.b32.xlu0 %v186, %s500
    %v502 = vpop.permute.xlu0 %501
    %s504 = sor.u32 256, 48
    %505 = vbcast.lane.b32.xlu0 %v197, %s504
    %v506 = vpop.permute.xlu0 %505
    %s508 = sor.u32 256, 56
    %509 = vbcast.lane.b32.xlu0 %v197, %s508
    %v510 = vpop.permute.xlu0 %509
    %s512 = sor.u32 256, 48
    %513 = vbcast.lane.b32.xlu0 %v208, %s512
    %v514 = vpop.permute.xlu0 %513
    %s516 = sor.u32 256, 56
    %517 = vbcast.lane.b32.xlu0 %v208, %s516
    %v518 = vpop.permute.xlu0 %517
    %s520 = sor.u32 256, 48
    %521 = vbcast.lane.b32.xlu0 %v219, %s520
    %v522 = vpop.permute.xlu0 %521
    %s524 = sor.u32 256, 56
    %525 = vbcast.lane.b32.xlu0 %v219, %s524
    %v526 = vpop.permute.xlu0 %525
    %s528 = sor.u32 256, 48
    %529 = vbcast.lane.b32.xlu0 %v230, %s528
    %v530 = vpop.permute.xlu0 %529
    %s532 = sor.u32 256, 56
    %533 = vbcast.lane.b32.xlu0 %v230, %s532
    %v534 = vpop.permute.xlu0 %533
    %s536 = sor.u32 256, 48
    %537 = vbcast.lane.b32.xlu0 %v241, %s536
    %v538 = vpop.permute.xlu0 %537
    %s540 = sor.u32 256, 56
    %541 = vbcast.lane.b32.xlu0 %v241, %s540
    %v542 = vpop.permute.xlu0 %541
    %s544 = sor.u32 256, 48
    %545 = vbcast.lane.b32.xlu0 %v252, %s544
    %v546 = vpop.permute.xlu0 %545
    %s548 = sor.u32 256, 56
    %549 = vbcast.lane.b32.xlu0 %v252, %s548
    %v550 = vpop.permute.xlu0 %549
    %s552 = sor.u32 256, 48
    %553 = vbcast.lane.b32.xlu0 %v263, %s552
    %v554 = vpop.permute.xlu0 %553
    %s556 = sor.u32 256, 56
    %557 = vbcast.lane.b32.xlu0 %v263, %s556
    %v558 = vpop.permute.xlu0 %557
    %v559 = vld [vmem:[%s2] sm:$0xff]
    %v560 = vld [vmem:[%s2 + $0x8] sm:$0xff]
    %v561 = vlaneseq
    %v562 = vshrl.u32 %v561, 7
    %v563 = vsub.s32 0, %v562
    %v564 = vrot.slane %v67, %v563
    %v565 = vlaneseq
    %v566 = vshrl.u32 %v565, 7
    %v567 = vsub.s32 0, %v566
    %v568 = vrot.slane %v81, %v567
    %v569 = vlaneseq
    %v570 = vshrl.u32 %v569, 7
    %v571 = vsub.s32 0, %v570
    %v572 = vrot.slane %v89, %v571
    %v573 = vlaneseq
    %v574 = vshrl.u32 %v573, 7
    %v575 = vsub.s32 0, %v574
    %v576 = vrot.slane %v91, %v575
    %v577 = vlaneseq
    %v578 = vshrl.u32 %v577, 7
    %v579 = vsub.s32 0, %v578
    %v580 = vrot.slane %v74, %v579
    %v581 = vlaneseq
    %v582 = vshrl.u32 %v581, 7
    %v583 = vsub.s32 0, %v582
    %v584 = vrot.slane %v88, %v583
    %v585 = vlaneseq
    %v586 = vshrl.u32 %v585, 7
    %v587 = vsub.s32 0, %v586
    %v588 = vrot.slane %v90, %v587
    %v589 = vlaneseq
    %v590 = vshrl.u32 %v589, 7
    %v591 = vsub.s32 0, %v590
    %v592 = vrot.slane %v92, %v591
    %v593 = vlaneseq
    %v594 = vshrl.u32 %v593, 7
    %v595 = vsub.s32 0, %v594
    %v596 = vrot.slane %v107, %v595
    %v597 = vlaneseq
    %v598 = vshrl.u32 %v597, 7
    %v599 = vsub.s32 0, %v598
    %v600 = vrot.slane %v114, %v599
    %v601 = vlaneseq
    %v602 = vshrl.u32 %v601, 7
    %v603 = vsub.s32 0, %v602
    %v604 = vrot.slane %v115, %v603
    %v605 = vlaneseq
    %v606 = vshrl.u32 %v605, 7
    %v607 = vsub.s32 0, %v606
    %v608 = vrot.slane %v116, %v607
    %v621 = vmul.f32 %v123, %v564
    %v622 = vmul.f32 %v127, %v564
    %v623 = vmul.f32 %v123, %v568
    %v624 = vmul.f32 %v127, %v568
    %v625 = vmul.f32 %v123, %v572
    %v626 = vmul.f32 %v127, %v572
    %v627 = vmul.f32 %v123, %v576
    %v628 = vmul.f32 %v127, %v576
    %v629 = vmul.f32 %v123, %v580
    %v630 = vmul.f32 %v127, %v580
    %v631 = vmul.f32 %v123, %v584
    %v632 = vmul.f32 %v127, %v584
    %v633 = vmul.f32 %v123, %v588
    %v634 = vmul.f32 %v127, %v588
    %v635 = vmul.f32 %v123, %v592
    %v636 = vmul.f32 %v127, %v592
    %v637 = vmul.f32 %v123, %v596
    %v638 = vmul.f32 %v127, %v596
    %v639 = vmul.f32 %v123, %v600
    %v640 = vmul.f32 %v127, %v600
    %v641 = vmul.f32 %v123, %v604
    %v642 = vmul.f32 %v127, %v604
    %v643 = vmul.f32 %v123, %v608
    %v644 = vmul.f32 %v127, %v608
    %v645 = vadd.f32 %v559, %v621
    %v646 = vadd.f32 %v560, %v622
    %v647 = vadd.f32 %v559, %v623
    %v648 = vadd.f32 %v560, %v624
    %v649 = vadd.f32 %v559, %v625
    %v650 = vadd.f32 %v560, %v626
    %v651 = vadd.f32 %v559, %v627
    %v652 = vadd.f32 %v560, %v628
    %v653 = vadd.f32 %v559, %v629
    %v654 = vadd.f32 %v560, %v630
    %v655 = vadd.f32 %v559, %v631
    %v656 = vadd.f32 %v560, %v632
    %v657 = vadd.f32 %v559, %v633
    %v658 = vadd.f32 %v560, %v634
    %v659 = vadd.f32 %v559, %v635
    %v660 = vadd.f32 %v560, %v636
    %v661 = vadd.f32 %v559, %v637
    %v662 = vadd.f32 %v560, %v638
    %v663 = vadd.f32 %v559, %v639
    %v664 = vadd.f32 %v560, %v640
    %v665 = vadd.f32 %v559, %v641
    %v666 = vadd.f32 %v560, %v642
    %v667 = vadd.f32 %v559, %v643
    %v668 = vadd.f32 %v560, %v644
    %vm669 = vcmp.ge.f32.partialorder %v645, 0.0
    %vm670 = vcmp.ge.f32.partialorder %v646, 0.0
    %vm671 = vcmp.ge.f32.partialorder %v647, 0.0
    %vm672 = vcmp.ge.f32.partialorder %v648, 0.0
    %vm673 = vcmp.ge.f32.partialorder %v649, 0.0
    %vm674 = vcmp.ge.f32.partialorder %v650, 0.0
    %vm675 = vcmp.ge.f32.partialorder %v651, 0.0
    %vm676 = vcmp.ge.f32.partialorder %v652, 0.0
    %vm677 = vcmp.ge.f32.partialorder %v653, 0.0
    %vm678 = vcmp.ge.f32.partialorder %v654, 0.0
    %vm679 = vcmp.ge.f32.partialorder %v655, 0.0
    %vm680 = vcmp.ge.f32.partialorder %v656, 0.0
    %vm681 = vcmp.ge.f32.partialorder %v657, 0.0
    %vm682 = vcmp.ge.f32.partialorder %v658, 0.0
    %vm683 = vcmp.ge.f32.partialorder %v659, 0.0
    %vm684 = vcmp.ge.f32.partialorder %v660, 0.0
    %vm685 = vcmp.ge.f32.partialorder %v661, 0.0
    %vm686 = vcmp.ge.f32.partialorder %v662, 0.0
    %vm687 = vcmp.ge.f32.partialorder %v663, 0.0
    %vm688 = vcmp.ge.f32.partialorder %v664, 0.0
    %vm689 = vcmp.ge.f32.partialorder %v665, 0.0
    %vm690 = vcmp.ge.f32.partialorder %v666, 0.0
    %vm691 = vcmp.ge.f32.partialorder %v667, 0.0
    %vm692 = vcmp.ge.f32.partialorder %v668, 0.0
    %v693 = vmul.f32 %v645, 0.2
    %v694 = vmul.f32 %v646, 0.2
    %v695 = vmul.f32 %v647, 0.2
    %v696 = vmul.f32 %v648, 0.2
    %v697 = vmul.f32 %v649, 0.2
    %v698 = vmul.f32 %v650, 0.2
    %v699 = vmul.f32 %v651, 0.2
    %v700 = vmul.f32 %v652, 0.2
    %v701 = vmul.f32 %v653, 0.2
    %v702 = vmul.f32 %v654, 0.2
    %v703 = vmul.f32 %v655, 0.2
    %v704 = vmul.f32 %v656, 0.2
    %v705 = vmul.f32 %v657, 0.2
    %v706 = vmul.f32 %v658, 0.2
    %v707 = vmul.f32 %v659, 0.2
    %v708 = vmul.f32 %v660, 0.2
    %v709 = vmul.f32 %v661, 0.2
    %v710 = vmul.f32 %v662, 0.2
    %v711 = vmul.f32 %v663, 0.2
    %v712 = vmul.f32 %v664, 0.2
    %v713 = vmul.f32 %v665, 0.2
    %v714 = vmul.f32 %v666, 0.2
    %v715 = vmul.f32 %v667, 0.2
    %v716 = vmul.f32 %v668, 0.2
    %v717 = vsel %vm669, %v645, %v693
    %v718 = vsel %vm670, %v646, %v694
    %v719 = vsel %vm671, %v647, %v695
    %v720 = vsel %vm672, %v648, %v696
    %v721 = vsel %vm673, %v649, %v697
    %v722 = vsel %vm674, %v650, %v698
    %v723 = vsel %vm675, %v651, %v699
    %v724 = vsel %vm676, %v652, %v700
    %v725 = vsel %vm677, %v653, %v701
    %v726 = vsel %vm678, %v654, %v702
    %v727 = vsel %vm679, %v655, %v703
    %v728 = vsel %vm680, %v656, %v704
    %v729 = vsel %vm681, %v657, %v705
    %v730 = vsel %vm682, %v658, %v706
    %v731 = vsel %vm683, %v659, %v707
    %v732 = vsel %vm684, %v660, %v708
    %v733 = vsel %vm685, %v661, %v709
    %v734 = vsel %vm686, %v662, %v710
    %v735 = vsel %vm687, %v663, %v711
    %v736 = vsel %vm688, %v664, %v712
    %v737 = vsel %vm689, %v665, %v713
    %v738 = vsel %vm690, %v666, %v714
    %v739 = vsel %vm691, %v667, %v715
    %v740 = vsel %vm692, %v668, %v716
    %vm741 = vcmask 130048
    %v742 = vsel %vm741, %v717, 0.0
    %743 = vadd.xlane.f32.xlu0 %v742
    %v744 = vpop.xlane.xlu0 %743
    %v745 = vsel %vm741, %v718, 0.0
    %746 = vadd.xlane.f32.xlu0 %v745
    %v747 = vpop.xlane.xlu0 %746
    %v748 = vsel %vm741, %v719, 0.0
    %749 = vadd.xlane.f32.xlu0 %v748
    %v750 = vpop.xlane.xlu0 %749
    %v751 = vsel %vm741, %v720, 0.0
    %752 = vadd.xlane.f32.xlu0 %v751
    %v753 = vpop.xlane.xlu0 %752
    %v754 = vsel %vm741, %v721, 0.0
    %755 = vadd.xlane.f32.xlu0 %v754
    %v756 = vpop.xlane.xlu0 %755
    %v757 = vsel %vm741, %v722, 0.0
    %758 = vadd.xlane.f32.xlu0 %v757
    %v759 = vpop.xlane.xlu0 %758
    %v760 = vsel %vm741, %v723, 0.0
    %761 = vadd.xlane.f32.xlu0 %v760
    %v762 = vpop.xlane.xlu0 %761
    %v763 = vsel %vm741, %v724, 0.0
    %764 = vadd.xlane.f32.xlu0 %v763
    %v765 = vpop.xlane.xlu0 %764
    %v766 = vsel %vm741, %v725, 0.0
    %767 = vadd.xlane.f32.xlu0 %v766
    %v768 = vpop.xlane.xlu0 %767
    %v769 = vsel %vm741, %v726, 0.0
    %770 = vadd.xlane.f32.xlu0 %v769
    %v771 = vpop.xlane.xlu0 %770
    %v772 = vsel %vm741, %v727, 0.0
    %773 = vadd.xlane.f32.xlu0 %v772
    %v774 = vpop.xlane.xlu0 %773
    %v775 = vsel %vm741, %v728, 0.0
    %776 = vadd.xlane.f32.xlu0 %v775
    %v777 = vpop.xlane.xlu0 %776
    %v778 = vsel %vm741, %v729, 0.0
    %779 = vadd.xlane.f32.xlu0 %v778
    %v780 = vpop.xlane.xlu0 %779
    %v781 = vsel %vm741, %v730, 0.0
    %782 = vadd.xlane.f32.xlu0 %v781
    %v783 = vpop.xlane.xlu0 %782
    %v784 = vsel %vm741, %v731, 0.0
    %785 = vadd.xlane.f32.xlu0 %v784
    %v786 = vpop.xlane.xlu0 %785
    %v787 = vsel %vm741, %v732, 0.0
    %788 = vadd.xlane.f32.xlu0 %v787
    %v789 = vpop.xlane.xlu0 %788
    %v790 = vsel %vm741, %v733, 0.0
    %791 = vadd.xlane.f32.xlu0 %v790
    %v792 = vpop.xlane.xlu0 %791
    %v793 = vsel %vm741, %v734, 0.0
    %794 = vadd.xlane.f32.xlu0 %v793
    %v795 = vpop.xlane.xlu0 %794
    %v796 = vsel %vm741, %v735, 0.0
    %797 = vadd.xlane.f32.xlu0 %v796
    %v798 = vpop.xlane.xlu0 %797
    %v799 = vsel %vm741, %v736, 0.0
    %800 = vadd.xlane.f32.xlu0 %v799
    %v801 = vpop.xlane.xlu0 %800
    %v802 = vsel %vm741, %v737, 0.0
    %803 = vadd.xlane.f32.xlu0 %v802
    %v804 = vpop.xlane.xlu0 %803
    %v805 = vsel %vm741, %v738, 0.0
    %806 = vadd.xlane.f32.xlu0 %v805
    %v807 = vpop.xlane.xlu0 %806
    %v808 = vsel %vm741, %v739, 0.0
    %809 = vadd.xlane.f32.xlu0 %v808
    %v810 = vpop.xlane.xlu0 %809
    %v811 = vsel %vm741, %v740, 0.0
    %812 = vadd.xlane.f32.xlu0 %v811
    %v813 = vpop.xlane.xlu0 %812
    %v814 = vrcp.pop 16.0
    %v815 = vmul.f32 %v744, %v814
    %v816 = vmul.f32 %v747, %v814
    %v817 = vmul.f32 %v750, %v814
    %v818 = vmul.f32 %v753, %v814
    %v819 = vmul.f32 %v756, %v814
    %v820 = vmul.f32 %v759, %v814
    %v821 = vmul.f32 %v762, %v814
    %v822 = vmul.f32 %v765, %v814
    %v823 = vmul.f32 %v768, %v814
    %v824 = vmul.f32 %v771, %v814
    %v825 = vmul.f32 %v774, %v814
    %v826 = vmul.f32 %v777, %v814
    %v827 = vmul.f32 %v780, %v814
    %v828 = vmul.f32 %v783, %v814
    %v829 = vmul.f32 %v786, %v814
    %v830 = vmul.f32 %v789, %v814
    %v831 = vmul.f32 %v792, %v814
    %v832 = vmul.f32 %v795, %v814
    %v833 = vmul.f32 %v798, %v814
    %v834 = vmul.f32 %v801, %v814
    %v835 = vmul.f32 %v804, %v814
    %v836 = vmul.f32 %v807, %v814
    %v837 = vmul.f32 %v810, %v814
    %v838 = vmul.f32 %v813, %v814
    %v839 = vsub.f32 %v717, %v815
    %v840 = vsub.f32 %v718, %v816
    %v841 = vsub.f32 %v719, %v817
    %v842 = vsub.f32 %v720, %v818
    %v843 = vsub.f32 %v721, %v819
    %v844 = vsub.f32 %v722, %v820
    %v845 = vsub.f32 %v723, %v821
    %v846 = vsub.f32 %v724, %v822
    %v847 = vsub.f32 %v725, %v823
    %v848 = vsub.f32 %v726, %v824
    %v849 = vsub.f32 %v727, %v825
    %v850 = vsub.f32 %v728, %v826
    %v851 = vsub.f32 %v729, %v827
    %v852 = vsub.f32 %v730, %v828
    %v853 = vsub.f32 %v731, %v829
    %v854 = vsub.f32 %v732, %v830
    %v855 = vsub.f32 %v733, %v831
    %v856 = vsub.f32 %v734, %v832
    %v857 = vsub.f32 %v735, %v833
    %v858 = vsub.f32 %v736, %v834
    %v859 = vsub.f32 %v737, %v835
    %v860 = vsub.f32 %v738, %v836
    %v861 = vsub.f32 %v739, %v837
    %v862 = vsub.f32 %v740, %v838
    %v863 = vmul.f32 %v839, %v839
    %v864 = vmul.f32 %v840, %v840
    %v865 = vmul.f32 %v841, %v841
    %v866 = vmul.f32 %v842, %v842
    %v867 = vmul.f32 %v843, %v843
    %v868 = vmul.f32 %v844, %v844
    %v869 = vmul.f32 %v845, %v845
    %v870 = vmul.f32 %v846, %v846
    %v871 = vmul.f32 %v847, %v847
    %v872 = vmul.f32 %v848, %v848
    %v873 = vmul.f32 %v849, %v849
    %v874 = vmul.f32 %v850, %v850
    %v875 = vmul.f32 %v851, %v851
    %v876 = vmul.f32 %v852, %v852
    %v877 = vmul.f32 %v853, %v853
    %v878 = vmul.f32 %v854, %v854
    %v879 = vmul.f32 %v855, %v855
    %v880 = vmul.f32 %v856, %v856
    %v881 = vmul.f32 %v857, %v857
    %v882 = vmul.f32 %v858, %v858
    %v883 = vmul.f32 %v859, %v859
    %v884 = vmul.f32 %v860, %v860
    %v885 = vmul.f32 %v861, %v861
    %v886 = vmul.f32 %v862, %v862
    %v887 = vsel %vm741, %v863, 0.0
    %888 = vadd.xlane.f32.xlu0 %v887
    %v889 = vpop.xlane.xlu0 %888
    %v890 = vsel %vm741, %v864, 0.0
    %891 = vadd.xlane.f32.xlu0 %v890
    %v892 = vpop.xlane.xlu0 %891
    %v893 = vsel %vm741, %v865, 0.0
    %894 = vadd.xlane.f32.xlu0 %v893
    %v895 = vpop.xlane.xlu0 %894
    %v896 = vsel %vm741, %v866, 0.0
    %897 = vadd.xlane.f32.xlu0 %v896
    %v898 = vpop.xlane.xlu0 %897
    %v899 = vsel %vm741, %v867, 0.0
    %900 = vadd.xlane.f32.xlu0 %v899
    %v901 = vpop.xlane.xlu0 %900
    %v902 = vsel %vm741, %v868, 0.0
    %903 = vadd.xlane.f32.xlu0 %v902
    %v904 = vpop.xlane.xlu0 %903
    %v905 = vsel %vm741, %v869, 0.0
    %906 = vadd.xlane.f32.xlu0 %v905
    %v907 = vpop.xlane.xlu0 %906
    %v908 = vsel %vm741, %v870, 0.0
    %909 = vadd.xlane.f32.xlu0 %v908
    %v910 = vpop.xlane.xlu0 %909
    %v911 = vsel %vm741, %v871, 0.0
    %912 = vadd.xlane.f32.xlu0 %v911
    %v913 = vpop.xlane.xlu0 %912
    %v914 = vsel %vm741, %v872, 0.0
    %915 = vadd.xlane.f32.xlu0 %v914
    %v916 = vpop.xlane.xlu0 %915
    %v917 = vsel %vm741, %v873, 0.0
    %918 = vadd.xlane.f32.xlu0 %v917
    %v919 = vpop.xlane.xlu0 %918
    %v920 = vsel %vm741, %v874, 0.0
    %921 = vadd.xlane.f32.xlu0 %v920
    %v922 = vpop.xlane.xlu0 %921
    %v923 = vsel %vm741, %v875, 0.0
    %924 = vadd.xlane.f32.xlu0 %v923
    %v925 = vpop.xlane.xlu0 %924
    %v926 = vsel %vm741, %v876, 0.0
    %927 = vadd.xlane.f32.xlu0 %v926
    %v928 = vpop.xlane.xlu0 %927
    %v929 = vsel %vm741, %v877, 0.0
    %930 = vadd.xlane.f32.xlu0 %v929
    %v931 = vpop.xlane.xlu0 %930
    %v932 = vsel %vm741, %v878, 0.0
    %933 = vadd.xlane.f32.xlu0 %v932
    %v934 = vpop.xlane.xlu0 %933
    %v935 = vsel %vm741, %v879, 0.0
    %936 = vadd.xlane.f32.xlu0 %v935
    %v937 = vpop.xlane.xlu0 %936
    %v938 = vsel %vm741, %v880, 0.0
    %939 = vadd.xlane.f32.xlu0 %v938
    %v940 = vpop.xlane.xlu0 %939
    %v941 = vsel %vm741, %v881, 0.0
    %942 = vadd.xlane.f32.xlu0 %v941
    %v943 = vpop.xlane.xlu0 %942
    %v944 = vsel %vm741, %v882, 0.0
    %945 = vadd.xlane.f32.xlu0 %v944
    %v946 = vpop.xlane.xlu0 %945
    %v947 = vsel %vm741, %v883, 0.0
    %948 = vadd.xlane.f32.xlu0 %v947
    %v949 = vpop.xlane.xlu0 %948
    %v950 = vsel %vm741, %v884, 0.0
    %951 = vadd.xlane.f32.xlu0 %v950
    %v952 = vpop.xlane.xlu0 %951
    %v953 = vsel %vm741, %v885, 0.0
    %954 = vadd.xlane.f32.xlu0 %v953
    %v955 = vpop.xlane.xlu0 %954
    %v956 = vsel %vm741, %v886, 0.0
    %957 = vadd.xlane.f32.xlu0 %v956
    %v958 = vpop.xlane.xlu0 %957
    %v959 = vmul.f32 %v889, %v814
    %v960 = vmul.f32 %v892, %v814
    %v961 = vmul.f32 %v895, %v814
    %v962 = vmul.f32 %v898, %v814
    %v963 = vmul.f32 %v901, %v814
    %v964 = vmul.f32 %v904, %v814
    %v965 = vmul.f32 %v907, %v814
    %v966 = vmul.f32 %v910, %v814
    %v967 = vmul.f32 %v913, %v814
    %v968 = vmul.f32 %v916, %v814
    %v969 = vmul.f32 %v919, %v814
    %v970 = vmul.f32 %v922, %v814
    %v971 = vmul.f32 %v925, %v814
    %v972 = vmul.f32 %v928, %v814
    %v973 = vmul.f32 %v931, %v814
    %v974 = vmul.f32 %v934, %v814
    %v975 = vmul.f32 %v937, %v814
    %v976 = vmul.f32 %v940, %v814
    %v977 = vmul.f32 %v943, %v814
    %v978 = vmul.f32 %v946, %v814
    %v979 = vmul.f32 %v949, %v814
    %v980 = vmul.f32 %v952, %v814
    %v981 = vmul.f32 %v955, %v814
    %v982 = vmul.f32 %v958, %v814
    %v983 = vadd.f32 %v959, 1e-05
    %v984 = vadd.f32 %v960, 1e-05
    %v985 = vadd.f32 %v961, 1e-05
    %v986 = vadd.f32 %v962, 1e-05
    %v987 = vadd.f32 %v963, 1e-05
    %v988 = vadd.f32 %v964, 1e-05
    %v989 = vadd.f32 %v965, 1e-05
    %v990 = vadd.f32 %v966, 1e-05
    %v991 = vadd.f32 %v967, 1e-05
    %v992 = vadd.f32 %v968, 1e-05
    %v993 = vadd.f32 %v969, 1e-05
    %v994 = vadd.f32 %v970, 1e-05
    %v995 = vadd.f32 %v971, 1e-05
    %v996 = vadd.f32 %v972, 1e-05
    %v997 = vadd.f32 %v973, 1e-05
    %v998 = vadd.f32 %v974, 1e-05
    %v999 = vadd.f32 %v975, 1e-05
    %v1000 = vadd.f32 %v976, 1e-05
    %v1001 = vadd.f32 %v977, 1e-05
    %v1002 = vadd.f32 %v978, 1e-05
    %v1003 = vadd.f32 %v979, 1e-05
    %v1004 = vadd.f32 %v980, 1e-05
    %v1005 = vadd.f32 %v981, 1e-05
    %v1006 = vadd.f32 %v982, 1e-05
    %v1007 = vrsqrt.pop %v983
    %v1008 = vrsqrt.pop %v984
    %v1009 = vrsqrt.pop %v985
    %v1010 = vrsqrt.pop %v986
    %v1011 = vrsqrt.pop %v987
    %v1012 = vrsqrt.pop %v988
    %v1013 = vrsqrt.pop %v989
    %v1014 = vrsqrt.pop %v990
    %v1015 = vrsqrt.pop %v991
    %v1016 = vrsqrt.pop %v992
    %v1017 = vrsqrt.pop %v993
    %v1018 = vrsqrt.pop %v994
    %v1019 = vrsqrt.pop %v995
    %v1020 = vrsqrt.pop %v996
    %v1021 = vrsqrt.pop %v997
    %v1022 = vrsqrt.pop %v998
    %v1023 = vrsqrt.pop %v999
    %v1024 = vrsqrt.pop %v1000
    %v1025 = vrsqrt.pop %v1001
    %v1026 = vrsqrt.pop %v1002
    %v1027 = vrsqrt.pop %v1003
    %v1028 = vrsqrt.pop %v1004
    %v1029 = vrsqrt.pop %v1005
    %v1030 = vrsqrt.pop %v1006
    %v1031 = vmul.f32 %v839, %v1007
    %v1032 = vmul.f32 %v840, %v1008
    %v1033 = vmul.f32 %v841, %v1009
    %v1034 = vmul.f32 %v842, %v1010
    %v1035 = vmul.f32 %v843, %v1011
    %v1036 = vmul.f32 %v844, %v1012
    %v1037 = vmul.f32 %v845, %v1013
    %v1038 = vmul.f32 %v846, %v1014
    %v1039 = vmul.f32 %v847, %v1015
    %v1040 = vmul.f32 %v848, %v1016
    %v1041 = vmul.f32 %v849, %v1017
    %v1042 = vmul.f32 %v850, %v1018
    %v1043 = vmul.f32 %v851, %v1019
    %v1044 = vmul.f32 %v852, %v1020
    %v1045 = vmul.f32 %v853, %v1021
    %v1046 = vmul.f32 %v854, %v1022
    %v1047 = vmul.f32 %v855, %v1023
    %v1048 = vmul.f32 %v856, %v1024
    %v1049 = vmul.f32 %v857, %v1025
    %v1050 = vmul.f32 %v858, %v1026
    %v1051 = vmul.f32 %v859, %v1027
    %v1052 = vmul.f32 %v860, %v1028
    %v1053 = vmul.f32 %v861, %v1029
    %v1054 = vmul.f32 %v862, %v1030
    %v1055 = vadd.f32 %v145, 1.0
    %v1056 = vadd.f32 %v149, 1.0
    %v1057 = vadd.f32 %v156, 1.0
    %v1058 = vadd.f32 %v160, 1.0
    %v1059 = vadd.f32 %v167, 1.0
    %v1060 = vadd.f32 %v171, 1.0
    %v1061 = vadd.f32 %v178, 1.0
    %v1062 = vadd.f32 %v182, 1.0
    %v1063 = vadd.f32 %v189, 1.0
    %v1064 = vadd.f32 %v193, 1.0
    %v1065 = vadd.f32 %v200, 1.0
    %v1066 = vadd.f32 %v204, 1.0
    %v1067 = vadd.f32 %v211, 1.0
    %v1068 = vadd.f32 %v215, 1.0
    %v1069 = vadd.f32 %v222, 1.0
    %v1070 = vadd.f32 %v226, 1.0
    %v1071 = vadd.f32 %v233, 1.0
    %v1072 = vadd.f32 %v237, 1.0
    %v1073 = vadd.f32 %v244, 1.0
    %v1074 = vadd.f32 %v248, 1.0
    %v1075 = vadd.f32 %v255, 1.0
    %v1076 = vadd.f32 %v259, 1.0
    %v1077 = vadd.f32 %v266, 1.0
    %v1078 = vadd.f32 %v270, 1.0
    %v1079 = vmul.f32 %v1031, %v1055
    %v1080 = vmul.f32 %v1032, %v1056
    %v1081 = vmul.f32 %v1033, %v1057
    %v1082 = vmul.f32 %v1034, %v1058
    %v1083 = vmul.f32 %v1035, %v1059
    %v1084 = vmul.f32 %v1036, %v1060
    %v1085 = vmul.f32 %v1037, %v1061
    %v1086 = vmul.f32 %v1038, %v1062
    %v1087 = vmul.f32 %v1039, %v1063
    %v1088 = vmul.f32 %v1040, %v1064
    %v1089 = vmul.f32 %v1041, %v1065
    %v1090 = vmul.f32 %v1042, %v1066
    %v1091 = vmul.f32 %v1043, %v1067
    %v1092 = vmul.f32 %v1044, %v1068
    %v1093 = vmul.f32 %v1045, %v1069
    %v1094 = vmul.f32 %v1046, %v1070
    %v1095 = vmul.f32 %v1047, %v1071
    %v1096 = vmul.f32 %v1048, %v1072
    %v1097 = vmul.f32 %v1049, %v1073
    %v1098 = vmul.f32 %v1050, %v1074
    %v1099 = vmul.f32 %v1051, %v1075
    %v1100 = vmul.f32 %v1052, %v1076
    %v1101 = vmul.f32 %v1053, %v1077
    %v1102 = vmul.f32 %v1054, %v1078
    %v1103 = vadd.f32 %v1079, %v274
    %v1104 = vadd.f32 %v1080, %v278
    %v1105 = vadd.f32 %v1081, %v282
    %v1106 = vadd.f32 %v1082, %v286
    %v1107 = vadd.f32 %v1083, %v290
    %v1108 = vadd.f32 %v1084, %v294
    %v1109 = vadd.f32 %v1085, %v298
    %v1110 = vadd.f32 %v1086, %v302
    %v1111 = vadd.f32 %v1087, %v306
    %v1112 = vadd.f32 %v1088, %v310
    %v1113 = vadd.f32 %v1089, %v314
    %v1114 = vadd.f32 %v1090, %v318
    %v1115 = vadd.f32 %v1091, %v322
    %v1116 = vadd.f32 %v1092, %v326
    %v1117 = vadd.f32 %v1093, %v330
    %v1118 = vadd.f32 %v1094, %v334
    %v1119 = vadd.f32 %v1095, %v338
    %v1120 = vadd.f32 %v1096, %v342
    %v1121 = vadd.f32 %v1097, %v346
    %v1122 = vadd.f32 %v1098, %v350
    %v1123 = vadd.f32 %v1099, %v354
    %v1124 = vadd.f32 %v1100, %v358
    %v1125 = vadd.f32 %v1101, %v362
    %v1126 = vadd.f32 %v1102, %v366
    %v1127 = vcombine.low %v1103, %v1107
    %v1128 = vcombine.high %v1103, %v1107
    %v1130 = vunpack.c.l.s4 1983009808
    %v1131 = vunpack.c.0.s8 %v1130
    %v1132 = vlaneseq
    %v1133 = vshrl.u32 %v1132, 7
    %v1134 = vsub.s32 %v1131, %v1133
    %v1135 = vrot.slane %v1127, %v1134
    %v1137 = vunpack.c.l.s4 1983009808
    %v1138 = vunpack.c.0.s8 %v1137
    %v1139 = vlaneseq
    %v1140 = vshrl.u32 %v1139, 7
    %v1141 = vsub.s32 %v1138, %v1140
    %v1142 = vrot.slane %v1128, %v1141
    %v1143 = vcombine.low %v1105, %v1109
    %v1144 = vcombine.high %v1105, %v1109
    %v1146 = vunpack.c.l.s4 1983009808
    %v1147 = vunpack.c.0.s8 %v1146
    %v1148 = vlaneseq
    %v1149 = vshrl.u32 %v1148, 7
    %v1150 = vsub.s32 %v1147, %v1149
    %v1151 = vrot.slane %v1143, %v1150
    %v1153 = vunpack.c.l.s4 1983009808
    %v1154 = vunpack.c.0.s8 %v1153
    %v1155 = vlaneseq
    %v1156 = vshrl.u32 %v1155, 7
    %v1157 = vsub.s32 %v1154, %v1156
    %v1158 = vrot.slane %v1144, %v1157
    %v1159 = vcombine.low %v1111, %v1115
    %v1160 = vcombine.high %v1111, %v1115
    %v1162 = vunpack.c.l.s4 1983009808
    %v1163 = vunpack.c.0.s8 %v1162
    %v1164 = vlaneseq
    %v1165 = vshrl.u32 %v1164, 7
    %v1166 = vsub.s32 %v1163, %v1165
    %v1167 = vrot.slane %v1159, %v1166
    %v1169 = vunpack.c.l.s4 1983009808
    %v1170 = vunpack.c.0.s8 %v1169
    %v1171 = vlaneseq
    %v1172 = vshrl.u32 %v1171, 7
    %v1173 = vsub.s32 %v1170, %v1172
    %v1174 = vrot.slane %v1160, %v1173
    %v1175 = vcombine.low %v1113, %v1117
    %v1176 = vcombine.high %v1113, %v1117
    %v1178 = vunpack.c.l.s4 1983009808
    %v1179 = vunpack.c.0.s8 %v1178
    %v1180 = vlaneseq
    %v1181 = vshrl.u32 %v1180, 7
    %v1182 = vsub.s32 %v1179, %v1181
    %v1183 = vrot.slane %v1175, %v1182
    %v1185 = vunpack.c.l.s4 1983009808
    %v1186 = vunpack.c.0.s8 %v1185
    %v1187 = vlaneseq
    %v1188 = vshrl.u32 %v1187, 7
    %v1189 = vsub.s32 %v1186, %v1188
    %v1190 = vrot.slane %v1176, %v1189
    %v1191 = vcombine.low %v1135, %v1151
    %v1192 = vcombine.high %v1135, %v1151
    %v1194 = vunpack.c.l.s4 1934713408
    %v1195 = vunpack.c.0.s8 %v1194
    %v1196 = vlaneseq
    %v1197 = vshrl.u32 %v1196, 7
    %v1198 = vsub.s32 %v1195, %v1197
    %v1199 = vrot.slane %v1191, %v1198
    %v1201 = vunpack.c.l.s4 1934713408
    %v1202 = vunpack.c.0.s8 %v1201
    %v1203 = vlaneseq
    %v1204 = vshrl.u32 %v1203, 7
    %v1205 = vsub.s32 %v1202, %v1204
    %v1206 = vrot.slane %v1192, %v1205
    %v1207 = vcombine.low %v1142, %v1158
    %v1208 = vcombine.high %v1142, %v1158
    %v1210 = vunpack.c.l.s4 1934713408
    %v1211 = vunpack.c.0.s8 %v1210
    %v1212 = vlaneseq
    %v1213 = vshrl.u32 %v1212, 7
    %v1214 = vsub.s32 %v1211, %v1213
    %v1215 = vrot.slane %v1207, %v1214
    %v1217 = vunpack.c.l.s4 1934713408
    %v1218 = vunpack.c.0.s8 %v1217
    %v1219 = vlaneseq
    %v1220 = vshrl.u32 %v1219, 7
    %v1221 = vsub.s32 %v1218, %v1220
    %v1222 = vrot.slane %v1208, %v1221
    %v1223 = vcombine.low %v1167, %v1183
    %v1224 = vcombine.high %v1167, %v1183
    %v1226 = vunpack.c.l.s4 1934713408
    %v1227 = vunpack.c.0.s8 %v1226
    %v1228 = vlaneseq
    %v1229 = vshrl.u32 %v1228, 7
    %v1230 = vsub.s32 %v1227, %v1229
    %v1231 = vrot.slane %v1223, %v1230
    %v1233 = vunpack.c.l.s4 1934713408
    %v1234 = vunpack.c.0.s8 %v1233
    %v1235 = vlaneseq
    %v1236 = vshrl.u32 %v1235, 7
    %v1237 = vsub.s32 %v1234, %v1236
    %v1238 = vrot.slane %v1224, %v1237
    %v1239 = vcombine.low %v1174, %v1190
    %v1240 = vcombine.high %v1174, %v1190
    %v1242 = vunpack.c.l.s4 1934713408
    %v1243 = vunpack.c.0.s8 %v1242
    %v1244 = vlaneseq
    %v1245 = vshrl.u32 %v1244, 7
    %v1246 = vsub.s32 %v1243, %v1245
    %v1247 = vrot.slane %v1239, %v1246
    %v1249 = vunpack.c.l.s4 1934713408
    %v1250 = vunpack.c.0.s8 %v1249
    %v1251 = vlaneseq
    %v1252 = vshrl.u32 %v1251, 7
    %v1253 = vsub.s32 %v1250, %v1252
    %v1254 = vrot.slane %v1240, %v1253
    %v1255 = vcombine.low %v1199, %v1231
    %v1256 = vcombine.high %v1199, %v1231
    %v1257 = vcombine.low %v1206, %v1238
    %v1258 = vcombine.high %v1206, %v1238
    %v1259 = vcombine.low %v1215, %v1247
    %v1260 = vcombine.high %v1215, %v1247
    %v1261 = vcombine.low %v1222, %v1254
    %v1262 = vcombine.high %v1222, %v1254
    %v1263 = vcombine.low %v1119, %v1123
    %v1264 = vcombine.high %v1119, %v1123
    %v1266 = vunpack.c.l.s4 1983009808
    %v1267 = vunpack.c.0.s8 %v1266
    %v1268 = vlaneseq
    %v1269 = vshrl.u32 %v1268, 7
    %v1270 = vsub.s32 %v1267, %v1269
    %v1271 = vrot.slane %v1263, %v1270
    %v1273 = vunpack.c.l.s4 1983009808
    %v1274 = vunpack.c.0.s8 %v1273
    %v1275 = vlaneseq
    %v1276 = vshrl.u32 %v1275, 7
    %v1277 = vsub.s32 %v1274, %v1276
    %v1278 = vrot.slane %v1264, %v1277
    %v1279 = vcombine.low %v1121, %v1125
    %v1280 = vcombine.high %v1121, %v1125
    %v1282 = vunpack.c.l.s4 1983009808
    %v1283 = vunpack.c.0.s8 %v1282
    %v1284 = vlaneseq
    %v1285 = vshrl.u32 %v1284, 7
    %v1286 = vsub.s32 %v1283, %v1285
    %v1287 = vrot.slane %v1279, %v1286
    %v1289 = vunpack.c.l.s4 1983009808
    %v1290 = vunpack.c.0.s8 %v1289
    %v1291 = vlaneseq
    %v1292 = vshrl.u32 %v1291, 7
    %v1293 = vsub.s32 %v1290, %v1292
    %v1294 = vrot.slane %v1280, %v1293
    %v1295 = vcombine.low %v1271, %v1287
    %v1296 = vcombine.high %v1271, %v1287
    %v1298 = vunpack.c.l.s4 1934713408
    %v1299 = vunpack.c.0.s8 %v1298
    %v1300 = vlaneseq
    %v1301 = vshrl.u32 %v1300, 7
    %v1302 = vsub.s32 %v1299, %v1301
    %v1303 = vrot.slane %v1295, %v1302
    %v1305 = vunpack.c.l.s4 1934713408
    %v1306 = vunpack.c.0.s8 %v1305
    %v1307 = vlaneseq
    %v1308 = vshrl.u32 %v1307, 7
    %v1309 = vsub.s32 %v1306, %v1308
    %v1310 = vrot.slane %v1296, %v1309
    %v1311 = vcombine.low %v1278, %v1294
    %v1312 = vcombine.high %v1278, %v1294
    %v1314 = vunpack.c.l.s4 1934713408
    %v1315 = vunpack.c.0.s8 %v1314
    %v1316 = vlaneseq
    %v1317 = vshrl.u32 %v1316, 7
    %v1318 = vsub.s32 %v1315, %v1317
    %v1319 = vrot.slane %v1311, %v1318
    %v1321 = vunpack.c.l.s4 1934713408
    %v1322 = vunpack.c.0.s8 %v1321
    %v1323 = vlaneseq
    %v1324 = vshrl.u32 %v1323, 7
    %v1325 = vsub.s32 %v1322, %v1324
    %v1326 = vrot.slane %v1312, %v1325
    %v1327 = vcombine.high %v1303, 0.0
    %v1328 = vcombine.high %v1310, 0.0
    %v1329 = vcombine.high %v1319, 0.0
    %v1330 = vcombine.high %v1326, 0.0
    %v1331 = vcombine.low %v1104, %v1108
    %v1332 = vcombine.high %v1104, %v1108
    %v1334 = vunpack.c.l.s4 1983009808
    %v1335 = vunpack.c.0.s8 %v1334
    %v1336 = vlaneseq
    %v1337 = vshrl.u32 %v1336, 7
    %v1338 = vsub.s32 %v1335, %v1337
    %v1339 = vrot.slane %v1331, %v1338
    %v1341 = vunpack.c.l.s4 1983009808
    %v1342 = vunpack.c.0.s8 %v1341
    %v1343 = vlaneseq
    %v1344 = vshrl.u32 %v1343, 7
    %v1345 = vsub.s32 %v1342, %v1344
    %v1346 = vrot.slane %v1332, %v1345
    %v1347 = vcombine.low %v1106, %v1110
    %v1348 = vcombine.high %v1106, %v1110
    %v1350 = vunpack.c.l.s4 1983009808
    %v1351 = vunpack.c.0.s8 %v1350
    %v1352 = vlaneseq
    %v1353 = vshrl.u32 %v1352, 7
    %v1354 = vsub.s32 %v1351, %v1353
    %v1355 = vrot.slane %v1347, %v1354
    %v1357 = vunpack.c.l.s4 1983009808
    %v1358 = vunpack.c.0.s8 %v1357
    %v1359 = vlaneseq
    %v1360 = vshrl.u32 %v1359, 7
    %v1361 = vsub.s32 %v1358, %v1360
    %v1362 = vrot.slane %v1348, %v1361
    %v1363 = vcombine.low %v1112, %v1116
    %v1364 = vcombine.high %v1112, %v1116
    %v1366 = vunpack.c.l.s4 1983009808
    %v1367 = vunpack.c.0.s8 %v1366
    %v1368 = vlaneseq
    %v1369 = vshrl.u32 %v1368, 7
    %v1370 = vsub.s32 %v1367, %v1369
    %v1371 = vrot.slane %v1363, %v1370
    %v1373 = vunpack.c.l.s4 1983009808
    %v1374 = vunpack.c.0.s8 %v1373
    %v1375 = vlaneseq
    %v1376 = vshrl.u32 %v1375, 7
    %v1377 = vsub.s32 %v1374, %v1376
    %v1378 = vrot.slane %v1364, %v1377
    %v1379 = vcombine.low %v1114, %v1118
    %v1380 = vcombine.high %v1114, %v1118
    %v1382 = vunpack.c.l.s4 1983009808
    %v1383 = vunpack.c.0.s8 %v1382
    %v1384 = vlaneseq
    %v1385 = vshrl.u32 %v1384, 7
    %v1386 = vsub.s32 %v1383, %v1385
    %v1387 = vrot.slane %v1379, %v1386
    %v1389 = vunpack.c.l.s4 1983009808
    %v1390 = vunpack.c.0.s8 %v1389
    %v1391 = vlaneseq
    %v1392 = vshrl.u32 %v1391, 7
    %v1393 = vsub.s32 %v1390, %v1392
    %v1394 = vrot.slane %v1380, %v1393
    %v1395 = vcombine.low %v1339, %v1355
    %v1396 = vcombine.high %v1339, %v1355
    %v1398 = vunpack.c.l.s4 1934713408
    %v1399 = vunpack.c.0.s8 %v1398
    %v1400 = vlaneseq
    %v1401 = vshrl.u32 %v1400, 7
    %v1402 = vsub.s32 %v1399, %v1401
    %v1403 = vrot.slane %v1395, %v1402
    %v1405 = vunpack.c.l.s4 1934713408
    %v1406 = vunpack.c.0.s8 %v1405
    %v1407 = vlaneseq
    %v1408 = vshrl.u32 %v1407, 7
    %v1409 = vsub.s32 %v1406, %v1408
    %v1410 = vrot.slane %v1396, %v1409
    %v1411 = vcombine.low %v1346, %v1362
    %v1412 = vcombine.high %v1346, %v1362
    %v1414 = vunpack.c.l.s4 1934713408
    %v1415 = vunpack.c.0.s8 %v1414
    %v1416 = vlaneseq
    %v1417 = vshrl.u32 %v1416, 7
    %v1418 = vsub.s32 %v1415, %v1417
    %v1419 = vrot.slane %v1411, %v1418
    %v1421 = vunpack.c.l.s4 1934713408
    %v1422 = vunpack.c.0.s8 %v1421
    %v1423 = vlaneseq
    %v1424 = vshrl.u32 %v1423, 7
    %v1425 = vsub.s32 %v1422, %v1424
    %v1426 = vrot.slane %v1412, %v1425
    %v1427 = vcombine.low %v1371, %v1387
    %v1428 = vcombine.high %v1371, %v1387
    %v1430 = vunpack.c.l.s4 1934713408
    %v1431 = vunpack.c.0.s8 %v1430
    %v1432 = vlaneseq
    %v1433 = vshrl.u32 %v1432, 7
    %v1434 = vsub.s32 %v1431, %v1433
    %v1435 = vrot.slane %v1427, %v1434
    %v1437 = vunpack.c.l.s4 1934713408
    %v1438 = vunpack.c.0.s8 %v1437
    %v1439 = vlaneseq
    %v1440 = vshrl.u32 %v1439, 7
    %v1441 = vsub.s32 %v1438, %v1440
    %v1442 = vrot.slane %v1428, %v1441
    %v1443 = vcombine.low %v1378, %v1394
    %v1444 = vcombine.high %v1378, %v1394
    %v1446 = vunpack.c.l.s4 1934713408
    %v1447 = vunpack.c.0.s8 %v1446
    %v1448 = vlaneseq
    %v1449 = vshrl.u32 %v1448, 7
    %v1450 = vsub.s32 %v1447, %v1449
    %v1451 = vrot.slane %v1443, %v1450
    %v1453 = vunpack.c.l.s4 1934713408
    %v1454 = vunpack.c.0.s8 %v1453
    %v1455 = vlaneseq
    %v1456 = vshrl.u32 %v1455, 7
    %v1457 = vsub.s32 %v1454, %v1456
    %v1458 = vrot.slane %v1444, %v1457
    %v1459 = vcombine.low %v1403, %v1435
    %v1460 = vcombine.high %v1403, %v1435
    %v1461 = vcombine.low %v1410, %v1442
    %v1462 = vcombine.high %v1410, %v1442
    %v1463 = vcombine.low %v1419, %v1451
    %v1464 = vcombine.high %v1419, %v1451
    %v1465 = vcombine.low %v1426, %v1458
    %v1466 = vcombine.high %v1426, %v1458
    %v1467 = vcombine.low %v1120, %v1124
    %v1468 = vcombine.high %v1120, %v1124
    %v1470 = vunpack.c.l.s4 1983009808
    %v1471 = vunpack.c.0.s8 %v1470
    %v1472 = vlaneseq
    %v1473 = vshrl.u32 %v1472, 7
    %v1474 = vsub.s32 %v1471, %v1473
    %v1475 = vrot.slane %v1467, %v1474
    %v1477 = vunpack.c.l.s4 1983009808
    %v1478 = vunpack.c.0.s8 %v1477
    %v1479 = vlaneseq
    %v1480 = vshrl.u32 %v1479, 7
    %v1481 = vsub.s32 %v1478, %v1480
    %v1482 = vrot.slane %v1468, %v1481
    %v1483 = vcombine.low %v1122, %v1126
    %v1484 = vcombine.high %v1122, %v1126
    %v1486 = vunpack.c.l.s4 1983009808
    %v1487 = vunpack.c.0.s8 %v1486
    %v1488 = vlaneseq
    %v1489 = vshrl.u32 %v1488, 7
    %v1490 = vsub.s32 %v1487, %v1489
    %v1491 = vrot.slane %v1483, %v1490
    %v1493 = vunpack.c.l.s4 1983009808
    %v1494 = vunpack.c.0.s8 %v1493
    %v1495 = vlaneseq
    %v1496 = vshrl.u32 %v1495, 7
    %v1497 = vsub.s32 %v1494, %v1496
    %v1498 = vrot.slane %v1484, %v1497
    %v1499 = vcombine.low %v1475, %v1491
    %v1500 = vcombine.high %v1475, %v1491
    %v1502 = vunpack.c.l.s4 1934713408
    %v1503 = vunpack.c.0.s8 %v1502
    %v1504 = vlaneseq
    %v1505 = vshrl.u32 %v1504, 7
    %v1506 = vsub.s32 %v1503, %v1505
    %v1507 = vrot.slane %v1499, %v1506
    %v1509 = vunpack.c.l.s4 1934713408
    %v1510 = vunpack.c.0.s8 %v1509
    %v1511 = vlaneseq
    %v1512 = vshrl.u32 %v1511, 7
    %v1513 = vsub.s32 %v1510, %v1512
    %v1514 = vrot.slane %v1500, %v1513
    %v1515 = vcombine.low %v1482, %v1498
    %v1516 = vcombine.high %v1482, %v1498
    %v1518 = vunpack.c.l.s4 1934713408
    %v1519 = vunpack.c.0.s8 %v1518
    %v1520 = vlaneseq
    %v1521 = vshrl.u32 %v1520, 7
    %v1522 = vsub.s32 %v1519, %v1521
    %v1523 = vrot.slane %v1515, %v1522
    %v1525 = vunpack.c.l.s4 1934713408
    %v1526 = vunpack.c.0.s8 %v1525
    %v1527 = vlaneseq
    %v1528 = vshrl.u32 %v1527, 7
    %v1529 = vsub.s32 %v1526, %v1528
    %v1530 = vrot.slane %v1516, %v1529
    %v1531 = vcombine.high %v1507, 0.0
    %v1532 = vcombine.high %v1514, 0.0
    %v1533 = vcombine.high %v1523, 0.0
    %v1534 = vcombine.high %v1530, 0.0
    %1537 = vrot.lane.b32.xlu0 %v1256, 16
    %v1538 = vpop.permute.xlu0 %1537
    %1539 = vrot.lane.b32.xlu0 %v1327, 16
    %v1540 = vpop.permute.xlu0 %1539
    %1545 = vrot.lane.b32.xlu0 %v1257, 32
    %v1546 = vpop.permute.xlu0 %1545
    %1547 = vrot.lane.b32.xlu0 %v1310, 32
    %v1548 = vpop.permute.xlu0 %1547
    %1553 = vrot.lane.b32.xlu0 %v1258, 48
    %v1554 = vpop.permute.xlu0 %1553
    %1555 = vrot.lane.b32.xlu0 %v1328, 48
    %v1556 = vpop.permute.xlu0 %1555
    %1561 = vrot.lane.b32.xlu0 %v1259, 64
    %v1562 = vpop.permute.xlu0 %1561
    %1563 = vrot.lane.b32.xlu0 %v1319, 64
    %v1564 = vpop.permute.xlu0 %1563
    %1569 = vrot.lane.b32.xlu0 %v1260, 80
    %v1570 = vpop.permute.xlu0 %1569
    %1571 = vrot.lane.b32.xlu0 %v1329, 80
    %v1572 = vpop.permute.xlu0 %1571
    %1577 = vrot.lane.b32.xlu0 %v1261, 96
    %v1578 = vpop.permute.xlu0 %1577
    %1579 = vrot.lane.b32.xlu0 %v1326, 96
    %v1580 = vpop.permute.xlu0 %1579
    %1585 = vrot.lane.b32.xlu0 %v1262, 112
    %v1586 = vpop.permute.xlu0 %1585
    %1587 = vrot.lane.b32.xlu0 %v1330, 112
    %v1588 = vpop.permute.xlu0 %1587
    %1593 = vrot.lane.b32.xlu0 %v1460, 16
    %v1594 = vpop.permute.xlu0 %1593
    %1595 = vrot.lane.b32.xlu0 %v1531, 16
    %v1596 = vpop.permute.xlu0 %1595
    %1601 = vrot.lane.b32.xlu0 %v1461, 32
    %v1602 = vpop.permute.xlu0 %1601
    %1603 = vrot.lane.b32.xlu0 %v1514, 32
    %v1604 = vpop.permute.xlu0 %1603
    %1609 = vrot.lane.b32.xlu0 %v1462, 48
    %v1610 = vpop.permute.xlu0 %1609
    %1611 = vrot.lane.b32.xlu0 %v1532, 48
    %v1612 = vpop.permute.xlu0 %1611
    %1617 = vrot.lane.b32.xlu0 %v1463, 64
    %v1618 = vpop.permute.xlu0 %1617
    %1619 = vrot.lane.b32.xlu0 %v1523, 64
    %v1620 = vpop.permute.xlu0 %1619
    %1625 = vrot.lane.b32.xlu0 %v1464, 80
    %v1626 = vpop.permute.xlu0 %1625
    %1627 = vrot.lane.b32.xlu0 %v1533, 80
    %v1628 = vpop.permute.xlu0 %1627
    %1633 = vrot.lane.b32.xlu0 %v1465, 96
    %v1634 = vpop.permute.xlu0 %1633
    %1635 = vrot.lane.b32.xlu0 %v1530, 96
    %v1636 = vpop.permute.xlu0 %1635
    %1641 = vrot.lane.b32.xlu0 %v1466, 112
    %v1642 = vpop.permute.xlu0 %1641
    %1643 = vrot.lane.b32.xlu0 %v1534, 112
    %v1644 = vpop.permute.xlu0 %1643
    %v1647 = vsel %vm741, %v1255, %v1538
    %v1648 = vsel %vm741, %v1303, %v1540
    %vm1649 = vcmask 261120
    %v1650 = vsel %vm1649, %v1647, %v1546
    %v1651 = vsel %vm1649, %v1648, %v1548
    %vm1652 = vcmask 392192
    %v1653 = vsel %vm1652, %v1650, %v1554
    %v1654 = vsel %vm1652, %v1651, %v1556
    %vm1655 = vcmask 523264
    %v1656 = vsel %vm1655, %v1653, %v1562
    %v1657 = vsel %vm1655, %v1654, %v1564
    %vm1658 = vcmask 654336
    %v1659 = vsel %vm1658, %v1656, %v1570
    %v1660 = vsel %vm1658, %v1657, %v1572
    %vm1661 = vcmask 785408
    %v1662 = vsel %vm1661, %v1659, %v1578
    %v1663 = vsel %vm1661, %v1660, %v1580
    %vm1664 = vcmask 916480
    %v1665 = vsel %vm1664, %v1662, %v1586
    %v1666 = vsel %vm1664, %v1663, %v1588
    %v1667 = vsel %vm741, %v1459, %v1594
    %v1668 = vsel %vm741, %v1507, %v1596
    %v1669 = vsel %vm1649, %v1667, %v1602
    %v1670 = vsel %vm1649, %v1668, %v1604
    %v1671 = vsel %vm1652, %v1669, %v1610
    %v1672 = vsel %vm1652, %v1670, %v1612
    %v1673 = vsel %vm1655, %v1671, %v1618
    %v1674 = vsel %vm1655, %v1672, %v1620
    %v1675 = vsel %vm1658, %v1673, %v1626
    %v1676 = vsel %vm1658, %v1674, %v1628
    %v1677 = vsel %vm1661, %v1675, %v1634
    %v1678 = vsel %vm1661, %v1676, %v1636
    %v1679 = vsel %vm1664, %v1677, %v1642
    %v1680 = vsel %vm1664, %v1678, %v1644
    %v1681 = vld [vmem:[#allocation2] sm:$0xff]
    %v1682 = vld [vmem:[#allocation2 + $0x8] sm:$0xff]
    %v1683 = vld [vmem:[#allocation2 + $0x10] sm:$0xff]
    %v1684 = vld [vmem:[#allocation2 + $0x18] sm:$0xff]
    %v1685 = vld [vmem:[#allocation2 + $0x20] sm:$0xff]
    %v1686 = vld [vmem:[#allocation2 + $0x28] sm:$0xff]
    %v1687 = vld [vmem:[#allocation2 + $0x30] sm:$0xff]
    %v1688 = vld [vmem:[#allocation2 + $0x38] sm:$0xff]
    %v1689 = vld [vmem:[#allocation2 + $0x40] sm:$0xff]
    %v1690 = vld [vmem:[#allocation2 + $0x48] sm:$0xff]
    %v1691 = vld [vmem:[#allocation2 + $0x50] sm:$0xff]
    %v1692 = vld [vmem:[#allocation2 + $0x58] sm:$0xff]
    %v1693 = vld [vmem:[#allocation2 + $0x60] sm:$0xff]
    %v1694 = vld [vmem:[#allocation2 + $0x68] sm:$0xff]
    %v1695 = vld [vmem:[#allocation2 + $0x70] sm:$0xff]
    %v1696 = vld [vmem:[#allocation2 + $0x78] sm:$0xff]
    %v1697 = vld [vmem:[#allocation2 + $0x80] sm:$0xff]
    %v1698 = vld [vmem:[#allocation2 + $0x88] sm:$0xff]
    %v1699 = vld [vmem:[#allocation2 + $0x90] sm:$0xff]
    %v1700 = vld [vmem:[#allocation2 + $0x98] sm:$0xff]
    %v1701 = vld [vmem:[#allocation2 + $0xa0] sm:$0xff]
    %v1702 = vld [vmem:[#allocation2 + $0xa8] sm:$0xff]
    %v1703 = vld [vmem:[#allocation2 + $0xb0] sm:$0xff]
    %v1704 = vld [vmem:[#allocation2 + $0xb8] sm:$0xff]
    %v1705 = vld [vmem:[#allocation2 + $0xc0] sm:$0xff]
    %v1706 = vld [vmem:[#allocation2 + $0xc8] sm:$0xff]
    %v1707 = vld [vmem:[#allocation2 + $0xd0] sm:$0xff]
    %v1708 = vld [vmem:[#allocation2 + $0xd8] sm:$0xff]
    %v1709 = vld [vmem:[#allocation2 + $0xe0] sm:$0xff]
    %v1710 = vld [vmem:[#allocation2 + $0xe8] sm:$0xff]
    %v1711 = vld [vmem:[#allocation2 + $0xf0] sm:$0xff]
    %v1712 = vld [vmem:[#allocation2 + $0xf8] sm:$0xff]
    %v1713 = vld [vmem:[#allocation2 + $0x100] sm:$0xff]
    %v1714 = vld [vmem:[#allocation2 + $0x108] sm:$0xff]
    %v1715 = vld [vmem:[#allocation2 + $0x110] sm:$0xff]
    %v1716 = vld [vmem:[#allocation2 + $0x118] sm:$0xff]
    %v1717 = vld [vmem:[#allocation2 + $0x120] sm:$0xff]
    %v1718 = vld [vmem:[#allocation2 + $0x128] sm:$0xff]
    %v1719 = vld [vmem:[#allocation2 + $0x130] sm:$0xff]
    %v1720 = vld [vmem:[#allocation2 + $0x138] sm:$0xff]
    %v1721 = vld [vmem:[#allocation2 + $0x140] sm:$0xff]
    %v1722 = vld [vmem:[#allocation2 + $0x148] sm:$0xff]
    %v1723 = vld [vmem:[#allocation2 + $0x150] sm:$0xff]
    %v1724 = vld [vmem:[#allocation2 + $0x158] sm:$0xff]
    %v1725 = vld [vmem:[#allocation2 + $0x160] sm:$0xff]
    %v1726 = vld [vmem:[#allocation2 + $0x168] sm:$0xff]
    %v1727 = vld [vmem:[#allocation2 + $0x170] sm:$0xff]
    %v1728 = vld [vmem:[#allocation2 + $0x178] sm:$0xff]
    %v1729 = vld [vmem:[#allocation2 + $0x180] sm:$0xff]
    %v1730 = vld [vmem:[#allocation2 + $0x188] sm:$0xff]
    %v1731 = vld [vmem:[#allocation2 + $0x190] sm:$0xff]
    %v1732 = vld [vmem:[#allocation2 + $0x198] sm:$0xff]
    %v1733 = vld [vmem:[#allocation2 + $0x1a0] sm:$0xff]
    %v1734 = vld [vmem:[#allocation2 + $0x1a8] sm:$0xff]
    %v1735 = vld [vmem:[#allocation2 + $0x1b0] sm:$0xff]
    %v1736 = vld [vmem:[#allocation2 + $0x1b8] sm:$0xff]
    %v1737 = vld [vmem:[#allocation2 + $0x1c0] sm:$0xff]
    %v1738 = vld [vmem:[#allocation2 + $0x1c8] sm:$0xff]
    %v1739 = vld [vmem:[#allocation2 + $0x1d0] sm:$0xff]
    %v1740 = vld [vmem:[#allocation2 + $0x1d8] sm:$0xff]
    %v1741 = vld [vmem:[#allocation2 + $0x1e0] sm:$0xff]
    %v1742 = vld [vmem:[#allocation2 + $0x1e8] sm:$0xff]
    %v1743 = vld [vmem:[#allocation2 + $0x1f0] sm:$0xff]
    %v1744 = vld [vmem:[#allocation2 + $0x1f8] sm:$0xff]
    %v1745 = vld [vmem:[%s5] sm:$0x3]
    %v1747 = vlaneseq
    %v1748 = vshrl.u32 %v1747, 7
    %v1749 = vsub.s32 0, %v1748
    %v1750 = vrot.slane %v1745, %v1749
    %v1751 = vlaneseq
    %v1752 = vshrl.u32 %v1751, 7
    %v1753 = vsub.s32 1, %v1752
    %v1754 = vrot.slane %v1745, %v1753
    %v1757 = vand.u32 %v1682, 4294901760
    %1758 = vmatprep.subr.mxu0 %v1757
    %v1759 = vand.u32 %v1681, 4294901760
    %1760 = vmatpush1.msra.mxu0 %v1759
    %v1761 = vand.u32 %v1684, 4294901760
    %1762 = vmatprep.subr.mxu0 %v1761
    %v1763 = vand.u32 %v1683, 4294901760
    %1764 = vmatpush1.msra.mxu0 %v1763
    %v1765 = vand.u32 %v1686, 4294901760
    %1766 = vmatprep.subr.mxu0 %v1765
    %v1767 = vand.u32 %v1685, 4294901760
    %1768 = vmatpush1.msra.mxu0 %v1767
    %v1769 = vand.u32 %v1688, 4294901760
    %1770 = vmatprep.subr.mxu0 %v1769
    %v1771 = vand.u32 %v1687, 4294901760
    %1772 = vmatpush1.msra.mxu0 %v1771
    %v1773 = vand.u32 %v1690, 4294901760
    %1774 = vmatprep.subr.mxu0 %v1773
    %v1775 = vand.u32 %v1689, 4294901760
    %1776 = vmatpush1.msra.mxu0 %v1775
    %v1777 = vand.u32 %v1692, 4294901760
    %1778 = vmatprep.subr.mxu0 %v1777
    %v1779 = vand.u32 %v1691, 4294901760
    %1780 = vmatpush1.msra.mxu0 %v1779
    %v1781 = vand.u32 %v1694, 4294901760
    %1782 = vmatprep.subr.mxu0 %v1781
    %v1783 = vand.u32 %v1693, 4294901760
    %1784 = vmatpush1.msra.mxu0 %v1783
    %v1785 = vand.u32 %v1696, 4294901760
    %1786 = vmatprep.subr.mxu0 %v1785
    %v1787 = vand.u32 %v1695, 4294901760
    %1788 = vmatpush1.msra.mxu0 %v1787
    %v1789 = vand.u32 %v1698, 4294901760
    %1790 = vmatprep.subr.mxu0 %v1789
    %v1791 = vand.u32 %v1697, 4294901760
    %1792 = vmatpush1.msra.mxu0 %v1791
    %v1793 = vand.u32 %v1700, 4294901760
    %1794 = vmatprep.subr.mxu0 %v1793
    %v1795 = vand.u32 %v1699, 4294901760
    %1796 = vmatpush1.msra.mxu0 %v1795
    %v1797 = vand.u32 %v1702, 4294901760
    %1798 = vmatprep.subr.mxu0 %v1797
    %v1799 = vand.u32 %v1701, 4294901760
    %1800 = vmatpush1.msra.mxu0 %v1799
    %v1801 = vand.u32 %v1704, 4294901760
    %1802 = vmatprep.subr.mxu0 %v1801
    %v1803 = vand.u32 %v1703, 4294901760
    %1804 = vmatpush1.msra.mxu0 %v1803
    %v1805 = vand.u32 %v1706, 4294901760
    %1806 = vmatprep.subr.mxu0 %v1805
    %v1807 = vand.u32 %v1705, 4294901760
    %1808 = vmatpush1.msra.mxu0 %v1807
    %v1809 = vand.u32 %v1708, 4294901760
    %1810 = vmatprep.subr.mxu0 %v1809
    %v1811 = vand.u32 %v1707, 4294901760
    %1812 = vmatpush1.msra.mxu0 %v1811
    %v1813 = vand.u32 %v1710, 4294901760
    %1814 = vmatprep.subr.mxu0 %v1813
    %v1815 = vand.u32 %v1709, 4294901760
    %1816 = vmatpush1.msra.mxu0 %v1815
    %v1817 = vand.u32 %v1712, 4294901760
    %1818 = vmatprep.subr.mxu0 %v1817
    %v1819 = vand.u32 %v1711, 4294901760
    %1820 = vmatpush1.msra.mxu0 %v1819
    %v1821 = vand.u32 %v1714, 4294901760
    %1822 = vmatprep.subr.mxu0 %v1821
    %v1823 = vand.u32 %v1713, 4294901760
    %1824 = vmatpush1.msra.mxu0 %v1823
    %v1825 = vand.u32 %v1716, 4294901760
    %1826 = vmatprep.subr.mxu0 %v1825
    %v1827 = vand.u32 %v1715, 4294901760
    %1828 = vmatpush1.msra.mxu0 %v1827
    %v1829 = vand.u32 %v1718, 4294901760
    %1830 = vmatprep.subr.mxu0 %v1829
    %v1831 = vand.u32 %v1717, 4294901760
    %1832 = vmatpush1.msra.mxu0 %v1831
    %v1833 = vand.u32 %v1720, 4294901760
    %1834 = vmatprep.subr.mxu0 %v1833
    %v1835 = vand.u32 %v1719, 4294901760
    %1836 = vmatpush1.msra.mxu0 %v1835
    %v1837 = vand.u32 %v1722, 4294901760
    %1838 = vmatprep.subr.mxu0 %v1837
    %v1839 = vand.u32 %v1721, 4294901760
    %1840 = vmatpush1.msra.mxu0 %v1839
    %v1841 = vand.u32 %v1724, 4294901760
    %1842 = vmatprep.subr.mxu0 %v1841
    %v1843 = vand.u32 %v1723, 4294901760
    %1844 = vmatpush1.msra.mxu0 %v1843
    %v1845 = vand.u32 %v1726, 4294901760
    %1846 = vmatprep.subr.mxu0 %v1845
    %v1847 = vand.u32 %v1725, 4294901760
    %1848 = vmatpush1.msra.mxu0 %v1847
    %v1849 = vand.u32 %v1728, 4294901760
    %1850 = vmatprep.subr.mxu0 %v1849
    %v1851 = vand.u32 %v1727, 4294901760
    %1852 = vmatpush1.msra.mxu0 %v1851
    %v1853 = vand.u32 %v1730, 4294901760
    %1854 = vmatprep.subr.mxu0 %v1853
    %v1855 = vand.u32 %v1729, 4294901760
    %1856 = vmatpush1.msra.mxu0 %v1855
    %v1857 = vand.u32 %v1732, 4294901760
    %1858 = vmatprep.subr.mxu0 %v1857
    %v1859 = vand.u32 %v1731, 4294901760
    %1860 = vmatpush1.msra.mxu0 %v1859
    %v1861 = vand.u32 %v1734, 4294901760
    %1862 = vmatprep.subr.mxu0 %v1861
    %v1863 = vand.u32 %v1733, 4294901760
    %1864 = vmatpush1.msra.mxu0 %v1863
    %v1865 = vand.u32 %v1736, 4294901760
    %1866 = vmatprep.subr.mxu0 %v1865
    %v1867 = vand.u32 %v1735, 4294901760
    %1868 = vmatpush1.msra.mxu0 %v1867
    %v1869 = vand.u32 %v1738, 4294901760
    %1870 = vmatprep.subr.mxu0 %v1869
    %v1871 = vand.u32 %v1737, 4294901760
    %1872 = vmatpush1.msra.mxu0 %v1871
    %v1873 = vand.u32 %v1740, 4294901760
    %1874 = vmatprep.subr.mxu0 %v1873
    %v1875 = vand.u32 %v1739, 4294901760
    %1876 = vmatpush1.msra.mxu0 %v1875
    %v1877 = vand.u32 %v1742, 4294901760
    %1878 = vmatprep.subr.mxu0 %v1877
    %v1879 = vand.u32 %v1741, 4294901760
    %1880 = vmatpush1.msra.mxu0 %v1879
    %v1881 = vand.u32 %v1744, 4294901760
    %1882 = vmatprep.subr.mxu0 %v1881
    %v1883 = vand.u32 %v1743, 4294901760
    %1884 = vmatpush1.msra.mxu0 %v1883
    %v1885 = vand.u32 %v1679, 4294901760
    %v1886 = vsub.f32 %v1679, %v1885
    %v1887 = vand.u32 %v1886, 4294901760
    %v1888 = vsub.f32 %v1886, %v1887
    %v1889 = vand.u32 %v1888, 4294901760
    %1890 = vmatprep.mubr.f32.mxu0 %v1889
    %v1891 = vand.u32 %v1665, 4294901760
    %v1892 = vsub.f32 %v1665, %v1891
    %v1893 = vand.u32 %v1892, 4294901760
    %v1894 = vsub.f32 %v1892, %v1893
    %v1895 = vand.u32 %v1894, 4294901760
    %1896 = vmatmul.mubr.f32.gmra.mrb[0].mxu0 %v1895
    %v1897 = vpop.f32.mrb[0].mxu0
    %v1898 = vadd.f32 %v1750, %v1897
    %v1899 = vpop.f32.mrb[0].mxu0
    %v1900 = vadd.f32 %v1754, %v1899
    %v1901 = vand.u32 %v1680, 4294901760
    %v1902 = vsub.f32 %v1680, %v1901
    %v1903 = vand.u32 %v1902, 4294901760
    %v1904 = vsub.f32 %v1902, %v1903
    %v1905 = vand.u32 %v1904, 4294901760
    %1906 = vmatprep.mubr.f32.mxu0 %v1905
    %v1907 = vand.u32 %v1666, 4294901760
    %v1908 = vsub.f32 %v1666, %v1907
    %v1909 = vand.u32 %v1908, 4294901760
    %v1910 = vsub.f32 %v1908, %v1909
    %v1911 = vand.u32 %v1910, 4294901760
    %1912 = vmatmul.mubr.f32.gmra.mrb[0].mxu0 %v1911
    %v1913 = vpop.f32.mrb[0].mxu0
    %v1914 = vadd.f32 %v1750, %v1913
    %v1915 = vpop.f32.mrb[0].mxu0
    %v1916 = vadd.f32 %v1754, %v1915
    %1917 = vdwg.mxu0
    %v1918 = vand.u32 %v1682, 4294901760
    %v1919 = vsub.f32 %v1682, %v1918
    %v1920 = vand.u32 %v1919, 4294901760
    %v1921 = vsub.f32 %v1919, %v1920
    %v1922 = vand.u32 %v1921, 4294901760
    %1923 = vmatprep.subr.mxu0 %v1922
    %v1924 = vand.u32 %v1681, 4294901760
    %v1925 = vsub.f32 %v1681, %v1924
    %v1926 = vand.u32 %v1925, 4294901760
    %v1927 = vsub.f32 %v1925, %v1926
    %v1928 = vand.u32 %v1927, 4294901760
    %1929 = vmatpush1.msra.mxu0 %v1928
    %v1930 = vand.u32 %v1684, 4294901760
    %v1931 = vsub.f32 %v1684, %v1930
    %v1932 = vand.u32 %v1931, 4294901760
    %v1933 = vsub.f32 %v1931, %v1932
    %v1934 = vand.u32 %v1933, 4294901760
    %1935 = vmatprep.subr.mxu0 %v1934
    %v1936 = vand.u32 %v1683, 4294901760
    %v1937 = vsub.f32 %v1683, %v1936
    %v1938 = vand.u32 %v1937, 4294901760
    %v1939 = vsub.f32 %v1937, %v1938
    %v1940 = vand.u32 %v1939, 4294901760
    %1941 = vmatpush1.msra.mxu0 %v1940
    %v1942 = vand.u32 %v1686, 4294901760
    %v1943 = vsub.f32 %v1686, %v1942
    %v1944 = vand.u32 %v1943, 4294901760
    %v1945 = vsub.f32 %v1943, %v1944
    %v1946 = vand.u32 %v1945, 4294901760
    %1947 = vmatprep.subr.mxu0 %v1946
    %v1948 = vand.u32 %v1685, 4294901760
    %v1949 = vsub.f32 %v1685, %v1948
    %v1950 = vand.u32 %v1949, 4294901760
    %v1951 = vsub.f32 %v1949, %v1950
    %v1952 = vand.u32 %v1951, 4294901760
    %1953 = vmatpush1.msra.mxu0 %v1952
    %v1954 = vand.u32 %v1688, 4294901760
    %v1955 = vsub.f32 %v1688, %v1954
    %v1956 = vand.u32 %v1955, 4294901760
    %v1957 = vsub.f32 %v1955, %v1956
    %v1958 = vand.u32 %v1957, 4294901760
    %1959 = vmatprep.subr.mxu0 %v1958
    %v1960 = vand.u32 %v1687, 4294901760
    %v1961 = vsub.f32 %v1687, %v1960
    %v1962 = vand.u32 %v1961, 4294901760
    %v1963 = vsub.f32 %v1961, %v1962
    %v1964 = vand.u32 %v1963, 4294901760
    %1965 = vmatpush1.msra.mxu0 %v1964
    %v1966 = vand.u32 %v1690, 4294901760
    %v1967 = vsub.f32 %v1690, %v1966
    %v1968 = vand.u32 %v1967, 4294901760
    %v1969 = vsub.f32 %v1967, %v1968
    %v1970 = vand.u32 %v1969, 4294901760
    %1971 = vmatprep.subr.mxu0 %v1970
    %v1972 = vand.u32 %v1689, 4294901760
    %v1973 = vsub.f32 %v1689, %v1972
    %v1974 = vand.u32 %v1973, 4294901760
    %v1975 = vsub.f32 %v1973, %v1974
    %v1976 = vand.u32 %v1975, 4294901760
    %1977 = vmatpush1.msra.mxu0 %v1976
    %v1978 = vand.u32 %v1692, 4294901760
    %v1979 = vsub.f32 %v1692, %v1978
    %v1980 = vand.u32 %v1979, 4294901760
    %v1981 = vsub.f32 %v1979, %v1980
    %v1982 = vand.u32 %v1981, 4294901760
    %1983 = vmatprep.subr.mxu0 %v1982
    %v1984 = vand.u32 %v1691, 4294901760
    %v1985 = vsub.f32 %v1691, %v1984
    %v1986 = vand.u32 %v1985, 4294901760
    %v1987 = vsub.f32 %v1985, %v1986
    %v1988 = vand.u32 %v1987, 4294901760
    %1989 = vmatpush1.msra.mxu0 %v1988
    %v1990 = vand.u32 %v1694, 4294901760
    %v1991 = vsub.f32 %v1694, %v1990
    %v1992 = vand.u32 %v1991, 4294901760
    %v1993 = vsub.f32 %v1991, %v1992
    %v1994 = vand.u32 %v1993, 4294901760
    %1995 = vmatprep.subr.mxu0 %v1994
    %v1996 = vand.u32 %v1693, 4294901760
    %v1997 = vsub.f32 %v1693, %v1996
    %v1998 = vand.u32 %v1997, 4294901760
    %v1999 = vsub.f32 %v1997, %v1998
    %v2000 = vand.u32 %v1999, 4294901760
    %2001 = vmatpush1.msra.mxu0 %v2000
    %v2002 = vand.u32 %v1696, 4294901760
    %v2003 = vsub.f32 %v1696, %v2002
    %v2004 = vand.u32 %v2003, 4294901760
    %v2005 = vsub.f32 %v2003, %v2004
    %v2006 = vand.u32 %v2005, 4294901760
    %2007 = vmatprep.subr.mxu0 %v2006
    %v2008 = vand.u32 %v1695, 4294901760
    %v2009 = vsub.f32 %v1695, %v2008
    %v2010 = vand.u32 %v2009, 4294901760
    %v2011 = vsub.f32 %v2009, %v2010
    %v2012 = vand.u32 %v2011, 4294901760
    %2013 = vmatpush1.msra.mxu0 %v2012
    %v2014 = vand.u32 %v1698, 4294901760
    %v2015 = vsub.f32 %v1698, %v2014
    %v2016 = vand.u32 %v2015, 4294901760
    %v2017 = vsub.f32 %v2015, %v2016
    %v2018 = vand.u32 %v2017, 4294901760
    %2019 = vmatprep.subr.mxu0 %v2018
    %v2020 = vand.u32 %v1697, 4294901760
    %v2021 = vsub.f32 %v1697, %v2020
    %v2022 = vand.u32 %v2021, 4294901760
    %v2023 = vsub.f32 %v2021, %v2022
    %v2024 = vand.u32 %v2023, 4294901760
    %2025 = vmatpush1.msra.mxu0 %v2024
    %v2026 = vand.u32 %v1700, 4294901760
    %v2027 = vsub.f32 %v1700, %v2026
    %v2028 = vand.u32 %v2027, 4294901760
    %v2029 = vsub.f32 %v2027, %v2028
    %v2030 = vand.u32 %v2029, 4294901760
    %2031 = vmatprep.subr.mxu0 %v2030
    %v2032 = vand.u32 %v1699, 4294901760
    %v2033 = vsub.f32 %v1699, %v2032
    %v2034 = vand.u32 %v2033, 4294901760
    %v2035 = vsub.f32 %v2033, %v2034
    %v2036 = vand.u32 %v2035, 4294901760
    %2037 = vmatpush1.msra.mxu0 %v2036
    %v2038 = vand.u32 %v1702, 4294901760
    %v2039 = vsub.f32 %v1702, %v2038
    %v2040 = vand.u32 %v2039, 4294901760
    %v2041 = vsub.f32 %v2039, %v2040
    %v2042 = vand.u32 %v2041, 4294901760
    %2043 = vmatprep.subr.mxu0 %v2042
    %v2044 = vand.u32 %v1701, 4294901760
    %v2045 = vsub.f32 %v1701, %v2044
    %v2046 = vand.u32 %v2045, 4294901760
    %v2047 = vsub.f32 %v2045, %v2046
    %v2048 = vand.u32 %v2047, 4294901760
    %2049 = vmatpush1.msra.mxu0 %v2048
    %v2050 = vand.u32 %v1704, 4294901760
    %v2051 = vsub.f32 %v1704, %v2050
    %v2052 = vand.u32 %v2051, 4294901760
    %v2053 = vsub.f32 %v2051, %v2052
    %v2054 = vand.u32 %v2053, 4294901760
    %2055 = vmatprep.subr.mxu0 %v2054
    %v2056 = vand.u32 %v1703, 4294901760
    %v2057 = vsub.f32 %v1703, %v2056
    %v2058 = vand.u32 %v2057, 4294901760
    %v2059 = vsub.f32 %v2057, %v2058
    %v2060 = vand.u32 %v2059, 4294901760
    %2061 = vmatpush1.msra.mxu0 %v2060
    %v2062 = vand.u32 %v1706, 4294901760
    %v2063 = vsub.f32 %v1706, %v2062
    %v2064 = vand.u32 %v2063, 4294901760
    %v2065 = vsub.f32 %v2063, %v2064
    %v2066 = vand.u32 %v2065, 4294901760
    %2067 = vmatprep.subr.mxu0 %v2066
    %v2068 = vand.u32 %v1705, 4294901760
    %v2069 = vsub.f32 %v1705, %v2068
    %v2070 = vand.u32 %v2069, 4294901760
    %v2071 = vsub.f32 %v2069, %v2070
    %v2072 = vand.u32 %v2071, 4294901760
    %2073 = vmatpush1.msra.mxu0 %v2072
    %v2074 = vand.u32 %v1708, 4294901760
    %v2075 = vsub.f32 %v1708, %v2074
    %v2076 = vand.u32 %v2075, 4294901760
    %v2077 = vsub.f32 %v2075, %v2076
    %v2078 = vand.u32 %v2077, 4294901760
    %2079 = vmatprep.subr.mxu0 %v2078
    %v2080 = vand.u32 %v1707, 4294901760
    %v2081 = vsub.f32 %v1707, %v2080
    %v2082 = vand.u32 %v2081, 4294901760
    %v2083 = vsub.f32 %v2081, %v2082
    %v2084 = vand.u32 %v2083, 4294901760
    %2085 = vmatpush1.msra.mxu0 %v2084
    %v2086 = vand.u32 %v1710, 4294901760
    %v2087 = vsub.f32 %v1710, %v2086
    %v2088 = vand.u32 %v2087, 4294901760
    %v2089 = vsub.f32 %v2087, %v2088
    %v2090 = vand.u32 %v2089, 4294901760
    %2091 = vmatprep.subr.mxu0 %v2090
    %v2092 = vand.u32 %v1709, 4294901760
    %v2093 = vsub.f32 %v1709, %v2092
    %v2094 = vand.u32 %v2093, 4294901760
    %v2095 = vsub.f32 %v2093, %v2094
    %v2096 = vand.u32 %v2095, 4294901760
    %2097 = vmatpush1.msra.mxu0 %v2096
    %v2098 = vand.u32 %v1712, 4294901760
    %v2099 = vsub.f32 %v1712, %v2098
    %v2100 = vand.u32 %v2099, 4294901760
    %v2101 = vsub.f32 %v2099, %v2100
    %v2102 = vand.u32 %v2101, 4294901760
    %2103 = vmatprep.subr.mxu0 %v2102
    %v2104 = vand.u32 %v1711, 4294901760
    %v2105 = vsub.f32 %v1711, %v2104
    %v2106 = vand.u32 %v2105, 4294901760
    %v2107 = vsub.f32 %v2105, %v2106
    %v2108 = vand.u32 %v2107, 4294901760
    %2109 = vmatpush1.msra.mxu0 %v2108
    %v2110 = vand.u32 %v1714, 4294901760
    %v2111 = vsub.f32 %v1714, %v2110
    %v2112 = vand.u32 %v2111, 4294901760
    %v2113 = vsub.f32 %v2111, %v2112
    %v2114 = vand.u32 %v2113, 4294901760
    %2115 = vmatprep.subr.mxu0 %v2114
    %v2116 = vand.u32 %v1713, 4294901760
    %v2117 = vsub.f32 %v1713, %v2116
    %v2118 = vand.u32 %v2117, 4294901760
    %v2119 = vsub.f32 %v2117, %v2118
    %v2120 = vand.u32 %v2119, 4294901760
    %2121 = vmatpush1.msra.mxu0 %v2120
    %v2122 = vand.u32 %v1716, 4294901760
    %v2123 = vsub.f32 %v1716, %v2122
    %v2124 = vand.u32 %v2123, 4294901760
    %v2125 = vsub.f32 %v2123, %v2124
    %v2126 = vand.u32 %v2125, 4294901760
    %2127 = vmatprep.subr.mxu0 %v2126
    %v2128 = vand.u32 %v1715, 4294901760
    %v2129 = vsub.f32 %v1715, %v2128
    %v2130 = vand.u32 %v2129, 4294901760
    %v2131 = vsub.f32 %v2129, %v2130
    %v2132 = vand.u32 %v2131, 4294901760
    %2133 = vmatpush1.msra.mxu0 %v2132
    %v2134 = vand.u32 %v1718, 4294901760
    %v2135 = vsub.f32 %v1718, %v2134
    %v2136 = vand.u32 %v2135, 4294901760
    %v2137 = vsub.f32 %v2135, %v2136
    %v2138 = vand.u32 %v2137, 4294901760
    %2139 = vmatprep.subr.mxu0 %v2138
    %v2140 = vand.u32 %v1717, 4294901760
    %v2141 = vsub.f32 %v1717, %v2140
    %v2142 = vand.u32 %v2141, 4294901760
    %v2143 = vsub.f32 %v2141, %v2142
    %v2144 = vand.u32 %v2143, 4294901760
    %2145 = vmatpush1.msra.mxu0 %v2144
    %v2146 = vand.u32 %v1720, 4294901760
    %v2147 = vsub.f32 %v1720, %v2146
    %v2148 = vand.u32 %v2147, 4294901760
    %v2149 = vsub.f32 %v2147, %v2148
    %v2150 = vand.u32 %v2149, 4294901760
    %2151 = vmatprep.subr.mxu0 %v2150
    %v2152 = vand.u32 %v1719, 4294901760
    %v2153 = vsub.f32 %v1719, %v2152
    %v2154 = vand.u32 %v2153, 4294901760
    %v2155 = vsub.f32 %v2153, %v2154
    %v2156 = vand.u32 %v2155, 4294901760
    %2157 = vmatpush1.msra.mxu0 %v2156
    %v2158 = vand.u32 %v1722, 4294901760
    %v2159 = vsub.f32 %v1722, %v2158
    %v2160 = vand.u32 %v2159, 4294901760
    %v2161 = vsub.f32 %v2159, %v2160
    %v2162 = vand.u32 %v2161, 4294901760
    %2163 = vmatprep.subr.mxu0 %v2162
    %v2164 = vand.u32 %v1721, 4294901760
    %v2165 = vsub.f32 %v1721, %v2164
    %v2166 = vand.u32 %v2165, 4294901760
    %v2167 = vsub.f32 %v2165, %v2166
    %v2168 = vand.u32 %v2167, 4294901760
    %2169 = vmatpush1.msra.mxu0 %v2168
    %v2170 = vand.u32 %v1724, 4294901760
    %v2171 = vsub.f32 %v1724, %v2170
    %v2172 = vand.u32 %v2171, 4294901760
    %v2173 = vsub.f32 %v2171, %v2172
    %v2174 = vand.u32 %v2173, 4294901760
    %2175 = vmatprep.subr.mxu0 %v2174
    %v2176 = vand.u32 %v1723, 4294901760
    %v2177 = vsub.f32 %v1723, %v2176
    %v2178 = vand.u32 %v2177, 4294901760
    %v2179 = vsub.f32 %v2177, %v2178
    %v2180 = vand.u32 %v2179, 4294901760
    %2181 = vmatpush1.msra.mxu0 %v2180
    %v2182 = vand.u32 %v1726, 4294901760
    %v2183 = vsub.f32 %v1726, %v2182
    %v2184 = vand.u32 %v2183, 4294901760
    %v2185 = vsub.f32 %v2183, %v2184
    %v2186 = vand.u32 %v2185, 4294901760
    %2187 = vmatprep.subr.mxu0 %v2186
    %v2188 = vand.u32 %v1725, 4294901760
    %v2189 = vsub.f32 %v1725, %v2188
    %v2190 = vand.u32 %v2189, 4294901760
    %v2191 = vsub.f32 %v2189, %v2190
    %v2192 = vand.u32 %v2191, 4294901760
    %2193 = vmatpush1.msra.mxu0 %v2192
    %v2194 = vand.u32 %v1728, 4294901760
    %v2195 = vsub.f32 %v1728, %v2194
    %v2196 = vand.u32 %v2195, 4294901760
    %v2197 = vsub.f32 %v2195, %v2196
    %v2198 = vand.u32 %v2197, 4294901760
    %2199 = vmatprep.subr.mxu0 %v2198
    %v2200 = vand.u32 %v1727, 4294901760
    %v2201 = vsub.f32 %v1727, %v2200
    %v2202 = vand.u32 %v2201, 4294901760
    %v2203 = vsub.f32 %v2201, %v2202
    %v2204 = vand.u32 %v2203, 4294901760
    %2205 = vmatpush1.msra.mxu0 %v2204
    %v2206 = vand.u32 %v1730, 4294901760
    %v2207 = vsub.f32 %v1730, %v2206
    %v2208 = vand.u32 %v2207, 4294901760
    %v2209 = vsub.f32 %v2207, %v2208
    %v2210 = vand.u32 %v2209, 4294901760
    %2211 = vmatprep.subr.mxu0 %v2210
    %v2212 = vand.u32 %v1729, 4294901760
    %v2213 = vsub.f32 %v1729, %v2212
    %v2214 = vand.u32 %v2213, 4294901760
    %v2215 = vsub.f32 %v2213, %v2214
    %v2216 = vand.u32 %v2215, 4294901760
    %2217 = vmatpush1.msra.mxu0 %v2216
    %v2218 = vand.u32 %v1732, 4294901760
    %v2219 = vsub.f32 %v1732, %v2218
    %v2220 = vand.u32 %v2219, 4294901760
    %v2221 = vsub.f32 %v2219, %v2220
    %v2222 = vand.u32 %v2221, 4294901760
    %2223 = vmatprep.subr.mxu0 %v2222
    %v2224 = vand.u32 %v1731, 4294901760
    %v2225 = vsub.f32 %v1731, %v2224
    %v2226 = vand.u32 %v2225, 4294901760
    %v2227 = vsub.f32 %v2225, %v2226
    %v2228 = vand.u32 %v2227, 4294901760
    %2229 = vmatpush1.msra.mxu0 %v2228
    %v2230 = vand.u32 %v1734, 4294901760
    %v2231 = vsub.f32 %v1734, %v2230
    %v2232 = vand.u32 %v2231, 4294901760
    %v2233 = vsub.f32 %v2231, %v2232
    %v2234 = vand.u32 %v2233, 4294901760
    %2235 = vmatprep.subr.mxu0 %v2234
    %v2236 = vand.u32 %v1733, 4294901760
    %v2237 = vsub.f32 %v1733, %v2236
    %v2238 = vand.u32 %v2237, 4294901760
    %v2239 = vsub.f32 %v2237, %v2238
    %v2240 = vand.u32 %v2239, 4294901760
    %2241 = vmatpush1.msra.mxu0 %v2240
    %v2242 = vand.u32 %v1736, 4294901760
    %v2243 = vsub.f32 %v1736, %v2242
    %v2244 = vand.u32 %v2243, 4294901760
    %v2245 = vsub.f32 %v2243, %v2244
    %v2246 = vand.u32 %v2245, 4294901760
    %2247 = vmatprep.subr.mxu0 %v2246
    %v2248 = vand.u32 %v1735, 4294901760
    %v2249 = vsub.f32 %v1735, %v2248
    %v2250 = vand.u32 %v2249, 4294901760
    %v2251 = vsub.f32 %v2249, %v2250
    %v2252 = vand.u32 %v2251, 4294901760
    %2253 = vmatpush1.msra.mxu0 %v2252
    %v2254 = vand.u32 %v1738, 4294901760
    %v2255 = vsub.f32 %v1738, %v2254
    %v2256 = vand.u32 %v2255, 4294901760
    %v2257 = vsub.f32 %v2255, %v2256
    %v2258 = vand.u32 %v2257, 4294901760
    %2259 = vmatprep.subr.mxu0 %v2258
    %v2260 = vand.u32 %v1737, 4294901760
    %v2261 = vsub.f32 %v1737, %v2260
    %v2262 = vand.u32 %v2261, 4294901760
    %v2263 = vsub.f32 %v2261, %v2262
    %v2264 = vand.u32 %v2263, 4294901760
    %2265 = vmatpush1.msra.mxu0 %v2264
    %v2266 = vand.u32 %v1740, 4294901760
    %v2267 = vsub.f32 %v1740, %v2266
    %v2268 = vand.u32 %v2267, 4294901760
    %v2269 = vsub.f32 %v2267, %v2268
    %v2270 = vand.u32 %v2269, 4294901760
    %2271 = vmatprep.subr.mxu0 %v2270
    %v2272 = vand.u32 %v1739, 4294901760
    %v2273 = vsub.f32 %v1739, %v2272
    %v2274 = vand.u32 %v2273, 4294901760
    %v2275 = vsub.f32 %v2273, %v2274
    %v2276 = vand.u32 %v2275, 4294901760
    %2277 = vmatpush1.msra.mxu0 %v2276
    %v2278 = vand.u32 %v1742, 4294901760
    %v2279 = vsub.f32 %v1742, %v2278
    %v2280 = vand.u32 %v2279, 4294901760
    %v2281 = vsub.f32 %v2279, %v2280
    %v2282 = vand.u32 %v2281, 4294901760
    %2283 = vmatprep.subr.mxu0 %v2282
    %v2284 = vand.u32 %v1741, 4294901760
    %v2285 = vsub.f32 %v1741, %v2284
    %v2286 = vand.u32 %v2285, 4294901760
    %v2287 = vsub.f32 %v2285, %v2286
    %v2288 = vand.u32 %v2287, 4294901760
    %2289 = vmatpush1.msra.mxu0 %v2288
    %v2290 = vand.u32 %v1744, 4294901760
    %v2291 = vsub.f32 %v1744, %v2290
    %v2292 = vand.u32 %v2291, 4294901760
    %v2293 = vsub.f32 %v2291, %v2292
    %v2294 = vand.u32 %v2293, 4294901760
    %2295 = vmatprep.subr.mxu0 %v2294
    %v2296 = vand.u32 %v1743, 4294901760
    %v2297 = vsub.f32 %v1743, %v2296
    %v2298 = vand.u32 %v2297, 4294901760
    %v2299 = vsub.f32 %v2297, %v2298
    %v2300 = vand.u32 %v2299, 4294901760
    %2301 = vmatpush1.msra.mxu0 %v2300
    %v2302 = vand.u32 %v1679, 4294901760
    %2303 = vmatprep.mubr.f32.mxu0 %v2302
    %v2304 = vand.u32 %v1665, 4294901760
    %2305 = vmatmul.mubr.f32.gmra.mrb[0].mxu0 %v2304
    %v2306 = vpop.f32.mrb[0].mxu0
    %v2307 = vadd.f32 %v1898, %v2306
    %v2308 = vpop.f32.mrb[0].mxu0
    %v2309 = vadd.f32 %v1900, %v2308
    %v2310 = vand.u32 %v1680, 4294901760
    %2311 = vmatprep.mubr.f32.mxu0 %v2310
    %v2312 = vand.u32 %v1666, 4294901760
    %2313 = vmatmul.mubr.f32.gmra.mrb[0].mxu0 %v2312
    %v2314 = vpop.f32.mrb[0].mxu0
    %v2315 = vadd.f32 %v1914, %v2314
    %v2316 = vpop.f32.mrb[0].mxu0
    %v2317 = vadd.f32 %v1916, %v2316
    %2318 = vdwg.mxu0
    %v2319 = vand.u32 %v1682, 4294901760
    %v2320 = vsub.f32 %v1682, %v2319
    %2321 = vmatprep.subr.mxu0 %v2320
    %v2322 = vand.u32 %v1681, 4294901760
    %v2323 = vsub.f32 %v1681, %v2322
    %2324 = vmatpush1.msra.mxu0 %v2323
    %v2325 = vand.u32 %v1684, 4294901760
    %v2326 = vsub.f32 %v1684, %v2325
    %2327 = vmatprep.subr.mxu0 %v2326
    %v2328 = vand.u32 %v1683, 4294901760
    %v2329 = vsub.f32 %v1683, %v2328
    %2330 = vmatpush1.msra.mxu0 %v2329
    %v2331 = vand.u32 %v1686, 4294901760
    %v2332 = vsub.f32 %v1686, %v2331
    %2333 = vmatprep.subr.mxu0 %v2332
    %v2334 = vand.u32 %v1685, 4294901760
    %v2335 = vsub.f32 %v1685, %v2334
    %2336 = vmatpush1.msra.mxu0 %v2335
    %v2337 = vand.u32 %v1688, 4294901760
    %v2338 = vsub.f32 %v1688, %v2337
    %2339 = vmatprep.subr.mxu0 %v2338
    %v2340 = vand.u32 %v1687, 4294901760
    %v2341 = vsub.f32 %v1687, %v2340
    %2342 = vmatpush1.msra.mxu0 %v2341
    %v2343 = vand.u32 %v1690, 4294901760
    %v2344 = vsub.f32 %v1690, %v2343
    %2345 = vmatprep.subr.mxu0 %v2344
    %v2346 = vand.u32 %v1689, 4294901760
    %v2347 = vsub.f32 %v1689, %v2346
    %2348 = vmatpush1.msra.mxu0 %v2347
    %v2349 = vand.u32 %v1692, 4294901760
    %v2350 = vsub.f32 %v1692, %v2349
    %2351 = vmatprep.subr.mxu0 %v2350
    %v2352 = vand.u32 %v1691, 4294901760
    %v2353 = vsub.f32 %v1691, %v2352
    %2354 = vmatpush1.msra.mxu0 %v2353
    %v2355 = vand.u32 %v1694, 4294901760
    %v2356 = vsub.f32 %v1694, %v2355
    %2357 = vmatprep.subr.mxu0 %v2356
    %v2358 = vand.u32 %v1693, 4294901760
    %v2359 = vsub.f32 %v1693, %v2358
    %2360 = vmatpush1.msra.mxu0 %v2359
    %v2361 = vand.u32 %v1696, 4294901760
    %v2362 = vsub.f32 %v1696, %v2361
    %2363 = vmatprep.subr.mxu0 %v2362
    %v2364 = vand.u32 %v1695, 4294901760
    %v2365 = vsub.f32 %v1695, %v2364
    %2366 = vmatpush1.msra.mxu0 %v2365
    %v2367 = vand.u32 %v1698, 4294901760
    %v2368 = vsub.f32 %v1698, %v2367
    %2369 = vmatprep.subr.mxu0 %v2368
    %v2370 = vand.u32 %v1697, 4294901760
    %v2371 = vsub.f32 %v1697, %v2370
    %2372 = vmatpush1.msra.mxu0 %v2371
    %v2373 = vand.u32 %v1700, 4294901760
    %v2374 = vsub.f32 %v1700, %v2373
    %2375 = vmatprep.subr.mxu0 %v2374
    %v2376 = vand.u32 %v1699, 4294901760
    %v2377 = vsub.f32 %v1699, %v2376
    %2378 = vmatpush1.msra.mxu0 %v2377
    %v2379 = vand.u32 %v1702, 4294901760
    %v2380 = vsub.f32 %v1702, %v2379
    %2381 = vmatprep.subr.mxu0 %v2380
    %v2382 = vand.u32 %v1701, 4294901760
    %v2383 = vsub.f32 %v1701, %v2382
    %2384 = vmatpush1.msra.mxu0 %v2383
    %v2385 = vand.u32 %v1704, 4294901760
    %v2386 = vsub.f32 %v1704, %v2385
    %2387 = vmatprep.subr.mxu0 %v2386
    %v2388 = vand.u32 %v1703, 4294901760
    %v2389 = vsub.f32 %v1703, %v2388
    %2390 = vmatpush1.msra.mxu0 %v2389
    %v2391 = vand.u32 %v1706, 4294901760
    %v2392 = vsub.f32 %v1706, %v2391
    %2393 = vmatprep.subr.mxu0 %v2392
    %v2394 = vand.u32 %v1705, 4294901760
    %v2395 = vsub.f32 %v1705, %v2394
    %2396 = vmatpush1.msra.mxu0 %v2395
    %v2397 = vand.u32 %v1708, 4294901760
    %v2398 = vsub.f32 %v1708, %v2397
    %2399 = vmatprep.subr.mxu0 %v2398
    %v2400 = vand.u32 %v1707, 4294901760
    %v2401 = vsub.f32 %v1707, %v2400
    %2402 = vmatpush1.msra.mxu0 %v2401
    %v2403 = vand.u32 %v1710, 4294901760
    %v2404 = vsub.f32 %v1710, %v2403
    %2405 = vmatprep.subr.mxu0 %v2404
    %v2406 = vand.u32 %v1709, 4294901760
    %v2407 = vsub.f32 %v1709, %v2406
    %2408 = vmatpush1.msra.mxu0 %v2407
    %v2409 = vand.u32 %v1712, 4294901760
    %v2410 = vsub.f32 %v1712, %v2409
    %2411 = vmatprep.subr.mxu0 %v2410
    %v2412 = vand.u32 %v1711, 4294901760
    %v2413 = vsub.f32 %v1711, %v2412
    %2414 = vmatpush1.msra.mxu0 %v2413
    %v2415 = vand.u32 %v1714, 4294901760
    %v2416 = vsub.f32 %v1714, %v2415
    %2417 = vmatprep.subr.mxu0 %v2416
    %v2418 = vand.u32 %v1713, 4294901760
    %v2419 = vsub.f32 %v1713, %v2418
    %2420 = vmatpush1.msra.mxu0 %v2419
    %v2421 = vand.u32 %v1716, 4294901760
    %v2422 = vsub.f32 %v1716, %v2421
    %2423 = vmatprep.subr.mxu0 %v2422
    %v2424 = vand.u32 %v1715, 4294901760
    %v2425 = vsub.f32 %v1715, %v2424
    %2426 = vmatpush1.msra.mxu0 %v2425
    %v2427 = vand.u32 %v1718, 4294901760
    %v2428 = vsub.f32 %v1718, %v2427
    %2429 = vmatprep.subr.mxu0 %v2428
    %v2430 = vand.u32 %v1717, 4294901760
    %v2431 = vsub.f32 %v1717, %v2430
    %2432 = vmatpush1.msra.mxu0 %v2431
    %v2433 = vand.u32 %v1720, 4294901760
    %v2434 = vsub.f32 %v1720, %v2433
    %2435 = vmatprep.subr.mxu0 %v2434
    %v2436 = vand.u32 %v1719, 4294901760
    %v2437 = vsub.f32 %v1719, %v2436
    %2438 = vmatpush1.msra.mxu0 %v2437
    %v2439 = vand.u32 %v1722, 4294901760
    %v2440 = vsub.f32 %v1722, %v2439
    %2441 = vmatprep.subr.mxu0 %v2440
    %v2442 = vand.u32 %v1721, 4294901760
    %v2443 = vsub.f32 %v1721, %v2442
    %2444 = vmatpush1.msra.mxu0 %v2443
    %v2445 = vand.u32 %v1724, 4294901760
    %v2446 = vsub.f32 %v1724, %v2445
    %2447 = vmatprep.subr.mxu0 %v2446
    %v2448 = vand.u32 %v1723, 4294901760
    %v2449 = vsub.f32 %v1723, %v2448
    %2450 = vmatpush1.msra.mxu0 %v2449
    %v2451 = vand.u32 %v1726, 4294901760
    %v2452 = vsub.f32 %v1726, %v2451
    %2453 = vmatprep.subr.mxu0 %v2452
    %v2454 = vand.u32 %v1725, 4294901760
    %v2455 = vsub.f32 %v1725, %v2454
    %2456 = vmatpush1.msra.mxu0 %v2455
    %v2457 = vand.u32 %v1728, 4294901760
    %v2458 = vsub.f32 %v1728, %v2457
    %2459 = vmatprep.subr.mxu0 %v2458
    %v2460 = vand.u32 %v1727, 4294901760
    %v2461 = vsub.f32 %v1727, %v2460
    %2462 = vmatpush1.msra.mxu0 %v2461
    %v2463 = vand.u32 %v1730, 4294901760
    %v2464 = vsub.f32 %v1730, %v2463
    %2465 = vmatprep.subr.mxu0 %v2464
    %v2466 = vand.u32 %v1729, 4294901760
    %v2467 = vsub.f32 %v1729, %v2466
    %2468 = vmatpush1.msra.mxu0 %v2467
    %v2469 = vand.u32 %v1732, 4294901760
    %v2470 = vsub.f32 %v1732, %v2469
    %2471 = vmatprep.subr.mxu0 %v2470
    %v2472 = vand.u32 %v1731, 4294901760
    %v2473 = vsub.f32 %v1731, %v2472
    %2474 = vmatpush1.msra.mxu0 %v2473
    %v2475 = vand.u32 %v1734, 4294901760
    %v2476 = vsub.f32 %v1734, %v2475
    %2477 = vmatprep.subr.mxu0 %v2476
    %v2478 = vand.u32 %v1733, 4294901760
    %v2479 = vsub.f32 %v1733, %v2478
    %2480 = vmatpush1.msra.mxu0 %v2479
    %v2481 = vand.u32 %v1736, 4294901760
    %v2482 = vsub.f32 %v1736, %v2481
    %2483 = vmatprep.subr.mxu0 %v2482
    %v2484 = vand.u32 %v1735, 4294901760
    %v2485 = vsub.f32 %v1735, %v2484
    %2486 = vmatpush1.msra.mxu0 %v2485
    %v2487 = vand.u32 %v1738, 4294901760
    %v2488 = vsub.f32 %v1738, %v2487
    %2489 = vmatprep.subr.mxu0 %v2488
    %v2490 = vand.u32 %v1737, 4294901760
    %v2491 = vsub.f32 %v1737, %v2490
    %2492 = vmatpush1.msra.mxu0 %v2491
    %v2493 = vand.u32 %v1740, 4294901760
    %v2494 = vsub.f32 %v1740, %v2493
    %2495 = vmatprep.subr.mxu0 %v2494
    %v2496 = vand.u32 %v1739, 4294901760
    %v2497 = vsub.f32 %v1739, %v2496
    %2498 = vmatpush1.msra.mxu0 %v2497
    %v2499 = vand.u32 %v1742, 4294901760
    %v2500 = vsub.f32 %v1742, %v2499
    %2501 = vmatprep.subr.mxu0 %v2500
    %v2502 = vand.u32 %v1741, 4294901760
    %v2503 = vsub.f32 %v1741, %v2502
    %2504 = vmatpush1.msra.mxu0 %v2503
    %v2505 = vand.u32 %v1744, 4294901760
    %v2506 = vsub.f32 %v1744, %v2505
    %2507 = vmatprep.subr.mxu0 %v2506
    %v2508 = vand.u32 %v1743, 4294901760
    %v2509 = vsub.f32 %v1743, %v2508
    %2510 = vmatpush1.msra.mxu0 %v2509
    %v2511 = vand.u32 %v1679, 4294901760
    %v2512 = vsub.f32 %v1679, %v2511
    %2513 = vmatprep.mubr.f32.mxu0 %v2512
    %v2514 = vand.u32 %v1665, 4294901760
    %v2515 = vsub.f32 %v1665, %v2514
    %2516 = vmatmul.mubr.f32.gmra.mrb[0].mxu0 %v2515
    %v2517 = vpop.f32.mrb[0].mxu0
    %v2518 = vadd.f32 %v2307, %v2517
    %v2519 = vpop.f32.mrb[0].mxu0
    %v2520 = vadd.f32 %v2309, %v2519
    %v2521 = vand.u32 %v1680, 4294901760
    %v2522 = vsub.f32 %v1680, %v2521
    %2523 = vmatprep.mubr.f32.mxu0 %v2522
    %v2524 = vand.u32 %v1666, 4294901760
    %v2525 = vsub.f32 %v1666, %v2524
    %2526 = vmatmul.mubr.f32.gmra.mrb[0].mxu0 %v2525
    %v2527 = vpop.f32.mrb[0].mxu0
    %v2528 = vadd.f32 %v2315, %v2527
    %v2529 = vpop.f32.mrb[0].mxu0
    %v2530 = vadd.f32 %v2317, %v2529
    %2531 = vdwg.mxu0
    %v2532 = vand.u32 %v1682, 4294901760
    %2533 = vmatprep.subr.mxu0 %v2532
    %v2534 = vand.u32 %v1681, 4294901760
    %2535 = vmatpush1.msra.mxu0 %v2534
    %v2536 = vand.u32 %v1684, 4294901760
    %2537 = vmatprep.subr.mxu0 %v2536
    %v2538 = vand.u32 %v1683, 4294901760
    %2539 = vmatpush1.msra.mxu0 %v2538
    %v2540 = vand.u32 %v1686, 4294901760
    %2541 = vmatprep.subr.mxu0 %v2540
    %v2542 = vand.u32 %v1685, 4294901760
    %2543 = vmatpush1.msra.mxu0 %v2542
    %v2544 = vand.u32 %v1688, 4294901760
    %2545 = vmatprep.subr.mxu0 %v2544
    %v2546 = vand.u32 %v1687, 4294901760
    %2547 = vmatpush1.msra.mxu0 %v2546
    %v2548 = vand.u32 %v1690, 4294901760
    %2549 = vmatprep.subr.mxu0 %v2548
    %v2550 = vand.u32 %v1689, 4294901760
    %2551 = vmatpush1.msra.mxu0 %v2550
    %v2552 = vand.u32 %v1692, 4294901760
    %2553 = vmatprep.subr.mxu0 %v2552
    %v2554 = vand.u32 %v1691, 4294901760
    %2555 = vmatpush1.msra.mxu0 %v2554
    %v2556 = vand.u32 %v1694, 4294901760
    %2557 = vmatprep.subr.mxu0 %v2556
    %v2558 = vand.u32 %v1693, 4294901760
    %2559 = vmatpush1.msra.mxu0 %v2558
    %v2560 = vand.u32 %v1696, 4294901760
    %2561 = vmatprep.subr.mxu0 %v2560
    %v2562 = vand.u32 %v1695, 4294901760
    %2563 = vmatpush1.msra.mxu0 %v2562
    %v2564 = vand.u32 %v1698, 4294901760
    %2565 = vmatprep.subr.mxu0 %v2564
    %v2566 = vand.u32 %v1697, 4294901760
    %2567 = vmatpush1.msra.mxu0 %v2566
    %v2568 = vand.u32 %v1700, 4294901760
    %2569 = vmatprep.subr.mxu0 %v2568
    %v2570 = vand.u32 %v1699, 4294901760
    %2571 = vmatpush1.msra.mxu0 %v2570
    %v2572 = vand.u32 %v1702, 4294901760
    %2573 = vmatprep.subr.mxu0 %v2572
    %v2574 = vand.u32 %v1701, 4294901760
    %2575 = vmatpush1.msra.mxu0 %v2574
    %v2576 = vand.u32 %v1704, 4294901760
    %2577 = vmatprep.subr.mxu0 %v2576
    %v2578 = vand.u32 %v1703, 4294901760
    %2579 = vmatpush1.msra.mxu0 %v2578
    %v2580 = vand.u32 %v1706, 4294901760
    %2581 = vmatprep.subr.mxu0 %v2580
    %v2582 = vand.u32 %v1705, 4294901760
    %2583 = vmatpush1.msra.mxu0 %v2582
    %v2584 = vand.u32 %v1708, 4294901760
    %2585 = vmatprep.subr.mxu0 %v2584
    %v2586 = vand.u32 %v1707, 4294901760
    %2587 = vmatpush1.msra.mxu0 %v2586
    %v2588 = vand.u32 %v1710, 4294901760
    %2589 = vmatprep.subr.mxu0 %v2588
    %v2590 = vand.u32 %v1709, 4294901760
    %2591 = vmatpush1.msra.mxu0 %v2590
    %v2592 = vand.u32 %v1712, 4294901760
    %2593 = vmatprep.subr.mxu0 %v2592
    %v2594 = vand.u32 %v1711, 4294901760
    %2595 = vmatpush1.msra.mxu0 %v2594
    %v2596 = vand.u32 %v1714, 4294901760
    %2597 = vmatprep.subr.mxu0 %v2596
    %v2598 = vand.u32 %v1713, 4294901760
    %2599 = vmatpush1.msra.mxu0 %v2598
    %v2600 = vand.u32 %v1716, 4294901760
    %2601 = vmatprep.subr.mxu0 %v2600
    %v2602 = vand.u32 %v1715, 4294901760
    %2603 = vmatpush1.msra.mxu0 %v2602
    %v2604 = vand.u32 %v1718, 4294901760
    %2605 = vmatprep.subr.mxu0 %v2604
    %v2606 = vand.u32 %v1717, 4294901760
    %2607 = vmatpush1.msra.mxu0 %v2606
    %v2608 = vand.u32 %v1720, 4294901760
    %2609 = vmatprep.subr.mxu0 %v2608
    %v2610 = vand.u32 %v1719, 4294901760
    %2611 = vmatpush1.msra.mxu0 %v2610
    %v2612 = vand.u32 %v1722, 4294901760
    %2613 = vmatprep.subr.mxu0 %v2612
    %v2614 = vand.u32 %v1721, 4294901760
    %2615 = vmatpush1.msra.mxu0 %v2614
    %v2616 = vand.u32 %v1724, 4294901760
    %2617 = vmatprep.subr.mxu0 %v2616
    %v2618 = vand.u32 %v1723, 4294901760
    %2619 = vmatpush1.msra.mxu0 %v2618
    %v2620 = vand.u32 %v1726, 4294901760
    %2621 = vmatprep.subr.mxu0 %v2620
    %v2622 = vand.u32 %v1725, 4294901760
    %2623 = vmatpush1.msra.mxu0 %v2622
    %v2624 = vand.u32 %v1728, 4294901760
    %2625 = vmatprep.subr.mxu0 %v2624
    %v2626 = vand.u32 %v1727, 4294901760
    %2627 = vmatpush1.msra.mxu0 %v2626
    %v2628 = vand.u32 %v1730, 4294901760
    %2629 = vmatprep.subr.mxu0 %v2628
    %v2630 = vand.u32 %v1729, 4294901760
    %2631 = vmatpush1.msra.mxu0 %v2630
    %v2632 = vand.u32 %v1732, 4294901760
    %2633 = vmatprep.subr.mxu0 %v2632
    %v2634 = vand.u32 %v1731, 4294901760
    %2635 = vmatpush1.msra.mxu0 %v2634
    %v2636 = vand.u32 %v1734, 4294901760
    %2637 = vmatprep.subr.mxu0 %v2636
    %v2638 = vand.u32 %v1733, 4294901760
    %2639 = vmatpush1.msra.mxu0 %v2638
    %v2640 = vand.u32 %v1736, 4294901760
    %2641 = vmatprep.subr.mxu0 %v2640
    %v2642 = vand.u32 %v1735, 4294901760
    %2643 = vmatpush1.msra.mxu0 %v2642
    %v2644 = vand.u32 %v1738, 4294901760
    %2645 = vmatprep.subr.mxu0 %v2644
    %v2646 = vand.u32 %v1737, 4294901760
    %2647 = vmatpush1.msra.mxu0 %v2646
    %v2648 = vand.u32 %v1740, 4294901760
    %2649 = vmatprep.subr.mxu0 %v2648
    %v2650 = vand.u32 %v1739, 4294901760
    %2651 = vmatpush1.msra.mxu0 %v2650
    %v2652 = vand.u32 %v1742, 4294901760
    %2653 = vmatprep.subr.mxu0 %v2652
    %v2654 = vand.u32 %v1741, 4294901760
    %2655 = vmatpush1.msra.mxu0 %v2654
    %v2656 = vand.u32 %v1744, 4294901760
    %2657 = vmatprep.subr.mxu0 %v2656
    %v2658 = vand.u32 %v1743, 4294901760
    %2659 = vmatpush1.msra.mxu0 %v2658
    %v2660 = vand.u32 %v1679, 4294901760
    %v2661 = vsub.f32 %v1679, %v2660
    %v2662 = vand.u32 %v2661, 4294901760
    %2663 = vmatprep.mubr.f32.mxu0 %v2662
    %v2664 = vand.u32 %v1665, 4294901760
    %v2665 = vsub.f32 %v1665, %v2664
    %v2666 = vand.u32 %v2665, 4294901760
    %2667 = vmatmul.mubr.f32.gmra.mrb[0].mxu0 %v2666
    %v2668 = vpop.f32.mrb[0].mxu0
    %v2669 = vadd.f32 %v2518, %v2668
    %v2670 = vpop.f32.mrb[0].mxu0
    %v2671 = vadd.f32 %v2520, %v2670
    %v2672 = vand.u32 %v1680, 4294901760
    %v2673 = vsub.f32 %v1680, %v2672
    %v2674 = vand.u32 %v2673, 4294901760
    %2675 = vmatprep.mubr.f32.mxu0 %v2674
    %v2676 = vand.u32 %v1666, 4294901760
    %v2677 = vsub.f32 %v1666, %v2676
    %v2678 = vand.u32 %v2677, 4294901760
    %2679 = vmatmul.mubr.f32.gmra.mrb[0].mxu0 %v2678
    %v2680 = vpop.f32.mrb[0].mxu0
    %v2681 = vadd.f32 %v2528, %v2680
    %v2682 = vpop.f32.mrb[0].mxu0
    %v2683 = vadd.f32 %v2530, %v2682
    %2684 = vdwg.mxu0
    %v2685 = vand.u32 %v1682, 4294901760
    %v2686 = vsub.f32 %v1682, %v2685
    %v2687 = vand.u32 %v2686, 4294901760
    %2688 = vmatprep.subr.mxu0 %v2687
    %v2689 = vand.u32 %v1681, 4294901760
    %v2690 = vsub.f32 %v1681, %v2689
    %v2691 = vand.u32 %v2690, 4294901760
    %2692 = vmatpush1.msra.mxu0 %v2691
    %v2693 = vand.u32 %v1684, 4294901760
    %v2694 = vsub.f32 %v1684, %v2693
    %v2695 = vand.u32 %v2694, 4294901760
    %2696 = vmatprep.subr.mxu0 %v2695
    %v2697 = vand.u32 %v1683, 4294901760
    %v2698 = vsub.f32 %v1683, %v2697
    %v2699 = vand.u32 %v2698, 4294901760
    %2700 = vmatpush1.msra.mxu0 %v2699
    %v2701 = vand.u32 %v1686, 4294901760
    %v2702 = vsub.f32 %v1686, %v2701
    %v2703 = vand.u32 %v2702, 4294901760
    %2704 = vmatprep.subr.mxu0 %v2703
    %v2705 = vand.u32 %v1685, 4294901760
    %v2706 = vsub.f32 %v1685, %v2705
    %v2707 = vand.u32 %v2706, 4294901760
    %2708 = vmatpush1.msra.mxu0 %v2707
    %v2709 = vand.u32 %v1688, 4294901760
    %v2710 = vsub.f32 %v1688, %v2709
    %v2711 = vand.u32 %v2710, 4294901760
    %2712 = vmatprep.subr.mxu0 %v2711
    %v2713 = vand.u32 %v1687, 4294901760
    %v2714 = vsub.f32 %v1687, %v2713
    %v2715 = vand.u32 %v2714, 4294901760
    %2716 = vmatpush1.msra.mxu0 %v2715
    %v2717 = vand.u32 %v1690, 4294901760
    %v2718 = vsub.f32 %v1690, %v2717
    %v2719 = vand.u32 %v2718, 4294901760
    %2720 = vmatprep.subr.mxu0 %v2719
    %v2721 = vand.u32 %v1689, 4294901760
    %v2722 = vsub.f32 %v1689, %v2721
    %v2723 = vand.u32 %v2722, 4294901760
    %2724 = vmatpush1.msra.mxu0 %v2723
    %v2725 = vand.u32 %v1692, 4294901760
    %v2726 = vsub.f32 %v1692, %v2725
    %v2727 = vand.u32 %v2726, 4294901760
    %2728 = vmatprep.subr.mxu0 %v2727
    %v2729 = vand.u32 %v1691, 4294901760
    %v2730 = vsub.f32 %v1691, %v2729
    %v2731 = vand.u32 %v2730, 4294901760
    %2732 = vmatpush1.msra.mxu0 %v2731
    %v2733 = vand.u32 %v1694, 4294901760
    %v2734 = vsub.f32 %v1694, %v2733
    %v2735 = vand.u32 %v2734, 4294901760
    %2736 = vmatprep.subr.mxu0 %v2735
    %v2737 = vand.u32 %v1693, 4294901760
    %v2738 = vsub.f32 %v1693, %v2737
    %v2739 = vand.u32 %v2738, 4294901760
    %2740 = vmatpush1.msra.mxu0 %v2739
    %v2741 = vand.u32 %v1696, 4294901760
    %v2742 = vsub.f32 %v1696, %v2741
    %v2743 = vand.u32 %v2742, 4294901760
    %2744 = vmatprep.subr.mxu0 %v2743
    %v2745 = vand.u32 %v1695, 4294901760
    %v2746 = vsub.f32 %v1695, %v2745
    %v2747 = vand.u32 %v2746, 4294901760
    %2748 = vmatpush1.msra.mxu0 %v2747
    %v2749 = vand.u32 %v1698, 4294901760
    %v2750 = vsub.f32 %v1698, %v2749
    %v2751 = vand.u32 %v2750, 4294901760
    %2752 = vmatprep.subr.mxu0 %v2751
    %v2753 = vand.u32 %v1697, 4294901760
    %v2754 = vsub.f32 %v1697, %v2753
    %v2755 = vand.u32 %v2754, 4294901760
    %2756 = vmatpush1.msra.mxu0 %v2755
    %v2757 = vand.u32 %v1700, 4294901760
    %v2758 = vsub.f32 %v1700, %v2757
    %v2759 = vand.u32 %v2758, 4294901760
    %2760 = vmatprep.subr.mxu0 %v2759
    %v2761 = vand.u32 %v1699, 4294901760
    %v2762 = vsub.f32 %v1699, %v2761
    %v2763 = vand.u32 %v2762, 4294901760
    %2764 = vmatpush1.msra.mxu0 %v2763
    %v2765 = vand.u32 %v1702, 4294901760
    %v2766 = vsub.f32 %v1702, %v2765
    %v2767 = vand.u32 %v2766, 4294901760
    %2768 = vmatprep.subr.mxu0 %v2767
    %v2769 = vand.u32 %v1701, 4294901760
    %v2770 = vsub.f32 %v1701, %v2769
    %v2771 = vand.u32 %v2770, 4294901760
    %2772 = vmatpush1.msra.mxu0 %v2771
    %v2773 = vand.u32 %v1704, 4294901760
    %v2774 = vsub.f32 %v1704, %v2773
    %v2775 = vand.u32 %v2774, 4294901760
    %2776 = vmatprep.subr.mxu0 %v2775
    %v2777 = vand.u32 %v1703, 4294901760
    %v2778 = vsub.f32 %v1703, %v2777
    %v2779 = vand.u32 %v2778, 4294901760
    %2780 = vmatpush1.msra.mxu0 %v2779
    %v2781 = vand.u32 %v1706, 4294901760
    %v2782 = vsub.f32 %v1706, %v2781
    %v2783 = vand.u32 %v2782, 4294901760
    %2784 = vmatprep.subr.mxu0 %v2783
    %v2785 = vand.u32 %v1705, 4294901760
    %v2786 = vsub.f32 %v1705, %v2785
    %v2787 = vand.u32 %v2786, 4294901760
    %2788 = vmatpush1.msra.mxu0 %v2787
    %v2789 = vand.u32 %v1708, 4294901760
    %v2790 = vsub.f32 %v1708, %v2789
    %v2791 = vand.u32 %v2790, 4294901760
    %2792 = vmatprep.subr.mxu0 %v2791
    %v2793 = vand.u32 %v1707, 4294901760
    %v2794 = vsub.f32 %v1707, %v2793
    %v2795 = vand.u32 %v2794, 4294901760
    %2796 = vmatpush1.msra.mxu0 %v2795
    %v2797 = vand.u32 %v1710, 4294901760
    %v2798 = vsub.f32 %v1710, %v2797
    %v2799 = vand.u32 %v2798, 4294901760
    %2800 = vmatprep.subr.mxu0 %v2799
    %v2801 = vand.u32 %v1709, 4294901760
    %v2802 = vsub.f32 %v1709, %v2801
    %v2803 = vand.u32 %v2802, 4294901760
    %2804 = vmatpush1.msra.mxu0 %v2803
    %v2805 = vand.u32 %v1712, 4294901760
    %v2806 = vsub.f32 %v1712, %v2805
    %v2807 = vand.u32 %v2806, 4294901760
    %2808 = vmatprep.subr.mxu0 %v2807
    %v2809 = vand.u32 %v1711, 4294901760
    %v2810 = vsub.f32 %v1711, %v2809
    %v2811 = vand.u32 %v2810, 4294901760
    %2812 = vmatpush1.msra.mxu0 %v2811
    %v2813 = vand.u32 %v1714, 4294901760
    %v2814 = vsub.f32 %v1714, %v2813
    %v2815 = vand.u32 %v2814, 4294901760
    %2816 = vmatprep.subr.mxu0 %v2815
    %v2817 = vand.u32 %v1713, 4294901760
    %v2818 = vsub.f32 %v1713, %v2817
    %v2819 = vand.u32 %v2818, 4294901760
    %2820 = vmatpush1.msra.mxu0 %v2819
    %v2821 = vand.u32 %v1716, 4294901760
    %v2822 = vsub.f32 %v1716, %v2821
    %v2823 = vand.u32 %v2822, 4294901760
    %2824 = vmatprep.subr.mxu0 %v2823
    %v2825 = vand.u32 %v1715, 4294901760
    %v2826 = vsub.f32 %v1715, %v2825
    %v2827 = vand.u32 %v2826, 4294901760
    %2828 = vmatpush1.msra.mxu0 %v2827
    %v2829 = vand.u32 %v1718, 4294901760
    %v2830 = vsub.f32 %v1718, %v2829
    %v2831 = vand.u32 %v2830, 4294901760
    %2832 = vmatprep.subr.mxu0 %v2831
    %v2833 = vand.u32 %v1717, 4294901760
    %v2834 = vsub.f32 %v1717, %v2833
    %v2835 = vand.u32 %v2834, 4294901760
    %2836 = vmatpush1.msra.mxu0 %v2835
    %v2837 = vand.u32 %v1720, 4294901760
    %v2838 = vsub.f32 %v1720, %v2837
    %v2839 = vand.u32 %v2838, 4294901760
    %2840 = vmatprep.subr.mxu0 %v2839
    %v2841 = vand.u32 %v1719, 4294901760
    %v2842 = vsub.f32 %v1719, %v2841
    %v2843 = vand.u32 %v2842, 4294901760
    %2844 = vmatpush1.msra.mxu0 %v2843
    %v2845 = vand.u32 %v1722, 4294901760
    %v2846 = vsub.f32 %v1722, %v2845
    %v2847 = vand.u32 %v2846, 4294901760
    %2848 = vmatprep.subr.mxu0 %v2847
    %v2849 = vand.u32 %v1721, 4294901760
    %v2850 = vsub.f32 %v1721, %v2849
    %v2851 = vand.u32 %v2850, 4294901760
    %2852 = vmatpush1.msra.mxu0 %v2851
    %v2853 = vand.u32 %v1724, 4294901760
    %v2854 = vsub.f32 %v1724, %v2853
    %v2855 = vand.u32 %v2854, 4294901760
    %2856 = vmatprep.subr.mxu0 %v2855
    %v2857 = vand.u32 %v1723, 4294901760
    %v2858 = vsub.f32 %v1723, %v2857
    %v2859 = vand.u32 %v2858, 4294901760
    %2860 = vmatpush1.msra.mxu0 %v2859
    %v2861 = vand.u32 %v1726, 4294901760
    %v2862 = vsub.f32 %v1726, %v2861
    %v2863 = vand.u32 %v2862, 4294901760
    %2864 = vmatprep.subr.mxu0 %v2863
    %v2865 = vand.u32 %v1725, 4294901760
    %v2866 = vsub.f32 %v1725, %v2865
    %v2867 = vand.u32 %v2866, 4294901760
    %2868 = vmatpush1.msra.mxu0 %v2867
    %v2869 = vand.u32 %v1728, 4294901760
    %v2870 = vsub.f32 %v1728, %v2869
    %v2871 = vand.u32 %v2870, 4294901760
    %2872 = vmatprep.subr.mxu0 %v2871
    %v2873 = vand.u32 %v1727, 4294901760
    %v2874 = vsub.f32 %v1727, %v2873
    %v2875 = vand.u32 %v2874, 4294901760
    %2876 = vmatpush1.msra.mxu0 %v2875
    %v2877 = vand.u32 %v1730, 4294901760
    %v2878 = vsub.f32 %v1730, %v2877
    %v2879 = vand.u32 %v2878, 4294901760
    %2880 = vmatprep.subr.mxu0 %v2879
    %v2881 = vand.u32 %v1729, 4294901760
    %v2882 = vsub.f32 %v1729, %v2881
    %v2883 = vand.u32 %v2882, 4294901760
    %2884 = vmatpush1.msra.mxu0 %v2883
    %v2885 = vand.u32 %v1732, 4294901760
    %v2886 = vsub.f32 %v1732, %v2885
    %v2887 = vand.u32 %v2886, 4294901760
    %2888 = vmatprep.subr.mxu0 %v2887
    %v2889 = vand.u32 %v1731, 4294901760
    %v2890 = vsub.f32 %v1731, %v2889
    %v2891 = vand.u32 %v2890, 4294901760
    %2892 = vmatpush1.msra.mxu0 %v2891
    %v2893 = vand.u32 %v1734, 4294901760
    %v2894 = vsub.f32 %v1734, %v2893
    %v2895 = vand.u32 %v2894, 4294901760
    %2896 = vmatprep.subr.mxu0 %v2895
    %v2897 = vand.u32 %v1733, 4294901760
    %v2898 = vsub.f32 %v1733, %v2897
    %v2899 = vand.u32 %v2898, 4294901760
    %2900 = vmatpush1.msra.mxu0 %v2899
    %v2901 = vand.u32 %v1736, 4294901760
    %v2902 = vsub.f32 %v1736, %v2901
    %v2903 = vand.u32 %v2902, 4294901760
    %2904 = vmatprep.subr.mxu0 %v2903
    %v2905 = vand.u32 %v1735, 4294901760
    %v2906 = vsub.f32 %v1735, %v2905
    %v2907 = vand.u32 %v2906, 4294901760
    %2908 = vmatpush1.msra.mxu0 %v2907
    %v2909 = vand.u32 %v1738, 4294901760
    %v2910 = vsub.f32 %v1738, %v2909
    %v2911 = vand.u32 %v2910, 4294901760
    %2912 = vmatprep.subr.mxu0 %v2911
    %v2913 = vand.u32 %v1737, 4294901760
    %v2914 = vsub.f32 %v1737, %v2913
    %v2915 = vand.u32 %v2914, 4294901760
    %2916 = vmatpush1.msra.mxu0 %v2915
    %v2917 = vand.u32 %v1740, 4294901760
    %v2918 = vsub.f32 %v1740, %v2917
    %v2919 = vand.u32 %v2918, 4294901760
    %2920 = vmatprep.subr.mxu0 %v2919
    %v2921 = vand.u32 %v1739, 4294901760
    %v2922 = vsub.f32 %v1739, %v2921
    %v2923 = vand.u32 %v2922, 4294901760
    %2924 = vmatpush1.msra.mxu0 %v2923
    %v2925 = vand.u32 %v1742, 4294901760
    %v2926 = vsub.f32 %v1742, %v2925
    %v2927 = vand.u32 %v2926, 4294901760
    %2928 = vmatprep.subr.mxu0 %v2927
    %v2929 = vand.u32 %v1741, 4294901760
    %v2930 = vsub.f32 %v1741, %v2929
    %v2931 = vand.u32 %v2930, 4294901760
    %2932 = vmatpush1.msra.mxu0 %v2931
    %v2933 = vand.u32 %v1744, 4294901760
    %v2934 = vsub.f32 %v1744, %v2933
    %v2935 = vand.u32 %v2934, 4294901760
    %2936 = vmatprep.subr.mxu0 %v2935
    %v2937 = vand.u32 %v1743, 4294901760
    %v2938 = vsub.f32 %v1743, %v2937
    %v2939 = vand.u32 %v2938, 4294901760
    %2940 = vmatpush1.msra.mxu0 %v2939
    %v2941 = vand.u32 %v1679, 4294901760
    %2942 = vmatprep.mubr.f32.mxu0 %v2941
    %v2943 = vand.u32 %v1665, 4294901760
    %2944 = vmatmul.mubr.f32.gmra.mrb[0].mxu0 %v2943
    %v2945 = vpop.f32.mrb[0].mxu0
    %v2946 = vadd.f32 %v2669, %v2945
    %v2947 = vpop.f32.mrb[0].mxu0
    %v2948 = vadd.f32 %v2671, %v2947
    %v2949 = vand.u32 %v1680, 4294901760
    %2950 = vmatprep.mubr.f32.mxu0 %v2949
    %v2951 = vand.u32 %v1666, 4294901760
    %2952 = vmatmul.mubr.f32.gmra.mrb[0].mxu0 %v2951
    %v2953 = vpop.f32.mrb[0].mxu0
    %v2954 = vadd.f32 %v2681, %v2953
    %v2955 = vpop.f32.mrb[0].mxu0
    %v2956 = vadd.f32 %v2683, %v2955
    %2957 = vdwg.mxu0
    %v2958 = vand.u32 %v1682, 4294901760
    %2959 = vmatprep.subr.mxu0 %v2958
    %v2960 = vand.u32 %v1681, 4294901760
    %2961 = vmatpush1.msra.mxu0 %v2960
    %v2962 = vand.u32 %v1684, 4294901760
    %2963 = vmatprep.subr.mxu0 %v2962
    %v2964 = vand.u32 %v1683, 4294901760
    %2965 = vmatpush1.msra.mxu0 %v2964
    %v2966 = vand.u32 %v1686, 4294901760
    %2967 = vmatprep.subr.mxu0 %v2966
    %v2968 = vand.u32 %v1685, 4294901760
    %2969 = vmatpush1.msra.mxu0 %v2968
    %v2970 = vand.u32 %v1688, 4294901760
    %2971 = vmatprep.subr.mxu0 %v2970
    %v2972 = vand.u32 %v1687, 4294901760
    %2973 = vmatpush1.msra.mxu0 %v2972
    %v2974 = vand.u32 %v1690, 4294901760
    %2975 = vmatprep.subr.mxu0 %v2974
    %v2976 = vand.u32 %v1689, 4294901760
    %2977 = vmatpush1.msra.mxu0 %v2976
    %v2978 = vand.u32 %v1692, 4294901760
    %2979 = vmatprep.subr.mxu0 %v2978
    %v2980 = vand.u32 %v1691, 4294901760
    %2981 = vmatpush1.msra.mxu0 %v2980
    %v2982 = vand.u32 %v1694, 4294901760
    %2983 = vmatprep.subr.mxu0 %v2982
    %v2984 = vand.u32 %v1693, 4294901760
    %2985 = vmatpush1.msra.mxu0 %v2984
    %v2986 = vand.u32 %v1696, 4294901760
    %2987 = vmatprep.subr.mxu0 %v2986
    %v2988 = vand.u32 %v1695, 4294901760
    %2989 = vmatpush1.msra.mxu0 %v2988
    %v2990 = vand.u32 %v1698, 4294901760
    %2991 = vmatprep.subr.mxu0 %v2990
    %v2992 = vand.u32 %v1697, 4294901760
    %2993 = vmatpush1.msra.mxu0 %v2992
    %v2994 = vand.u32 %v1700, 4294901760
    %2995 = vmatprep.subr.mxu0 %v2994
    %v2996 = vand.u32 %v1699, 4294901760
    %2997 = vmatpush1.msra.mxu0 %v2996
    %v2998 = vand.u32 %v1702, 4294901760
    %2999 = vmatprep.subr.mxu0 %v2998
    %v3000 = vand.u32 %v1701, 4294901760
    %3001 = vmatpush1.msra.mxu0 %v3000
    %v3002 = vand.u32 %v1704, 4294901760
    %3003 = vmatprep.subr.mxu0 %v3002
    %v3004 = vand.u32 %v1703, 4294901760
    %3005 = vmatpush1.msra.mxu0 %v3004
    %v3006 = vand.u32 %v1706, 4294901760
    %3007 = vmatprep.subr.mxu0 %v3006
    %v3008 = vand.u32 %v1705, 4294901760
    %3009 = vmatpush1.msra.mxu0 %v3008
    %v3010 = vand.u32 %v1708, 4294901760
    %3011 = vmatprep.subr.mxu0 %v3010
    %v3012 = vand.u32 %v1707, 4294901760
    %3013 = vmatpush1.msra.mxu0 %v3012
    %v3014 = vand.u32 %v1710, 4294901760
    %3015 = vmatprep.subr.mxu0 %v3014
    %v3016 = vand.u32 %v1709, 4294901760
    %3017 = vmatpush1.msra.mxu0 %v3016
    %v3018 = vand.u32 %v1712, 4294901760
    %3019 = vmatprep.subr.mxu0 %v3018
    %v3020 = vand.u32 %v1711, 4294901760
    %3021 = vmatpush1.msra.mxu0 %v3020
    %v3022 = vand.u32 %v1714, 4294901760
    %3023 = vmatprep.subr.mxu0 %v3022
    %v3024 = vand.u32 %v1713, 4294901760
    %3025 = vmatpush1.msra.mxu0 %v3024
    %v3026 = vand.u32 %v1716, 4294901760
    %3027 = vmatprep.subr.mxu0 %v3026
    %v3028 = vand.u32 %v1715, 4294901760
    %3029 = vmatpush1.msra.mxu0 %v3028
    %v3030 = vand.u32 %v1718, 4294901760
    %3031 = vmatprep.subr.mxu0 %v3030
    %v3032 = vand.u32 %v1717, 4294901760
    %3033 = vmatpush1.msra.mxu0 %v3032
    %v3034 = vand.u32 %v1720, 4294901760
    %3035 = vmatprep.subr.mxu0 %v3034
    %v3036 = vand.u32 %v1719, 4294901760
    %3037 = vmatpush1.msra.mxu0 %v3036
    %v3038 = vand.u32 %v1722, 4294901760
    %3039 = vmatprep.subr.mxu0 %v3038
    %v3040 = vand.u32 %v1721, 4294901760
    %3041 = vmatpush1.msra.mxu0 %v3040
    %v3042 = vand.u32 %v1724, 4294901760
    %3043 = vmatprep.subr.mxu0 %v3042
    %v3044 = vand.u32 %v1723, 4294901760
    %3045 = vmatpush1.msra.mxu0 %v3044
    %v3046 = vand.u32 %v1726, 4294901760
    %3047 = vmatprep.subr.mxu0 %v3046
    %v3048 = vand.u32 %v1725, 4294901760
    %3049 = vmatpush1.msra.mxu0 %v3048
    %v3050 = vand.u32 %v1728, 4294901760
    %3051 = vmatprep.subr.mxu0 %v3050
    %v3052 = vand.u32 %v1727, 4294901760
    %3053 = vmatpush1.msra.mxu0 %v3052
    %v3054 = vand.u32 %v1730, 4294901760
    %3055 = vmatprep.subr.mxu0 %v3054
    %v3056 = vand.u32 %v1729, 4294901760
    %3057 = vmatpush1.msra.mxu0 %v3056
    %v3058 = vand.u32 %v1732, 4294901760
    %3059 = vmatprep.subr.mxu0 %v3058
    %v3060 = vand.u32 %v1731, 4294901760
    %3061 = vmatpush1.msra.mxu0 %v3060
    %v3062 = vand.u32 %v1734, 4294901760
    %3063 = vmatprep.subr.mxu0 %v3062
    %v3064 = vand.u32 %v1733, 4294901760
    %3065 = vmatpush1.msra.mxu0 %v3064
    %v3066 = vand.u32 %v1736, 4294901760
    %3067 = vmatprep.subr.mxu0 %v3066
    %v3068 = vand.u32 %v1735, 4294901760
    %3069 = vmatpush1.msra.mxu0 %v3068
    %v3070 = vand.u32 %v1738, 4294901760
    %3071 = vmatprep.subr.mxu0 %v3070
    %v3072 = vand.u32 %v1737, 4294901760
    %3073 = vmatpush1.msra.mxu0 %v3072
    %v3074 = vand.u32 %v1740, 4294901760
    %3075 = vmatprep.subr.mxu0 %v3074
    %v3076 = vand.u32 %v1739, 4294901760
    %3077 = vmatpush1.msra.mxu0 %v3076
    %v3078 = vand.u32 %v1742, 4294901760
    %3079 = vmatprep.subr.mxu0 %v3078
    %v3080 = vand.u32 %v1741, 4294901760
    %3081 = vmatpush1.msra.mxu0 %v3080
    %v3082 = vand.u32 %v1744, 4294901760
    %3083 = vmatprep.subr.mxu0 %v3082
    %v3084 = vand.u32 %v1743, 4294901760
    %3085 = vmatpush1.msra.mxu0 %v3084
    %v3086 = vand.u32 %v1679, 4294901760
    %3087 = vmatprep.mubr.f32.mxu0 %v3086
    %v3088 = vand.u32 %v1665, 4294901760
    %3089 = vmatmul.mubr.f32.gmra.mrb[0].mxu0 %v3088
    %v3090 = vpop.f32.mrb[0].mxu0
    %v3091 = vadd.f32 %v2946, %v3090
    %v3092 = vpop.f32.mrb[0].mxu0
    %v3093 = vadd.f32 %v2948, %v3092
    %v3094 = vand.u32 %v1680, 4294901760
    %3095 = vmatprep.mubr.f32.mxu0 %v3094
    %v3096 = vand.u32 %v1666, 4294901760
    %3097 = vmatmul.mubr.f32.gmra.mrb[0].mxu0 %v3096
    %v3098 = vpop.f32.mrb[0].mxu0
    %v3099 = vadd.f32 %v2954, %v3098
    %v3100 = vpop.f32.mrb[0].mxu0
    %v3101 = vadd.f32 %v2956, %v3100
    %3102 = vdwg.mxu0
    %3105 = vrot.lane.b32.xlu0 %v3091, 112
    %v3106 = vpop.permute.xlu0 %3105
    %3107 = vrot.lane.b32.xlu0 %v3099, 112
    %v3108 = vpop.permute.xlu0 %3107
    %3111 = vrot.lane.b32.xlu0 %v3091, 96
    %v3112 = vpop.permute.xlu0 %3111
    %3113 = vrot.lane.b32.xlu0 %v3099, 96
    %v3114 = vpop.permute.xlu0 %3113
    %3117 = vrot.lane.b32.xlu0 %v3091, 80
    %v3118 = vpop.permute.xlu0 %3117
    %3119 = vrot.lane.b32.xlu0 %v3099, 80
    %v3120 = vpop.permute.xlu0 %3119
    %3123 = vrot.lane.b32.xlu0 %v3091, 64
    %v3124 = vpop.permute.xlu0 %3123
    %3125 = vrot.lane.b32.xlu0 %v3099, 64
    %v3126 = vpop.permute.xlu0 %3125
    %3129 = vrot.lane.b32.xlu0 %v3091, 48
    %v3130 = vpop.permute.xlu0 %3129
    %3131 = vrot.lane.b32.xlu0 %v3099, 48
    %v3132 = vpop.permute.xlu0 %3131
    %3135 = vrot.lane.b32.xlu0 %v3091, 32
    %v3136 = vpop.permute.xlu0 %3135
    %3137 = vrot.lane.b32.xlu0 %v3099, 32
    %v3138 = vpop.permute.xlu0 %3137
    %3141 = vrot.lane.b32.xlu0 %v3091, 16
    %v3142 = vpop.permute.xlu0 %3141
    %3143 = vrot.lane.b32.xlu0 %v3099, 16
    %v3144 = vpop.permute.xlu0 %3143
    %3149 = vrot.lane.b32.xlu0 %v3093, 112
    %v3150 = vpop.permute.xlu0 %3149
    %3151 = vrot.lane.b32.xlu0 %v3101, 112
    %v3152 = vpop.permute.xlu0 %3151
    %3155 = vrot.lane.b32.xlu0 %v3093, 96
    %v3156 = vpop.permute.xlu0 %3155
    %3157 = vrot.lane.b32.xlu0 %v3101, 96
    %v3158 = vpop.permute.xlu0 %3157
    %3161 = vrot.lane.b32.xlu0 %v3093, 80
    %v3162 = vpop.permute.xlu0 %3161
    %3163 = vrot.lane.b32.xlu0 %v3101, 80
    %v3164 = vpop.permute.xlu0 %3163
    %3167 = vrot.lane.b32.xlu0 %v3093, 64
    %v3168 = vpop.permute.xlu0 %3167
    %3169 = vrot.lane.b32.xlu0 %v3101, 64
    %v3170 = vpop.permute.xlu0 %3169
    %3173 = vrot.lane.b32.xlu0 %v3093, 48
    %v3174 = vpop.permute.xlu0 %3173
    %3175 = vrot.lane.b32.xlu0 %v3101, 48
    %v3176 = vpop.permute.xlu0 %3175
    %3179 = vrot.lane.b32.xlu0 %v3093, 32
    %v3180 = vpop.permute.xlu0 %3179
    %3181 = vrot.lane.b32.xlu0 %v3101, 32
    %v3182 = vpop.permute.xlu0 %3181
    %3185 = vrot.lane.b32.xlu0 %v3093, 16
    %v3186 = vpop.permute.xlu0 %3185
    %3187 = vrot.lane.b32.xlu0 %v3101, 16
    %v3188 = vpop.permute.xlu0 %3187
    %v3191 = vcombine.low %v3091, %v3112
    %v3192 = vcombine.high %v3091, %v3112
    %v3194 = vunpack.c.l.s4 1983009808
    %v3195 = vunpack.c.0.s8 %v3194
    %v3196 = vlaneseq
    %v3197 = vshrl.u32 %v3196, 7
    %v3198 = vsub.s32 %v3195, %v3197
    %v3199 = vrot.slane %v3191, %v3198
    %v3201 = vunpack.c.l.s4 1983009808
    %v3202 = vunpack.c.0.s8 %v3201
    %v3203 = vlaneseq
    %v3204 = vshrl.u32 %v3203, 7
    %v3205 = vsub.s32 %v3202, %v3204
    %v3206 = vrot.slane %v3192, %v3205
    %v3207 = vcombine.low %v3106, %v3118
    %v3208 = vcombine.high %v3106, %v3118
    %v3210 = vunpack.c.l.s4 1983009808
    %v3211 = vunpack.c.0.s8 %v3210
    %v3212 = vlaneseq
    %v3213 = vshrl.u32 %v3212, 7
    %v3214 = vsub.s32 %v3211, %v3213
    %v3215 = vrot.slane %v3207, %v3214
    %v3217 = vunpack.c.l.s4 1983009808
    %v3218 = vunpack.c.0.s8 %v3217
    %v3219 = vlaneseq
    %v3220 = vshrl.u32 %v3219, 7
    %v3221 = vsub.s32 %v3218, %v3220
    %v3222 = vrot.slane %v3208, %v3221
    %v3223 = vcombine.low %v3124, %v3136
    %v3224 = vcombine.high %v3124, %v3136
    %v3226 = vunpack.c.l.s4 1983009808
    %v3227 = vunpack.c.0.s8 %v3226
    %v3228 = vlaneseq
    %v3229 = vshrl.u32 %v3228, 7
    %v3230 = vsub.s32 %v3227, %v3229
    %v3231 = vrot.slane %v3223, %v3230
    %v3233 = vunpack.c.l.s4 1983009808
    %v3234 = vunpack.c.0.s8 %v3233
    %v3235 = vlaneseq
    %v3236 = vshrl.u32 %v3235, 7
    %v3237 = vsub.s32 %v3234, %v3236
    %v3238 = vrot.slane %v3224, %v3237
    %v3239 = vcombine.low %v3130, %v3142
    %v3240 = vcombine.high %v3130, %v3142
    %v3242 = vunpack.c.l.s4 1983009808
    %v3243 = vunpack.c.0.s8 %v3242
    %v3244 = vlaneseq
    %v3245 = vshrl.u32 %v3244, 7
    %v3246 = vsub.s32 %v3243, %v3245
    %v3247 = vrot.slane %v3239, %v3246
    %v3249 = vunpack.c.l.s4 1983009808
    %v3250 = vunpack.c.0.s8 %v3249
    %v3251 = vlaneseq
    %v3252 = vshrl.u32 %v3251, 7
    %v3253 = vsub.s32 %v3250, %v3252
    %v3254 = vrot.slane %v3240, %v3253
    %v3255 = vcombine.low %v3199, %v3215
    %v3256 = vcombine.high %v3199, %v3215
    %v3258 = vunpack.c.l.s4 1934713408
    %v3259 = vunpack.c.0.s8 %v3258
    %v3260 = vlaneseq
    %v3261 = vshrl.u32 %v3260, 7
    %v3262 = vsub.s32 %v3259, %v3261
    %v3263 = vrot.slane %v3255, %v3262
    %v3265 = vunpack.c.l.s4 1934713408
    %v3266 = vunpack.c.0.s8 %v3265
    %v3267 = vlaneseq
    %v3268 = vshrl.u32 %v3267, 7
    %v3269 = vsub.s32 %v3266, %v3268
    %v3270 = vrot.slane %v3256, %v3269
    %v3271 = vcombine.low %v3206, %v3222
    %v3272 = vcombine.high %v3206, %v3222
    %v3274 = vunpack.c.l.s4 1934713408
    %v3275 = vunpack.c.0.s8 %v3274
    %v3276 = vlaneseq
    %v3277 = vshrl.u32 %v3276, 7
    %v3278 = vsub.s32 %v3275, %v3277
    %v3279 = vrot.slane %v3271, %v3278
    %v3281 = vunpack.c.l.s4 1934713408
    %v3282 = vunpack.c.0.s8 %v3281
    %v3283 = vlaneseq
    %v3284 = vshrl.u32 %v3283, 7
    %v3285 = vsub.s32 %v3282, %v3284
    %v3286 = vrot.slane %v3272, %v3285
    %v3287 = vcombine.low %v3231, %v3247
    %v3288 = vcombine.high %v3231, %v3247
    %v3290 = vunpack.c.l.s4 1934713408
    %v3291 = vunpack.c.0.s8 %v3290
    %v3292 = vlaneseq
    %v3293 = vshrl.u32 %v3292, 7
    %v3294 = vsub.s32 %v3291, %v3293
    %v3295 = vrot.slane %v3287, %v3294
    %v3297 = vunpack.c.l.s4 1934713408
    %v3298 = vunpack.c.0.s8 %v3297
    %v3299 = vlaneseq
    %v3300 = vshrl.u32 %v3299, 7
    %v3301 = vsub.s32 %v3298, %v3300
    %v3302 = vrot.slane %v3288, %v3301
    %v3303 = vcombine.low %v3238, %v3254
    %v3304 = vcombine.high %v3238, %v3254
    %v3306 = vunpack.c.l.s4 1934713408
    %v3307 = vunpack.c.0.s8 %v3306
    %v3308 = vlaneseq
    %v3309 = vshrl.u32 %v3308, 7
    %v3310 = vsub.s32 %v3307, %v3309
    %v3311 = vrot.slane %v3303, %v3310
    %v3313 = vunpack.c.l.s4 1934713408
    %v3314 = vunpack.c.0.s8 %v3313
    %v3315 = vlaneseq
    %v3316 = vshrl.u32 %v3315, 7
    %v3317 = vsub.s32 %v3314, %v3316
    %v3318 = vrot.slane %v3304, %v3317
    %v3319 = vcombine.low %v3263, %v3295
    %v3320 = vcombine.high %v3263, %v3295
    %v3321 = vcombine.low %v3270, %v3302
    %v3322 = vcombine.high %v3270, %v3302
    %v3323 = vcombine.low %v3279, %v3311
    %v3324 = vcombine.high %v3279, %v3311
    %v3325 = vcombine.low %v3286, %v3318
    %v3326 = vcombine.high %v3286, %v3318
    %v3327 = vcombine.low %v3093, %v3156
    %v3328 = vcombine.high %v3093, %v3156
    %v3330 = vunpack.c.l.s4 1983009808
    %v3331 = vunpack.c.0.s8 %v3330
    %v3332 = vlaneseq
    %v3333 = vshrl.u32 %v3332, 7
    %v3334 = vsub.s32 %v3331, %v3333
    %v3335 = vrot.slane %v3327, %v3334
    %v3337 = vunpack.c.l.s4 1983009808
    %v3338 = vunpack.c.0.s8 %v3337
    %v3339 = vlaneseq
    %v3340 = vshrl.u32 %v3339, 7
    %v3341 = vsub.s32 %v3338, %v3340
    %v3342 = vrot.slane %v3328, %v3341
    %v3343 = vcombine.low %v3150, %v3162
    %v3344 = vcombine.high %v3150, %v3162
    %v3346 = vunpack.c.l.s4 1983009808
    %v3347 = vunpack.c.0.s8 %v3346
    %v3348 = vlaneseq
    %v3349 = vshrl.u32 %v3348, 7
    %v3350 = vsub.s32 %v3347, %v3349
    %v3351 = vrot.slane %v3343, %v3350
    %v3353 = vunpack.c.l.s4 1983009808
    %v3354 = vunpack.c.0.s8 %v3353
    %v3355 = vlaneseq
    %v3356 = vshrl.u32 %v3355, 7
    %v3357 = vsub.s32 %v3354, %v3356
    %v3358 = vrot.slane %v3344, %v3357
    %v3359 = vcombine.low %v3168, %v3180
    %v3360 = vcombine.high %v3168, %v3180
    %v3362 = vunpack.c.l.s4 1983009808
    %v3363 = vunpack.c.0.s8 %v3362
    %v3364 = vlaneseq
    %v3365 = vshrl.u32 %v3364, 7
    %v3366 = vsub.s32 %v3363, %v3365
    %v3367 = vrot.slane %v3359, %v3366
    %v3369 = vunpack.c.l.s4 1983009808
    %v3370 = vunpack.c.0.s8 %v3369
    %v3371 = vlaneseq
    %v3372 = vshrl.u32 %v3371, 7
    %v3373 = vsub.s32 %v3370, %v3372
    %v3374 = vrot.slane %v3360, %v3373
    %v3375 = vcombine.low %v3174, %v3186
    %v3376 = vcombine.high %v3174, %v3186
    %v3378 = vunpack.c.l.s4 1983009808
    %v3379 = vunpack.c.0.s8 %v3378
    %v3380 = vlaneseq
    %v3381 = vshrl.u32 %v3380, 7
    %v3382 = vsub.s32 %v3379, %v3381
    %v3383 = vrot.slane %v3375, %v3382
    %v3385 = vunpack.c.l.s4 1983009808
    %v3386 = vunpack.c.0.s8 %v3385
    %v3387 = vlaneseq
    %v3388 = vshrl.u32 %v3387, 7
    %v3389 = vsub.s32 %v3386, %v3388
    %v3390 = vrot.slane %v3376, %v3389
    %v3391 = vcombine.low %v3335, %v3351
    %v3392 = vcombine.high %v3335, %v3351
    %v3394 = vunpack.c.l.s4 1934713408
    %v3395 = vunpack.c.0.s8 %v3394
    %v3396 = vlaneseq
    %v3397 = vshrl.u32 %v3396, 7
    %v3398 = vsub.s32 %v3395, %v3397
    %v3399 = vrot.slane %v3391, %v3398
    %v3401 = vunpack.c.l.s4 1934713408
    %v3402 = vunpack.c.0.s8 %v3401
    %v3403 = vlaneseq
    %v3404 = vshrl.u32 %v3403, 7
    %v3405 = vsub.s32 %v3402, %v3404
    %v3406 = vrot.slane %v3392, %v3405
    %v3407 = vcombine.low %v3342, %v3358
    %v3408 = vcombine.high %v3342, %v3358
    %v3410 = vunpack.c.l.s4 1934713408
    %v3411 = vunpack.c.0.s8 %v3410
    %v3412 = vlaneseq
    %v3413 = vshrl.u32 %v3412, 7
    %v3414 = vsub.s32 %v3411, %v3413
    %v3415 = vrot.slane %v3407, %v3414
    %v3417 = vunpack.c.l.s4 1934713408
    %v3418 = vunpack.c.0.s8 %v3417
    %v3419 = vlaneseq
    %v3420 = vshrl.u32 %v3419, 7
    %v3421 = vsub.s32 %v3418, %v3420
    %v3422 = vrot.slane %v3408, %v3421
    %v3423 = vcombine.low %v3367, %v3383
    %v3424 = vcombine.high %v3367, %v3383
    %v3426 = vunpack.c.l.s4 1934713408
    %v3427 = vunpack.c.0.s8 %v3426
    %v3428 = vlaneseq
    %v3429 = vshrl.u32 %v3428, 7
    %v3430 = vsub.s32 %v3427, %v3429
    %v3431 = vrot.slane %v3423, %v3430
    %v3433 = vunpack.c.l.s4 1934713408
    %v3434 = vunpack.c.0.s8 %v3433
    %v3435 = vlaneseq
    %v3436 = vshrl.u32 %v3435, 7
    %v3437 = vsub.s32 %v3434, %v3436
    %v3438 = vrot.slane %v3424, %v3437
    %v3439 = vcombine.low %v3374, %v3390
    %v3440 = vcombine.high %v3374, %v3390
    %v3442 = vunpack.c.l.s4 1934713408
    %v3443 = vunpack.c.0.s8 %v3442
    %v3444 = vlaneseq
    %v3445 = vshrl.u32 %v3444, 7
    %v3446 = vsub.s32 %v3443, %v3445
    %v3447 = vrot.slane %v3439, %v3446
    %v3449 = vunpack.c.l.s4 1934713408
    %v3450 = vunpack.c.0.s8 %v3449
    %v3451 = vlaneseq
    %v3452 = vshrl.u32 %v3451, 7
    %v3453 = vsub.s32 %v3450, %v3452
    %v3454 = vrot.slane %v3440, %v3453
    %v3455 = vcombine.low %v3399, %v3431
    %v3456 = vcombine.high %v3399, %v3431
    %v3457 = vcombine.low %v3406, %v3438
    %v3458 = vcombine.high %v3406, %v3438
    %v3459 = vcombine.low %v3415, %v3447
    %v3460 = vcombine.high %v3415, %v3447
    %v3461 = vcombine.low %v3422, %v3454
    %v3462 = vcombine.high %v3422, %v3454
    %v3463 = vcombine.low %v3099, %v3114
    %v3465 = vunpack.c.l.s4 1983009808
    %v3466 = vunpack.c.0.s8 %v3465
    %v3467 = vlaneseq
    %v3468 = vshrl.u32 %v3467, 7
    %v3469 = vsub.s32 %v3466, %v3468
    %v3470 = vrot.slane %v3463, %v3469
    %v3471 = vcombine.low %v3108, %v3120
    %v3473 = vunpack.c.l.s4 1983009808
    %v3474 = vunpack.c.0.s8 %v3473
    %v3475 = vlaneseq
    %v3476 = vshrl.u32 %v3475, 7
    %v3477 = vsub.s32 %v3474, %v3476
    %v3478 = vrot.slane %v3471, %v3477
    %v3479 = vcombine.low %v3126, %v3138
    %v3481 = vunpack.c.l.s4 1983009808
    %v3482 = vunpack.c.0.s8 %v3481
    %v3483 = vlaneseq
    %v3484 = vshrl.u32 %v3483, 7
    %v3485 = vsub.s32 %v3482, %v3484
    %v3486 = vrot.slane %v3479, %v3485
    %v3487 = vcombine.low %v3132, %v3144
    %v3489 = vunpack.c.l.s4 1983009808
    %v3490 = vunpack.c.0.s8 %v3489
    %v3491 = vlaneseq
    %v3492 = vshrl.u32 %v3491, 7
    %v3493 = vsub.s32 %v3490, %v3492
    %v3494 = vrot.slane %v3487, %v3493
    %v3495 = vcombine.low %v3470, %v3478
    %v3496 = vcombine.high %v3470, %v3478
    %v3498 = vunpack.c.l.s4 1934713408
    %v3499 = vunpack.c.0.s8 %v3498
    %v3500 = vlaneseq
    %v3501 = vshrl.u32 %v3500, 7
    %v3502 = vsub.s32 %v3499, %v3501
    %v3503 = vrot.slane %v3495, %v3502
    %v3505 = vunpack.c.l.s4 1934713408
    %v3506 = vunpack.c.0.s8 %v3505
    %v3507 = vlaneseq
    %v3508 = vshrl.u32 %v3507, 7
    %v3509 = vsub.s32 %v3506, %v3508
    %v3510 = vrot.slane %v3496, %v3509
    %v3511 = vcombine.low %v3486, %v3494
    %v3512 = vcombine.high %v3486, %v3494
    %v3514 = vunpack.c.l.s4 1934713408
    %v3515 = vunpack.c.0.s8 %v3514
    %v3516 = vlaneseq
    %v3517 = vshrl.u32 %v3516, 7
    %v3518 = vsub.s32 %v3515, %v3517
    %v3519 = vrot.slane %v3511, %v3518
    %v3521 = vunpack.c.l.s4 1934713408
    %v3522 = vunpack.c.0.s8 %v3521
    %v3523 = vlaneseq
    %v3524 = vshrl.u32 %v3523, 7
    %v3525 = vsub.s32 %v3522, %v3524
    %v3526 = vrot.slane %v3512, %v3525
    %v3527 = vcombine.low %v3503, %v3519
    %v3528 = vcombine.high %v3503, %v3519
    %v3529 = vcombine.low %v3510, %v3526
    %v3530 = vcombine.high %v3510, %v3526
    %v3531 = vcombine.low %v3101, %v3158
    %v3533 = vunpack.c.l.s4 1983009808
    %v3534 = vunpack.c.0.s8 %v3533
    %v3535 = vlaneseq
    %v3536 = vshrl.u32 %v3535, 7
    %v3537 = vsub.s32 %v3534, %v3536
    %v3538 = vrot.slane %v3531, %v3537
    %v3539 = vcombine.low %v3152, %v3164
    %v3541 = vunpack.c.l.s4 1983009808
    %v3542 = vunpack.c.0.s8 %v3541
    %v3543 = vlaneseq
    %v3544 = vshrl.u32 %v3543, 7
    %v3545 = vsub.s32 %v3542, %v3544
    %v3546 = vrot.slane %v3539, %v3545
    %v3547 = vcombine.low %v3170, %v3182
    %v3549 = vunpack.c.l.s4 1983009808
    %v3550 = vunpack.c.0.s8 %v3549
    %v3551 = vlaneseq
    %v3552 = vshrl.u32 %v3551, 7
    %v3553 = vsub.s32 %v3550, %v3552
    %v3554 = vrot.slane %v3547, %v3553
    %v3555 = vcombine.low %v3176, %v3188
    %v3557 = vunpack.c.l.s4 1983009808
    %v3558 = vunpack.c.0.s8 %v3557
    %v3559 = vlaneseq
    %v3560 = vshrl.u32 %v3559, 7
    %v3561 = vsub.s32 %v3558, %v3560
    %v3562 = vrot.slane %v3555, %v3561
    %v3563 = vcombine.low %v3538, %v3546
    %v3564 = vcombine.high %v3538, %v3546
    %v3566 = vunpack.c.l.s4 1934713408
    %v3567 = vunpack.c.0.s8 %v3566
    %v3568 = vlaneseq
    %v3569 = vshrl.u32 %v3568, 7
    %v3570 = vsub.s32 %v3567, %v3569
    %v3571 = vrot.slane %v3563, %v3570
    %v3573 = vunpack.c.l.s4 1934713408
    %v3574 = vunpack.c.0.s8 %v3573
    %v3575 = vlaneseq
    %v3576 = vshrl.u32 %v3575, 7
    %v3577 = vsub.s32 %v3574, %v3576
    %v3578 = vrot.slane %v3564, %v3577
    %v3579 = vcombine.low %v3554, %v3562
    %v3580 = vcombine.high %v3554, %v3562
    %v3582 = vunpack.c.l.s4 1934713408
    %v3583 = vunpack.c.0.s8 %v3582
    %v3584 = vlaneseq
    %v3585 = vshrl.u32 %v3584, 7
    %v3586 = vsub.s32 %v3583, %v3585
    %v3587 = vrot.slane %v3579, %v3586
    %v3589 = vunpack.c.l.s4 1934713408
    %v3590 = vunpack.c.0.s8 %v3589
    %v3591 = vlaneseq
    %v3592 = vshrl.u32 %v3591, 7
    %v3593 = vsub.s32 %v3590, %v3592
    %v3594 = vrot.slane %v3580, %v3593
    %v3595 = vcombine.low %v3571, %v3587
    %v3596 = vcombine.high %v3571, %v3587
    %v3597 = vcombine.low %v3578, %v3594
    %v3598 = vcombine.high %v3578, %v3594
    %v3599 = vmul.f32 %v134, %v564
    %v3600 = vmul.f32 %v138, %v564
    %v3601 = vmul.f32 %v134, %v568
    %v3602 = vmul.f32 %v138, %v568
    %v3603 = vmul.f32 %v134, %v572
    %v3604 = vmul.f32 %v138, %v572
    %v3605 = vmul.f32 %v134, %v576
    %v3606 = vmul.f32 %v138, %v576
    %v3607 = vmul.f32 %v134, %v580
    %v3608 = vmul.f32 %v138, %v580
    %v3609 = vmul.f32 %v134, %v584
    %v3610 = vmul.f32 %v138, %v584
    %v3611 = vmul.f32 %v134, %v588
    %v3612 = vmul.f32 %v138, %v588
    %v3613 = vmul.f32 %v134, %v592
    %v3614 = vmul.f32 %v138, %v592
    %v3615 = vmul.f32 %v134, %v596
    %v3616 = vmul.f32 %v138, %v596
    %v3617 = vmul.f32 %v134, %v600
    %v3618 = vmul.f32 %v138, %v600
    %v3619 = vmul.f32 %v134, %v604
    %v3620 = vmul.f32 %v138, %v604
    %v3621 = vmul.f32 %v134, %v608
    %v3622 = vmul.f32 %v138, %v608
    %3647 = vrot.lane.b32.xlu0 %v3599, 112
    %v3648 = vpop.permute.xlu0 %3647
    %3649 = vrot.lane.b32.xlu0 %v3600, 112
    %v3650 = vpop.permute.xlu0 %3649
    %3651 = vrot.lane.b32.xlu0 %v3601, 112
    %v3652 = vpop.permute.xlu0 %3651
    %3653 = vrot.lane.b32.xlu0 %v3602, 112
    %v3654 = vpop.permute.xlu0 %3653
    %3655 = vrot.lane.b32.xlu0 %v3603, 112
    %v3656 = vpop.permute.xlu0 %3655
    %3657 = vrot.lane.b32.xlu0 %v3604, 112
    %v3658 = vpop.permute.xlu0 %3657
    %3659 = vrot.lane.b32.xlu0 %v3605, 112
    %v3660 = vpop.permute.xlu0 %3659
    %3661 = vrot.lane.b32.xlu0 %v3606, 112
    %v3662 = vpop.permute.xlu0 %3661
    %3663 = vrot.lane.b32.xlu0 %v3607, 112
    %v3664 = vpop.permute.xlu0 %3663
    %3665 = vrot.lane.b32.xlu0 %v3608, 112
    %v3666 = vpop.permute.xlu0 %3665
    %3667 = vrot.lane.b32.xlu0 %v3609, 112
    %v3668 = vpop.permute.xlu0 %3667
    %3669 = vrot.lane.b32.xlu0 %v3610, 112
    %v3670 = vpop.permute.xlu0 %3669
    %3671 = vrot.lane.b32.xlu0 %v3611, 112
    %v3672 = vpop.permute.xlu0 %3671
    %3673 = vrot.lane.b32.xlu0 %v3612, 112
    %v3674 = vpop.permute.xlu0 %3673
    %3675 = vrot.lane.b32.xlu0 %v3613, 112
    %v3676 = vpop.permute.xlu0 %3675
    %3677 = vrot.lane.b32.xlu0 %v3614, 112
    %v3678 = vpop.permute.xlu0 %3677
    %3679 = vrot.lane.b32.xlu0 %v3615, 112
    %v3680 = vpop.permute.xlu0 %3679
    %3681 = vrot.lane.b32.xlu0 %v3616, 112
    %v3682 = vpop.permute.xlu0 %3681
    %3683 = vrot.lane.b32.xlu0 %v3617, 112
    %v3684 = vpop.permute.xlu0 %3683
    %3685 = vrot.lane.b32.xlu0 %v3618, 112
    %v3686 = vpop.permute.xlu0 %3685
    %3687 = vrot.lane.b32.xlu0 %v3619, 112
    %v3688 = vpop.permute.xlu0 %3687
    %3689 = vrot.lane.b32.xlu0 %v3620, 112
    %v3690 = vpop.permute.xlu0 %3689
    %3691 = vrot.lane.b32.xlu0 %v3621, 112
    %v3692 = vpop.permute.xlu0 %3691
    %3693 = vrot.lane.b32.xlu0 %v3622, 112
    %v3694 = vpop.permute.xlu0 %3693
    %v3719 = vadd.f32 %v3319, %v3648
    %v3720 = vadd.f32 %v3455, %v3650
    %v3721 = vadd.f32 %v3320, %v3652
    %v3722 = vadd.f32 %v3456, %v3654
    %v3723 = vadd.f32 %v3321, %v3656
    %v3724 = vadd.f32 %v3457, %v3658
    %v3725 = vadd.f32 %v3322, %v3660
    %v3726 = vadd.f32 %v3458, %v3662
    %v3727 = vadd.f32 %v3323, %v3664
    %v3728 = vadd.f32 %v3459, %v3666
    %v3729 = vadd.f32 %v3324, %v3668
    %v3730 = vadd.f32 %v3460, %v3670
    %v3731 = vadd.f32 %v3325, %v3672
    %v3732 = vadd.f32 %v3461, %v3674
    %v3733 = vadd.f32 %v3326, %v3676
    %v3734 = vadd.f32 %v3462, %v3678
    %v3735 = vadd.f32 %v3527, %v3680
    %v3736 = vadd.f32 %v3595, %v3682
    %v3737 = vadd.f32 %v3528, %v3684
    %v3738 = vadd.f32 %v3596, %v3686
    %v3739 = vadd.f32 %v3529, %v3688
    %v3740 = vadd.f32 %v3597, %v3690
    %v3741 = vadd.f32 %v3530, %v3692
    %v3742 = vadd.f32 %v3598, %v3694
    %vm3743 = vcmp.ge.f32.partialorder %v3719, 0.0
    %vm3744 = vcmp.ge.f32.partialorder %v3720, 0.0
    %vm3745 = vcmp.ge.f32.partialorder %v3721, 0.0
    %vm3746 = vcmp.ge.f32.partialorder %v3722, 0.0
    %vm3747 = vcmp.ge.f32.partialorder %v3723, 0.0
    %vm3748 = vcmp.ge.f32.partialorder %v3724, 0.0
    %vm3749 = vcmp.ge.f32.partialorder %v3725, 0.0
    %vm3750 = vcmp.ge.f32.partialorder %v3726, 0.0
    %vm3751 = vcmp.ge.f32.partialorder %v3727, 0.0
    %vm3752 = vcmp.ge.f32.partialorder %v3728, 0.0
    %vm3753 = vcmp.ge.f32.partialorder %v3729, 0.0
    %vm3754 = vcmp.ge.f32.partialorder %v3730, 0.0
    %vm3755 = vcmp.ge.f32.partialorder %v3731, 0.0
    %vm3756 = vcmp.ge.f32.partialorder %v3732, 0.0
    %vm3757 = vcmp.ge.f32.partialorder %v3733, 0.0
    %vm3758 = vcmp.ge.f32.partialorder %v3734, 0.0
    %vm3759 = vcmp.ge.f32.partialorder %v3735, 0.0
    %vm3760 = vcmp.ge.f32.partialorder %v3736, 0.0
    %vm3761 = vcmp.ge.f32.partialorder %v3737, 0.0
    %vm3762 = vcmp.ge.f32.partialorder %v3738, 0.0
    %vm3763 = vcmp.ge.f32.partialorder %v3739, 0.0
    %vm3764 = vcmp.ge.f32.partialorder %v3740, 0.0
    %vm3765 = vcmp.ge.f32.partialorder %v3741, 0.0
    %vm3766 = vcmp.ge.f32.partialorder %v3742, 0.0
    %v3767 = vmul.f32 %v3719, 0.2
    %v3768 = vmul.f32 %v3720, 0.2
    %v3769 = vmul.f32 %v3721, 0.2
    %v3770 = vmul.f32 %v3722, 0.2
    %v3771 = vmul.f32 %v3723, 0.2
    %v3772 = vmul.f32 %v3724, 0.2
    %v3773 = vmul.f32 %v3725, 0.2
    %v3774 = vmul.f32 %v3726, 0.2
    %v3775 = vmul.f32 %v3727, 0.2
    %v3776 = vmul.f32 %v3728, 0.2
    %v3777 = vmul.f32 %v3729, 0.2
    %v3778 = vmul.f32 %v3730, 0.2
    %v3779 = vmul.f32 %v3731, 0.2
    %v3780 = vmul.f32 %v3732, 0.2
    %v3781 = vmul.f32 %v3733, 0.2
    %v3782 = vmul.f32 %v3734, 0.2
    %v3783 = vmul.f32 %v3735, 0.2
    %v3784 = vmul.f32 %v3736, 0.2
    %v3785 = vmul.f32 %v3737, 0.2
    %v3786 = vmul.f32 %v3738, 0.2
    %v3787 = vmul.f32 %v3739, 0.2
    %v3788 = vmul.f32 %v3740, 0.2
    %v3789 = vmul.f32 %v3741, 0.2
    %v3790 = vmul.f32 %v3742, 0.2
    %v3791 = vsel %vm3743, %v3719, %v3767
    %v3792 = vsel %vm3744, %v3720, %v3768
    %v3793 = vsel %vm3745, %v3721, %v3769
    %v3794 = vsel %vm3746, %v3722, %v3770
    %v3795 = vsel %vm3747, %v3723, %v3771
    %v3796 = vsel %vm3748, %v3724, %v3772
    %v3797 = vsel %vm3749, %v3725, %v3773
    %v3798 = vsel %vm3750, %v3726, %v3774
    %v3799 = vsel %vm3751, %v3727, %v3775
    %v3800 = vsel %vm3752, %v3728, %v3776
    %v3801 = vsel %vm3753, %v3729, %v3777
    %v3802 = vsel %vm3754, %v3730, %v3778
    %v3803 = vsel %vm3755, %v3731, %v3779
    %v3804 = vsel %vm3756, %v3732, %v3780
    %v3805 = vsel %vm3757, %v3733, %v3781
    %v3806 = vsel %vm3758, %v3734, %v3782
    %v3807 = vsel %vm3759, %v3735, %v3783
    %v3808 = vsel %vm3760, %v3736, %v3784
    %v3809 = vsel %vm3761, %v3737, %v3785
    %v3810 = vsel %vm3762, %v3738, %v3786
    %v3811 = vsel %vm3763, %v3739, %v3787
    %v3812 = vsel %vm3764, %v3740, %v3788
    %v3813 = vsel %vm3765, %v3741, %v3789
    %v3814 = vsel %vm3766, %v3742, %v3790
    %v3815 = vsel %vm741, %v3791, 0.0
    %3816 = vadd.xlane.f32.xlu0 %v3815
    %v3817 = vpop.xlane.xlu0 %3816
    %v3818 = vsel %vm741, %v3792, 0.0
    %3819 = vadd.xlane.f32.xlu0 %v3818
    %v3820 = vpop.xlane.xlu0 %3819
    %v3821 = vsel %vm741, %v3793, 0.0
    %3822 = vadd.xlane.f32.xlu0 %v3821
    %v3823 = vpop.xlane.xlu0 %3822
    %v3824 = vsel %vm741, %v3794, 0.0
    %3825 = vadd.xlane.f32.xlu0 %v3824
    %v3826 = vpop.xlane.xlu0 %3825
    %v3827 = vsel %vm741, %v3795, 0.0
    %3828 = vadd.xlane.f32.xlu0 %v3827
    %v3829 = vpop.xlane.xlu0 %3828
    %v3830 = vsel %vm741, %v3796, 0.0
    %3831 = vadd.xlane.f32.xlu0 %v3830
    %v3832 = vpop.xlane.xlu0 %3831
    %v3833 = vsel %vm741, %v3797, 0.0
    %3834 = vadd.xlane.f32.xlu0 %v3833
    %v3835 = vpop.xlane.xlu0 %3834
    %v3836 = vsel %vm741, %v3798, 0.0
    %3837 = vadd.xlane.f32.xlu0 %v3836
    %v3838 = vpop.xlane.xlu0 %3837
    %v3839 = vsel %vm741, %v3799, 0.0
    %3840 = vadd.xlane.f32.xlu0 %v3839
    %v3841 = vpop.xlane.xlu0 %3840
    %v3842 = vsel %vm741, %v3800, 0.0
    %3843 = vadd.xlane.f32.xlu0 %v3842
    %v3844 = vpop.xlane.xlu0 %3843
    %v3845 = vsel %vm741, %v3801, 0.0
    %3846 = vadd.xlane.f32.xlu0 %v3845
    %v3847 = vpop.xlane.xlu0 %3846
    %v3848 = vsel %vm741, %v3802, 0.0
    %3849 = vadd.xlane.f32.xlu0 %v3848
    %v3850 = vpop.xlane.xlu0 %3849
    %v3851 = vsel %vm741, %v3803, 0.0
    %3852 = vadd.xlane.f32.xlu0 %v3851
    %v3853 = vpop.xlane.xlu0 %3852
    %v3854 = vsel %vm741, %v3804, 0.0
    %3855 = vadd.xlane.f32.xlu0 %v3854
    %v3856 = vpop.xlane.xlu0 %3855
    %v3857 = vsel %vm741, %v3805, 0.0
    %3858 = vadd.xlane.f32.xlu0 %v3857
    %v3859 = vpop.xlane.xlu0 %3858
    %v3860 = vsel %vm741, %v3806, 0.0
    %3861 = vadd.xlane.f32.xlu0 %v3860
    %v3862 = vpop.xlane.xlu0 %3861
    %v3863 = vsel %vm741, %v3807, 0.0
    %3864 = vadd.xlane.f32.xlu0 %v3863
    %v3865 = vpop.xlane.xlu0 %3864
    %v3866 = vsel %vm741, %v3808, 0.0
    %3867 = vadd.xlane.f32.xlu0 %v3866
    %v3868 = vpop.xlane.xlu0 %3867
    %v3869 = vsel %vm741, %v3809, 0.0
    %3870 = vadd.xlane.f32.xlu0 %v3869
    %v3871 = vpop.xlane.xlu0 %3870
    %v3872 = vsel %vm741, %v3810, 0.0
    %3873 = vadd.xlane.f32.xlu0 %v3872
    %v3874 = vpop.xlane.xlu0 %3873
    %v3875 = vsel %vm741, %v3811, 0.0
    %3876 = vadd.xlane.f32.xlu0 %v3875
    %v3877 = vpop.xlane.xlu0 %3876
    %v3878 = vsel %vm741, %v3812, 0.0
    %3879 = vadd.xlane.f32.xlu0 %v3878
    %v3880 = vpop.xlane.xlu0 %3879
    %v3881 = vsel %vm741, %v3813, 0.0
    %3882 = vadd.xlane.f32.xlu0 %v3881
    %v3883 = vpop.xlane.xlu0 %3882
    %v3884 = vsel %vm741, %v3814, 0.0
    %3885 = vadd.xlane.f32.xlu0 %v3884
    %v3886 = vpop.xlane.xlu0 %3885
    %v3887 = vmul.f32 %v3817, %v814
    %v3888 = vmul.f32 %v3820, %v814
    %v3889 = vmul.f32 %v3823, %v814
    %v3890 = vmul.f32 %v3826, %v814
    %v3891 = vmul.f32 %v3829, %v814
    %v3892 = vmul.f32 %v3832, %v814
    %v3893 = vmul.f32 %v3835, %v814
    %v3894 = vmul.f32 %v3838, %v814
    %v3895 = vmul.f32 %v3841, %v814
    %v3896 = vmul.f32 %v3844, %v814
    %v3897 = vmul.f32 %v3847, %v814
    %v3898 = vmul.f32 %v3850, %v814
    %v3899 = vmul.f32 %v3853, %v814
    %v3900 = vmul.f32 %v3856, %v814
    %v3901 = vmul.f32 %v3859, %v814
    %v3902 = vmul.f32 %v3862, %v814
    %v3903 = vmul.f32 %v3865, %v814
    %v3904 = vmul.f32 %v3868, %v814
    %v3905 = vmul.f32 %v3871, %v814
    %v3906 = vmul.f32 %v3874, %v814
    %v3907 = vmul.f32 %v3877, %v814
    %v3908 = vmul.f32 %v3880, %v814
    %v3909 = vmul.f32 %v3883, %v814
    %v3910 = vmul.f32 %v3886, %v814
    %v3911 = vsub.f32 %v3791, %v3887
    %v3912 = vsub.f32 %v3792, %v3888
    %v3913 = vsub.f32 %v3793, %v3889
    %v3914 = vsub.f32 %v3794, %v3890
    %v3915 = vsub.f32 %v3795, %v3891
    %v3916 = vsub.f32 %v3796, %v3892
    %v3917 = vsub.f32 %v3797, %v3893
    %v3918 = vsub.f32 %v3798, %v3894
    %v3919 = vsub.f32 %v3799, %v3895
    %v3920 = vsub.f32 %v3800, %v3896
    %v3921 = vsub.f32 %v3801, %v3897
    %v3922 = vsub.f32 %v3802, %v3898
    %v3923 = vsub.f32 %v3803, %v3899
    %v3924 = vsub.f32 %v3804, %v3900
    %v3925 = vsub.f32 %v3805, %v3901
    %v3926 = vsub.f32 %v3806, %v3902
    %v3927 = vsub.f32 %v3807, %v3903
    %v3928 = vsub.f32 %v3808, %v3904
    %v3929 = vsub.f32 %v3809, %v3905
    %v3930 = vsub.f32 %v3810, %v3906
    %v3931 = vsub.f32 %v3811, %v3907
    %v3932 = vsub.f32 %v3812, %v3908
    %v3933 = vsub.f32 %v3813, %v3909
    %v3934 = vsub.f32 %v3814, %v3910
    %v3935 = vmul.f32 %v3911, %v3911
    %v3936 = vmul.f32 %v3912, %v3912
    %v3937 = vmul.f32 %v3913, %v3913
    %v3938 = vmul.f32 %v3914, %v3914
    %v3939 = vmul.f32 %v3915, %v3915
    %v3940 = vmul.f32 %v3916, %v3916
    %v3941 = vmul.f32 %v3917, %v3917
    %v3942 = vmul.f32 %v3918, %v3918
    %v3943 = vmul.f32 %v3919, %v3919
    %v3944 = vmul.f32 %v3920, %v3920
    %v3945 = vmul.f32 %v3921, %v3921
    %v3946 = vmul.f32 %v3922, %v3922
    %v3947 = vmul.f32 %v3923, %v3923
    %v3948 = vmul.f32 %v3924, %v3924
    %v3949 = vmul.f32 %v3925, %v3925
    %v3950 = vmul.f32 %v3926, %v3926
    %v3951 = vmul.f32 %v3927, %v3927
    %v3952 = vmul.f32 %v3928, %v3928
    %v3953 = vmul.f32 %v3929, %v3929
    %v3954 = vmul.f32 %v3930, %v3930
    %v3955 = vmul.f32 %v3931, %v3931
    %v3956 = vmul.f32 %v3932, %v3932
    %v3957 = vmul.f32 %v3933, %v3933
    %v3958 = vmul.f32 %v3934, %v3934
    %v3959 = vsel %vm741, %v3935, 0.0
    %3960 = vadd.xlane.f32.xlu0 %v3959
    %v3961 = vpop.xlane.xlu0 %3960
    %v3962 = vsel %vm741, %v3936, 0.0
    %3963 = vadd.xlane.f32.xlu0 %v3962
    %v3964 = vpop.xlane.xlu0 %3963
    %v3965 = vsel %vm741, %v3937, 0.0
    %3966 = vadd.xlane.f32.xlu0 %v3965
    %v3967 = vpop.xlane.xlu0 %3966
    %v3968 = vsel %vm741, %v3938, 0.0
    %3969 = vadd.xlane.f32.xlu0 %v3968
    %v3970 = vpop.xlane.xlu0 %3969
    %v3971 = vsel %vm741, %v3939, 0.0
    %3972 = vadd.xlane.f32.xlu0 %v3971
    %v3973 = vpop.xlane.xlu0 %3972
    %v3974 = vsel %vm741, %v3940, 0.0
    %3975 = vadd.xlane.f32.xlu0 %v3974
    %v3976 = vpop.xlane.xlu0 %3975
    %v3977 = vsel %vm741, %v3941, 0.0
    %3978 = vadd.xlane.f32.xlu0 %v3977
    %v3979 = vpop.xlane.xlu0 %3978
    %v3980 = vsel %vm741, %v3942, 0.0
    %3981 = vadd.xlane.f32.xlu0 %v3980
    %v3982 = vpop.xlane.xlu0 %3981
    %v3983 = vsel %vm741, %v3943, 0.0
    %3984 = vadd.xlane.f32.xlu0 %v3983
    %v3985 = vpop.xlane.xlu0 %3984
    %v3986 = vsel %vm741, %v3944, 0.0
    %3987 = vadd.xlane.f32.xlu0 %v3986
    %v3988 = vpop.xlane.xlu0 %3987
    %v3989 = vsel %vm741, %v3945, 0.0
    %3990 = vadd.xlane.f32.xlu0 %v3989
    %v3991 = vpop.xlane.xlu0 %3990
    %v3992 = vsel %vm741, %v3946, 0.0
    %3993 = vadd.xlane.f32.xlu0 %v3992
    %v3994 = vpop.xlane.xlu0 %3993
    %v3995 = vsel %vm741, %v3947, 0.0
    %3996 = vadd.xlane.f32.xlu0 %v3995
    %v3997 = vpop.xlane.xlu0 %3996
    %v3998 = vsel %vm741, %v3948, 0.0
    %3999 = vadd.xlane.f32.xlu0 %v3998
    %v4000 = vpop.xlane.xlu0 %3999
    %v4001 = vsel %vm741, %v3949, 0.0
    %4002 = vadd.xlane.f32.xlu0 %v4001
    %v4003 = vpop.xlane.xlu0 %4002
    %v4004 = vsel %vm741, %v3950, 0.0
    %4005 = vadd.xlane.f32.xlu0 %v4004
    %v4006 = vpop.xlane.xlu0 %4005
    %v4007 = vsel %vm741, %v3951, 0.0
    %4008 = vadd.xlane.f32.xlu0 %v4007
    %v4009 = vpop.xlane.xlu0 %4008
    %v4010 = vsel %vm741, %v3952, 0.0
    %4011 = vadd.xlane.f32.xlu0 %v4010
    %v4012 = vpop.xlane.xlu0 %4011
    %v4013 = vsel %vm741, %v3953, 0.0
    %4014 = vadd.xlane.f32.xlu0 %v4013
    %v4015 = vpop.xlane.xlu0 %4014
    %v4016 = vsel %vm741, %v3954, 0.0
    %4017 = vadd.xlane.f32.xlu0 %v4016
    %v4018 = vpop.xlane.xlu0 %4017
    %v4019 = vsel %vm741, %v3955, 0.0
    %4020 = vadd.xlane.f32.xlu0 %v4019
    %v4021 = vpop.xlane.xlu0 %4020
    %v4022 = vsel %vm741, %v3956, 0.0
    %4023 = vadd.xlane.f32.xlu0 %v4022
    %v4024 = vpop.xlane.xlu0 %4023
    %v4025 = vsel %vm741, %v3957, 0.0
    %4026 = vadd.xlane.f32.xlu0 %v4025
    %v4027 = vpop.xlane.xlu0 %4026
    %v4028 = vsel %vm741, %v3958, 0.0
    %4029 = vadd.xlane.f32.xlu0 %v4028
    %v4030 = vpop.xlane.xlu0 %4029
    %v4031 = vmul.f32 %v3961, %v814
    %v4032 = vmul.f32 %v3964, %v814
    %v4033 = vmul.f32 %v3967, %v814
    %v4034 = vmul.f32 %v3970, %v814
    %v4035 = vmul.f32 %v3973, %v814
    %v4036 = vmul.f32 %v3976, %v814
    %v4037 = vmul.f32 %v3979, %v814
    %v4038 = vmul.f32 %v3982, %v814
    %v4039 = vmul.f32 %v3985, %v814
    %v4040 = vmul.f32 %v3988, %v814
    %v4041 = vmul.f32 %v3991, %v814
    %v4042 = vmul.f32 %v3994, %v814
    %v4043 = vmul.f32 %v3997, %v814
    %v4044 = vmul.f32 %v4000, %v814
    %v4045 = vmul.f32 %v4003, %v814
    %v4046 = vmul.f32 %v4006, %v814
    %v4047 = vmul.f32 %v4009, %v814
    %v4048 = vmul.f32 %v4012, %v814
    %v4049 = vmul.f32 %v4015, %v814
    %v4050 = vmul.f32 %v4018, %v814
    %v4051 = vmul.f32 %v4021, %v814
    %v4052 = vmul.f32 %v4024, %v814
    %v4053 = vmul.f32 %v4027, %v814
    %v4054 = vmul.f32 %v4030, %v814
    %v4055 = vadd.f32 %v4031, 1e-05
    %v4056 = vadd.f32 %v4032, 1e-05
    %v4057 = vadd.f32 %v4033, 1e-05
    %v4058 = vadd.f32 %v4034, 1e-05
    %v4059 = vadd.f32 %v4035, 1e-05
    %v4060 = vadd.f32 %v4036, 1e-05
    %v4061 = vadd.f32 %v4037, 1e-05
    %v4062 = vadd.f32 %v4038, 1e-05
    %v4063 = vadd.f32 %v4039, 1e-05
    %v4064 = vadd.f32 %v4040, 1e-05
    %v4065 = vadd.f32 %v4041, 1e-05
    %v4066 = vadd.f32 %v4042, 1e-05
    %v4067 = vadd.f32 %v4043, 1e-05
    %v4068 = vadd.f32 %v4044, 1e-05
    %v4069 = vadd.f32 %v4045, 1e-05
    %v4070 = vadd.f32 %v4046, 1e-05
    %v4071 = vadd.f32 %v4047, 1e-05
    %v4072 = vadd.f32 %v4048, 1e-05
    %v4073 = vadd.f32 %v4049, 1e-05
    %v4074 = vadd.f32 %v4050, 1e-05
    %v4075 = vadd.f32 %v4051, 1e-05
    %v4076 = vadd.f32 %v4052, 1e-05
    %v4077 = vadd.f32 %v4053, 1e-05
    %v4078 = vadd.f32 %v4054, 1e-05
    %v4079 = vrsqrt.pop %v4055
    %v4080 = vrsqrt.pop %v4056
    %v4081 = vrsqrt.pop %v4057
    %v4082 = vrsqrt.pop %v4058
    %v4083 = vrsqrt.pop %v4059
    %v4084 = vrsqrt.pop %v4060
    %v4085 = vrsqrt.pop %v4061
    %v4086 = vrsqrt.pop %v4062
    %v4087 = vrsqrt.pop %v4063
    %v4088 = vrsqrt.pop %v4064
    %v4089 = vrsqrt.pop %v4065
    %v4090 = vrsqrt.pop %v4066
    %v4091 = vrsqrt.pop %v4067
    %v4092 = vrsqrt.pop %v4068
    %v4093 = vrsqrt.pop %v4069
    %v4094 = vrsqrt.pop %v4070
    %v4095 = vrsqrt.pop %v4071
    %v4096 = vrsqrt.pop %v4072
    %v4097 = vrsqrt.pop %v4073
    %v4098 = vrsqrt.pop %v4074
    %v4099 = vrsqrt.pop %v4075
    %v4100 = vrsqrt.pop %v4076
    %v4101 = vrsqrt.pop %v4077
    %v4102 = vrsqrt.pop %v4078
    %v4103 = vmul.f32 %v3911, %v4079
    %v4104 = vmul.f32 %v3912, %v4080
    %v4105 = vmul.f32 %v3913, %v4081
    %v4106 = vmul.f32 %v3914, %v4082
    %v4107 = vmul.f32 %v3915, %v4083
    %v4108 = vmul.f32 %v3916, %v4084
    %v4109 = vmul.f32 %v3917, %v4085
    %v4110 = vmul.f32 %v3918, %v4086
    %v4111 = vmul.f32 %v3919, %v4087
    %v4112 = vmul.f32 %v3920, %v4088
    %v4113 = vmul.f32 %v3921, %v4089
    %v4114 = vmul.f32 %v3922, %v4090
    %v4115 = vmul.f32 %v3923, %v4091
    %v4116 = vmul.f32 %v3924, %v4092
    %v4117 = vmul.f32 %v3925, %v4093
    %v4118 = vmul.f32 %v3926, %v4094
    %v4119 = vmul.f32 %v3927, %v4095
    %v4120 = vmul.f32 %v3928, %v4096
    %v4121 = vmul.f32 %v3929, %v4097
    %v4122 = vmul.f32 %v3930, %v4098
    %v4123 = vmul.f32 %v3931, %v4099
    %v4124 = vmul.f32 %v3932, %v4100
    %v4125 = vmul.f32 %v3933, %v4101
    %v4126 = vmul.f32 %v3934, %v4102
    %v4127 = vadd.f32 %v370, 1.0
    %v4128 = vadd.f32 %v374, 1.0
    %v4129 = vadd.f32 %v378, 1.0
    %v4130 = vadd.f32 %v382, 1.0
    %v4131 = vadd.f32 %v386, 1.0
    %v4132 = vadd.f32 %v390, 1.0
    %v4133 = vadd.f32 %v394, 1.0
    %v4134 = vadd.f32 %v398, 1.0
    %v4135 = vadd.f32 %v402, 1.0
    %v4136 = vadd.f32 %v406, 1.0
    %v4137 = vadd.f32 %v410, 1.0
    %v4138 = vadd.f32 %v414, 1.0
    %v4139 = vadd.f32 %v418, 1.0
    %v4140 = vadd.f32 %v422, 1.0
    %v4141 = vadd.f32 %v426, 1.0
    %v4142 = vadd.f32 %v430, 1.0
    %v4143 = vadd.f32 %v434, 1.0
    %v4144 = vadd.f32 %v438, 1.0
    %v4145 = vadd.f32 %v442, 1.0
    %v4146 = vadd.f32 %v446, 1.0
    %v4147 = vadd.f32 %v450, 1.0
    %v4148 = vadd.f32 %v454, 1.0
    %v4149 = vadd.f32 %v458, 1.0
    %v4150 = vadd.f32 %v462, 1.0
    %v4151 = vmul.f32 %v4103, %v4127
    %v4152 = vmul.f32 %v4104, %v4128
    %v4153 = vmul.f32 %v4105, %v4129
    %v4154 = vmul.f32 %v4106, %v4130
    %v4155 = vmul.f32 %v4107, %v4131
    %v4156 = vmul.f32 %v4108, %v4132
    %v4157 = vmul.f32 %v4109, %v4133
    %v4158 = vmul.f32 %v4110, %v4134
    %v4159 = vmul.f32 %v4111, %v4135
    %v4160 = vmul.f32 %v4112, %v4136
    %v4161 = vmul.f32 %v4113, %v4137
    %v4162 = vmul.f32 %v4114, %v4138
    %v4163 = vmul.f32 %v4115, %v4139
    %v4164 = vmul.f32 %v4116, %v4140
    %v4165 = vmul.f32 %v4117, %v4141
    %v4166 = vmul.f32 %v4118, %v4142
    %v4167 = vmul.f32 %v4119, %v4143
    %v4168 = vmul.f32 %v4120, %v4144
    %v4169 = vmul.f32 %v4121, %v4145
    %v4170 = vmul.f32 %v4122, %v4146
    %v4171 = vmul.f32 %v4123, %v4147
    %v4172 = vmul.f32 %v4124, %v4148
    %v4173 = vmul.f32 %v4125, %v4149
    %v4174 = vmul.f32 %v4126, %v4150
    %v4175 = vadd.f32 %v4151, %v466
    %v4176 = vadd.f32 %v4152, %v470
    %v4177 = vadd.f32 %v4153, %v474
    %v4178 = vadd.f32 %v4154, %v478
    %v4179 = vadd.f32 %v4155, %v482
    %v4180 = vadd.f32 %v4156, %v486
    %v4181 = vadd.f32 %v4157, %v490
    %v4182 = vadd.f32 %v4158, %v494
    %v4183 = vadd.f32 %v4159, %v498
    %v4184 = vadd.f32 %v4160, %v502
    %v4185 = vadd.f32 %v4161, %v506
    %v4186 = vadd.f32 %v4162, %v510
    %v4187 = vadd.f32 %v4163, %v514
    %v4188 = vadd.f32 %v4164, %v518
    %v4189 = vadd.f32 %v4165, %v522
    %v4190 = vadd.f32 %v4166, %v526
    %v4191 = vadd.f32 %v4167, %v530
    %v4192 = vadd.f32 %v4168, %v534
    %v4193 = vadd.f32 %v4169, %v538
    %v4194 = vadd.f32 %v4170, %v542
    %v4195 = vadd.f32 %v4171, %v546
    %v4196 = vadd.f32 %v4172, %v550
    %v4197 = vadd.f32 %v4173, %v554
    %v4198 = vadd.f32 %v4174, %v558
    %v4199 = vcombine.low %v4175, %v4179
    %v4200 = vcombine.high %v4175, %v4179
    %v4202 = vunpack.c.l.s4 1983009808
    %v4203 = vunpack.c.0.s8 %v4202
    %v4204 = vlaneseq
    %v4205 = vshrl.u32 %v4204, 7
    %v4206 = vsub.s32 %v4203, %v4205
    %v4207 = vrot.slane %v4199, %v4206
    %v4209 = vunpack.c.l.s4 1983009808
    %v4210 = vunpack.c.0.s8 %v4209
    %v4211 = vlaneseq
    %v4212 = vshrl.u32 %v4211, 7
    %v4213 = vsub.s32 %v4210, %v4212
    %v4214 = vrot.slane %v4200, %v4213
    %v4215 = vcombine.low %v4177, %v4181
    %v4216 = vcombine.high %v4177, %v4181
    %v4218 = vunpack.c.l.s4 1983009808
    %v4219 = vunpack.c.0.s8 %v4218
    %v4220 = vlaneseq
    %v4221 = vshrl.u32 %v4220, 7
    %v4222 = vsub.s32 %v4219, %v4221
    %v4223 = vrot.slane %v4215, %v4222
    %v4225 = vunpack.c.l.s4 1983009808
    %v4226 = vunpack.c.0.s8 %v4225
    %v4227 = vlaneseq
    %v4228 = vshrl.u32 %v4227, 7
    %v4229 = vsub.s32 %v4226, %v4228
    %v4230 = vrot.slane %v4216, %v4229
    %v4231 = vcombine.low %v4183, %v4187
    %v4232 = vcombine.high %v4183, %v4187
    %v4234 = vunpack.c.l.s4 1983009808
    %v4235 = vunpack.c.0.s8 %v4234
    %v4236 = vlaneseq
    %v4237 = vshrl.u32 %v4236, 7
    %v4238 = vsub.s32 %v4235, %v4237
    %v4239 = vrot.slane %v4231, %v4238
    %v4241 = vunpack.c.l.s4 1983009808
    %v4242 = vunpack.c.0.s8 %v4241
    %v4243 = vlaneseq
    %v4244 = vshrl.u32 %v4243, 7
    %v4245 = vsub.s32 %v4242, %v4244
    %v4246 = vrot.slane %v4232, %v4245
    %v4247 = vcombine.low %v4185, %v4189
    %v4248 = vcombine.high %v4185, %v4189
    %v4250 = vunpack.c.l.s4 1983009808
    %v4251 = vunpack.c.0.s8 %v4250
    %v4252 = vlaneseq
    %v4253 = vshrl.u32 %v4252, 7
    %v4254 = vsub.s32 %v4251, %v4253
    %v4255 = vrot.slane %v4247, %v4254
    %v4257 = vunpack.c.l.s4 1983009808
    %v4258 = vunpack.c.0.s8 %v4257
    %v4259 = vlaneseq
    %v4260 = vshrl.u32 %v4259, 7
    %v4261 = vsub.s32 %v4258, %v4260
    %v4262 = vrot.slane %v4248, %v4261
    %v4263 = vcombine.low %v4207, %v4223
    %v4264 = vcombine.high %v4207, %v4223
    %v4266 = vunpack.c.l.s4 1934713408
    %v4267 = vunpack.c.0.s8 %v4266
    %v4268 = vlaneseq
    %v4269 = vshrl.u32 %v4268, 7
    %v4270 = vsub.s32 %v4267, %v4269
    %v4271 = vrot.slane %v4263, %v4270
    %v4273 = vunpack.c.l.s4 1934713408
    %v4274 = vunpack.c.0.s8 %v4273
    %v4275 = vlaneseq
    %v4276 = vshrl.u32 %v4275, 7
    %v4277 = vsub.s32 %v4274, %v4276
    %v4278 = vrot.slane %v4264, %v4277
    %v4279 = vcombine.low %v4214, %v4230
    %v4280 = vcombine.high %v4214, %v4230
    %v4282 = vunpack.c.l.s4 1934713408
    %v4283 = vunpack.c.0.s8 %v4282
    %v4284 = vlaneseq
    %v4285 = vshrl.u32 %v4284, 7
    %v4286 = vsub.s32 %v4283, %v4285
    %v4287 = vrot.slane %v4279, %v4286
    %v4289 = vunpack.c.l.s4 1934713408
    %v4290 = vunpack.c.0.s8 %v4289
    %v4291 = vlaneseq
    %v4292 = vshrl.u32 %v4291, 7
    %v4293 = vsub.s32 %v4290, %v4292
    %v4294 = vrot.slane %v4280, %v4293
    %v4295 = vcombine.low %v4239, %v4255
    %v4296 = vcombine.high %v4239, %v4255
    %v4298 = vunpack.c.l.s4 1934713408
    %v4299 = vunpack.c.0.s8 %v4298
    %v4300 = vlaneseq
    %v4301 = vshrl.u32 %v4300, 7
    %v4302 = vsub.s32 %v4299, %v4301
    %v4303 = vrot.slane %v4295, %v4302
    %v4305 = vunpack.c.l.s4 1934713408
    %v4306 = vunpack.c.0.s8 %v4305
    %v4307 = vlaneseq
    %v4308 = vshrl.u32 %v4307, 7
    %v4309 = vsub.s32 %v4306, %v4308
    %v4310 = vrot.slane %v4296, %v4309
    %v4311 = vcombine.low %v4246, %v4262
    %v4312 = vcombine.high %v4246, %v4262
    %v4314 = vunpack.c.l.s4 1934713408
    %v4315 = vunpack.c.0.s8 %v4314
    %v4316 = vlaneseq
    %v4317 = vshrl.u32 %v4316, 7
    %v4318 = vsub.s32 %v4315, %v4317
    %v4319 = vrot.slane %v4311, %v4318
    %v4321 = vunpack.c.l.s4 1934713408
    %v4322 = vunpack.c.0.s8 %v4321
    %v4323 = vlaneseq
    %v4324 = vshrl.u32 %v4323, 7
    %v4325 = vsub.s32 %v4322, %v4324
    %v4326 = vrot.slane %v4312, %v4325
    %v4327 = vcombine.low %v4271, %v4303
    %v4328 = vcombine.high %v4271, %v4303
    %v4329 = vcombine.low %v4278, %v4310
    %v4330 = vcombine.high %v4278, %v4310
    %v4331 = vcombine.low %v4287, %v4319
    %v4332 = vcombine.high %v4287, %v4319
    %v4333 = vcombine.low %v4294, %v4326
    %v4334 = vcombine.high %v4294, %v4326
    %v4335 = vcombine.low %v4191, %v4195
    %v4336 = vcombine.high %v4191, %v4195
    %v4338 = vunpack.c.l.s4 1983009808
    %v4339 = vunpack.c.0.s8 %v4338
    %v4340 = vlaneseq
    %v4341 = vshrl.u32 %v4340, 7
    %v4342 = vsub.s32 %v4339, %v4341
    %v4343 = vrot.slane %v4335, %v4342
    %v4345 = vunpack.c.l.s4 1983009808
    %v4346 = vunpack.c.0.s8 %v4345
    %v4347 = vlaneseq
    %v4348 = vshrl.u32 %v4347, 7
    %v4349 = vsub.s32 %v4346, %v4348
    %v4350 = vrot.slane %v4336, %v4349
    %v4351 = vcombine.low %v4193, %v4197
    %v4352 = vcombine.high %v4193, %v4197
    %v4354 = vunpack.c.l.s4 1983009808
    %v4355 = vunpack.c.0.s8 %v4354
    %v4356 = vlaneseq
    %v4357 = vshrl.u32 %v4356, 7
    %v4358 = vsub.s32 %v4355, %v4357
    %v4359 = vrot.slane %v4351, %v4358
    %v4361 = vunpack.c.l.s4 1983009808
    %v4362 = vunpack.c.0.s8 %v4361
    %v4363 = vlaneseq
    %v4364 = vshrl.u32 %v4363, 7
    %v4365 = vsub.s32 %v4362, %v4364
    %v4366 = vrot.slane %v4352, %v4365
    %v4367 = vcombine.low %v4343, %v4359
    %v4368 = vcombine.high %v4343, %v4359
    %v4370 = vunpack.c.l.s4 1934713408
    %v4371 = vunpack.c.0.s8 %v4370
    %v4372 = vlaneseq
    %v4373 = vshrl.u32 %v4372, 7
    %v4374 = vsub.s32 %v4371, %v4373
    %v4375 = vrot.slane %v4367, %v4374
    %v4377 = vunpack.c.l.s4 1934713408
    %v4378 = vunpack.c.0.s8 %v4377
    %v4379 = vlaneseq
    %v4380 = vshrl.u32 %v4379, 7
    %v4381 = vsub.s32 %v4378, %v4380
    %v4382 = vrot.slane %v4368, %v4381
    %v4383 = vcombine.low %v4350, %v4366
    %v4384 = vcombine.high %v4350, %v4366
    %v4386 = vunpack.c.l.s4 1934713408
    %v4387 = vunpack.c.0.s8 %v4386
    %v4388 = vlaneseq
    %v4389 = vshrl.u32 %v4388, 7
    %v4390 = vsub.s32 %v4387, %v4389
    %v4391 = vrot.slane %v4383, %v4390
    %v4393 = vunpack.c.l.s4 1934713408
    %v4394 = vunpack.c.0.s8 %v4393
    %v4395 = vlaneseq
    %v4396 = vshrl.u32 %v4395, 7
    %v4397 = vsub.s32 %v4394, %v4396
    %v4398 = vrot.slane %v4384, %v4397
    %v4399 = vcombine.high %v4375, 0.0
    %v4400 = vcombine.high %v4382, 0.0
    %v4401 = vcombine.high %v4391, 0.0
    %v4402 = vcombine.high %v4398, 0.0
    %v4403 = vcombine.low %v4176, %v4180
    %v4404 = vcombine.high %v4176, %v4180
    %v4406 = vunpack.c.l.s4 1983009808
    %v4407 = vunpack.c.0.s8 %v4406
    %v4408 = vlaneseq
    %v4409 = vshrl.u32 %v4408, 7
    %v4410 = vsub.s32 %v4407, %v4409
    %v4411 = vrot.slane %v4403, %v4410
    %v4413 = vunpack.c.l.s4 1983009808
    %v4414 = vunpack.c.0.s8 %v4413
    %v4415 = vlaneseq
    %v4416 = vshrl.u32 %v4415, 7
    %v4417 = vsub.s32 %v4414, %v4416
    %v4418 = vrot.slane %v4404, %v4417
    %v4419 = vcombine.low %v4178, %v4182
    %v4420 = vcombine.high %v4178, %v4182
    %v4422 = vunpack.c.l.s4 1983009808
    %v4423 = vunpack.c.0.s8 %v4422
    %v4424 = vlaneseq
    %v4425 = vshrl.u32 %v4424, 7
    %v4426 = vsub.s32 %v4423, %v4425
    %v4427 = vrot.slane %v4419, %v4426
    %v4429 = vunpack.c.l.s4 1983009808
    %v4430 = vunpack.c.0.s8 %v4429
    %v4431 = vlaneseq
    %v4432 = vshrl.u32 %v4431, 7
    %v4433 = vsub.s32 %v4430, %v4432
    %v4434 = vrot.slane %v4420, %v4433
    %v4435 = vcombine.low %v4184, %v4188
    %v4436 = vcombine.high %v4184, %v4188
    %v4438 = vunpack.c.l.s4 1983009808
    %v4439 = vunpack.c.0.s8 %v4438
    %v4440 = vlaneseq
    %v4441 = vshrl.u32 %v4440, 7
    %v4442 = vsub.s32 %v4439, %v4441
    %v4443 = vrot.slane %v4435, %v4442
    %v4445 = vunpack.c.l.s4 1983009808
    %v4446 = vunpack.c.0.s8 %v4445
    %v4447 = vlaneseq
    %v4448 = vshrl.u32 %v4447, 7
    %v4449 = vsub.s32 %v4446, %v4448
    %v4450 = vrot.slane %v4436, %v4449
    %v4451 = vcombine.low %v4186, %v4190
    %v4452 = vcombine.high %v4186, %v4190
    %v4454 = vunpack.c.l.s4 1983009808
    %v4455 = vunpack.c.0.s8 %v4454
    %v4456 = vlaneseq
    %v4457 = vshrl.u32 %v4456, 7
    %v4458 = vsub.s32 %v4455, %v4457
    %v4459 = vrot.slane %v4451, %v4458
    %v4461 = vunpack.c.l.s4 1983009808
    %v4462 = vunpack.c.0.s8 %v4461
    %v4463 = vlaneseq
    %v4464 = vshrl.u32 %v4463, 7
    %v4465 = vsub.s32 %v4462, %v4464
    %v4466 = vrot.slane %v4452, %v4465
    %v4467 = vcombine.low %v4411, %v4427
    %v4468 = vcombine.high %v4411, %v4427
    %v4470 = vunpack.c.l.s4 1934713408
    %v4471 = vunpack.c.0.s8 %v4470
    %v4472 = vlaneseq
    %v4473 = vshrl.u32 %v4472, 7
    %v4474 = vsub.s32 %v4471, %v4473
    %v4475 = vrot.slane %v4467, %v4474
    %v4477 = vunpack.c.l.s4 1934713408
    %v4478 = vunpack.c.0.s8 %v4477
    %v4479 = vlaneseq
    %v4480 = vshrl.u32 %v4479, 7
    %v4481 = vsub.s32 %v4478, %v4480
    %v4482 = vrot.slane %v4468, %v4481
    %v4483 = vcombine.low %v4418, %v4434
    %v4484 = vcombine.high %v4418, %v4434
    %v4486 = vunpack.c.l.s4 1934713408
    %v4487 = vunpack.c.0.s8 %v4486
    %v4488 = vlaneseq
    %v4489 = vshrl.u32 %v4488, 7
    %v4490 = vsub.s32 %v4487, %v4489
    %v4491 = vrot.slane %v4483, %v4490
    %v4493 = vunpack.c.l.s4 1934713408
    %v4494 = vunpack.c.0.s8 %v4493
    %v4495 = vlaneseq
    %v4496 = vshrl.u32 %v4495, 7
    %v4497 = vsub.s32 %v4494, %v4496
    %v4498 = vrot.slane %v4484, %v4497
    %v4499 = vcombine.low %v4443, %v4459
    %v4500 = vcombine.high %v4443, %v4459
    %v4502 = vunpack.c.l.s4 1934713408
    %v4503 = vunpack.c.0.s8 %v4502
    %v4504 = vlaneseq
    %v4505 = vshrl.u32 %v4504, 7
    %v4506 = vsub.s32 %v4503, %v4505
    %v4507 = vrot.slane %v4499, %v4506
    %v4509 = vunpack.c.l.s4 1934713408
    %v4510 = vunpack.c.0.s8 %v4509
    %v4511 = vlaneseq
    %v4512 = vshrl.u32 %v4511, 7
    %v4513 = vsub.s32 %v4510, %v4512
    %v4514 = vrot.slane %v4500, %v4513
    %v4515 = vcombine.low %v4450, %v4466
    %v4516 = vcombine.high %v4450, %v4466
    %v4518 = vunpack.c.l.s4 1934713408
    %v4519 = vunpack.c.0.s8 %v4518
    %v4520 = vlaneseq
    %v4521 = vshrl.u32 %v4520, 7
    %v4522 = vsub.s32 %v4519, %v4521
    %v4523 = vrot.slane %v4515, %v4522
    %v4525 = vunpack.c.l.s4 1934713408
    %v4526 = vunpack.c.0.s8 %v4525
    %v4527 = vlaneseq
    %v4528 = vshrl.u32 %v4527, 7
    %v4529 = vsub.s32 %v4526, %v4528
    %v4530 = vrot.slane %v4516, %v4529
    %v4531 = vcombine.low %v4475, %v4507
    %v4532 = vcombine.high %v4475, %v4507
    %v4533 = vcombine.low %v4482, %v4514
    %v4534 = vcombine.high %v4482, %v4514
    %v4535 = vcombine.low %v4491, %v4523
    %v4536 = vcombine.high %v4491, %v4523
    %v4537 = vcombine.low %v4498, %v4530
    %v4538 = vcombine.high %v4498, %v4530
    %v4539 = vcombine.low %v4192, %v4196
    %v4540 = vcombine.high %v4192, %v4196
    %v4542 = vunpack.c.l.s4 1983009808
    %v4543 = vunpack.c.0.s8 %v4542
    %v4544 = vlaneseq
    %v4545 = vshrl.u32 %v4544, 7
    %v4546 = vsub.s32 %v4543, %v4545
    %v4547 = vrot.slane %v4539, %v4546
    %v4549 = vunpack.c.l.s4 1983009808
    %v4550 = vunpack.c.0.s8 %v4549
    %v4551 = vlaneseq
    %v4552 = vshrl.u32 %v4551, 7
    %v4553 = vsub.s32 %v4550, %v4552
    %v4554 = vrot.slane %v4540, %v4553
    %v4555 = vcombine.low %v4194, %v4198
    %v4556 = vcombine.high %v4194, %v4198
    %v4558 = vunpack.c.l.s4 1983009808
    %v4559 = vunpack.c.0.s8 %v4558
    %v4560 = vlaneseq
    %v4561 = vshrl.u32 %v4560, 7
    %v4562 = vsub.s32 %v4559, %v4561
    %v4563 = vrot.slane %v4555, %v4562
    %v4565 = vunpack.c.l.s4 1983009808
    %v4566 = vunpack.c.0.s8 %v4565
    %v4567 = vlaneseq
    %v4568 = vshrl.u32 %v4567, 7
    %v4569 = vsub.s32 %v4566, %v4568
    %v4570 = vrot.slane %v4556, %v4569
    %v4571 = vcombine.low %v4547, %v4563
    %v4572 = vcombine.high %v4547, %v4563
    %v4574 = vunpack.c.l.s4 1934713408
    %v4575 = vunpack.c.0.s8 %v4574
    %v4576 = vlaneseq
    %v4577 = vshrl.u32 %v4576, 7
    %v4578 = vsub.s32 %v4575, %v4577
    %v4579 = vrot.slane %v4571, %v4578
    %v4581 = vunpack.c.l.s4 1934713408
    %v4582 = vunpack.c.0.s8 %v4581
    %v4583 = vlaneseq
    %v4584 = vshrl.u32 %v4583, 7
    %v4585 = vsub.s32 %v4582, %v4584
    %v4586 = vrot.slane %v4572, %v4585
    %v4587 = vcombine.low %v4554, %v4570
    %v4588 = vcombine.high %v4554, %v4570
    %v4590 = vunpack.c.l.s4 1934713408
    %v4591 = vunpack.c.0.s8 %v4590
    %v4592 = vlaneseq
    %v4593 = vshrl.u32 %v4592, 7
    %v4594 = vsub.s32 %v4591, %v4593
    %v4595 = vrot.slane %v4587, %v4594
    %v4597 = vunpack.c.l.s4 1934713408
    %v4598 = vunpack.c.0.s8 %v4597
    %v4599 = vlaneseq
    %v4600 = vshrl.u32 %v4599, 7
    %v4601 = vsub.s32 %v4598, %v4600
    %v4602 = vrot.slane %v4588, %v4601
    %v4603 = vcombine.high %v4579, 0.0
    %v4604 = vcombine.high %v4586, 0.0
    %v4605 = vcombine.high %v4595, 0.0
    %v4606 = vcombine.high %v4602, 0.0
    %4609 = vrot.lane.b32.xlu0 %v4328, 16
    %v4610 = vpop.permute.xlu0 %4609
    %4611 = vrot.lane.b32.xlu0 %v4399, 16
    %v4612 = vpop.permute.xlu0 %4611
    %4617 = vrot.lane.b32.xlu0 %v4329, 32
    %v4618 = vpop.permute.xlu0 %4617
    %4619 = vrot.lane.b32.xlu0 %v4382, 32
    %v4620 = vpop.permute.xlu0 %4619
    %4625 = vrot.lane.b32.xlu0 %v4330, 48
    %v4626 = vpop.permute.xlu0 %4625
    %4627 = vrot.lane.b32.xlu0 %v4400, 48
    %v4628 = vpop.permute.xlu0 %4627
    %4633 = vrot.lane.b32.xlu0 %v4331, 64
    %v4634 = vpop.permute.xlu0 %4633
    %4635 = vrot.lane.b32.xlu0 %v4391, 64
    %v4636 = vpop.permute.xlu0 %4635
    %4641 = vrot.lane.b32.xlu0 %v4332, 80
    %v4642 = vpop.permute.xlu0 %4641
    %4643 = vrot.lane.b32.xlu0 %v4401, 80
    %v4644 = vpop.permute.xlu0 %4643
    %4649 = vrot.lane.b32.xlu0 %v4333, 96
    %v4650 = vpop.permute.xlu0 %4649
    %4651 = vrot.lane.b32.xlu0 %v4398, 96
    %v4652 = vpop.permute.xlu0 %4651
    %4657 = vrot.lane.b32.xlu0 %v4334, 112
    %v4658 = vpop.permute.xlu0 %4657
    %4659 = vrot.lane.b32.xlu0 %v4402, 112
    %v4660 = vpop.permute.xlu0 %4659
    %4665 = vrot.lane.b32.xlu0 %v4532, 16
    %v4666 = vpop.permute.xlu0 %4665
    %4667 = vrot.lane.b32.xlu0 %v4603, 16
    %v4668 = vpop.permute.xlu0 %4667
    %4673 = vrot.lane.b32.xlu0 %v4533, 32
    %v4674 = vpop.permute.xlu0 %4673
    %4675 = vrot.lane.b32.xlu0 %v4586, 32
    %v4676 = vpop.permute.xlu0 %4675
    %4681 = vrot.lane.b32.xlu0 %v4534, 48
    %v4682 = vpop.permute.xlu0 %4681
    %4683 = vrot.lane.b32.xlu0 %v4604, 48
    %v4684 = vpop.permute.xlu0 %4683
    %4689 = vrot.lane.b32.xlu0 %v4535, 64
    %v4690 = vpop.permute.xlu0 %4689
    %4691 = vrot.lane.b32.xlu0 %v4595, 64
    %v4692 = vpop.permute.xlu0 %4691
    %4697 = vrot.lane.b32.xlu0 %v4536, 80
    %v4698 = vpop.permute.xlu0 %4697
    %4699 = vrot.lane.b32.xlu0 %v4605, 80
    %v4700 = vpop.permute.xlu0 %4699
    %4705 = vrot.lane.b32.xlu0 %v4537, 96
    %v4706 = vpop.permute.xlu0 %4705
    %4707 = vrot.lane.b32.xlu0 %v4602, 96
    %v4708 = vpop.permute.xlu0 %4707
    %4713 = vrot.lane.b32.xlu0 %v4538, 112
    %v4714 = vpop.permute.xlu0 %4713
    %4715 = vrot.lane.b32.xlu0 %v4606, 112
    %v4716 = vpop.permute.xlu0 %4715
    %v4719 = vsel %vm741, %v4327, %v4610
    %v4720 = vsel %vm741, %v4375, %v4612
    %v4721 = vsel %vm1649, %v4719, %v4618
    %v4722 = vsel %vm1649, %v4720, %v4620
    %v4723 = vsel %vm1652, %v4721, %v4626
    %v4724 = vsel %vm1652, %v4722, %v4628
    %v4725 = vsel %vm1655, %v4723, %v4634
    %v4726 = vsel %vm1655, %v4724, %v4636
    %v4727 = vsel %vm1658, %v4725, %v4642
    %v4728 = vsel %vm1658, %v4726, %v4644
    %v4729 = vsel %vm1661, %v4727, %v4650
    %v4730 = vsel %vm1661, %v4728, %v4652
    %v4731 = vsel %vm1664, %v4729, %v4658
    %v4732 = vsel %vm1664, %v4730, %v4660
    %v4733 = vsel %vm741, %v4531, %v4666
    %v4734 = vsel %vm741, %v4579, %v4668
    %v4735 = vsel %vm1649, %v4733, %v4674
    %v4736 = vsel %vm1649, %v4734, %v4676
    %v4737 = vsel %vm1652, %v4735, %v4682
    %v4738 = vsel %vm1652, %v4736, %v4684
    %v4739 = vsel %vm1655, %v4737, %v4690
    %v4740 = vsel %vm1655, %v4738, %v4692
    %v4741 = vsel %vm1658, %v4739, %v4698
    %v4742 = vsel %vm1658, %v4740, %v4700
    %v4743 = vsel %vm1661, %v4741, %v4706
    %v4744 = vsel %vm1661, %v4742, %v4708
    %v4745 = vsel %vm1664, %v4743, %v4714
    %v4746 = vsel %vm1664, %v4744, %v4716
    %4747 = vst [vmem:[%s6] sm:$0xff] %v4731
    %4748 = vst [vmem:[%s6 + $0x8] sm:$0xff] %v4745
    %4749 = vst [vmem:[%s6 + $0x10] sm:$0xf] %v4732
    %4750 = vst [vmem:[%s6 + $0x18] sm:$0xf] %v4746
    // Predicated region
    $region30: #{tpu_custom_call.1} parent=1 // pred_check
      _
    $region31: #{tpu_custom_call.1} parent=1 // pred_check_branch
      %4752 = sbr.rel (0) target = $region33
    $region32: #{tpu_custom_call.1} parent=1 // pred_region
      _
    $region33: #{tpu_custom_call.1} parent=1 // pred_fallthru
      _
    // Predicated region
    $region34: #{tpu_custom_call.1} parent=1 // pred_check
      _
    $region35: #{tpu_custom_call.1} parent=1 // pred_check_branch
      %4754 = sbr.rel (0) target = $region37
    $region36: #{tpu_custom_call.1} parent=1 // pred_region
      _
    $region37: #{tpu_custom_call.1} parent=1 // pred_fallthru
      _
    %4755 = vsyncpa [#allocation3], 1

</llo_original>
